<compile_context>
chip_gen: v6e
topology: v6e:2x2x1
jax: 0.10.0
libtpu: 0.0.40
codegen_flags: <defaults>
</compile_context>

<pallas_src>
import jax
import jax.numpy as jnp
from jax.experimental import pallas as pl
from jax.experimental.pallas import tpu as pltpu


def ham_kernel(x_ref, convm_ref, cw_ref, cb_ref, sb_ref, out_ref):
    # x_ref / out_ref : (bb, C, H*W) VMEM blocks (lane-dense last dim).
    # convm_ref       : (2*H*W, H*W) VMEM, dense "7x7 conv as matmul" matrix.
    # cw_ref (3,), cb_ref (1,), sb_ref (1,) : SMEM scalars.
    bb, C, HW = x_ref.shape
    inv_hw = 1.0 / HW
    inv_c = 1.0 / C
    w0, w1, w2 = cw_ref[0], cw_ref[1], cw_ref[2]
    cbias2 = 2.0 * cb_ref[0]          # conv(avg)+conv(max) == conv(avg+max) + 2*bias
    sbias = sb_ref[0]
    convm = convm_ref[...]            # streamed into the MXU
    zrow = jnp.zeros((1, 1), jnp.float32)

    for b in range(bb):               # static unroll over the batch sub-block
        x = x_ref[b].astype(jnp.float32)                      # (C, HW)

        # ---- channel attention: global avg/max pool over H*W (lane reduce) ----
        p_avg = jnp.sum(x, axis=-1, keepdims=True) * inv_hw   # (C, 1)
        p_max = jnp.max(x, axis=-1, keepdims=True)            # (C, 1)
        q = p_avg + p_max
        # Conv1d(k=3, pad=1) along the channel axis (zero padded neighbors).
        q_lft = jnp.concatenate([zrow, q[:-1]], axis=0)       # q[i-1]
        q_rgt = jnp.concatenate([q[1:], zrow], axis=0)        # q[i+1]
        attn_c = jax.nn.sigmoid(w0 * q_lft + w1 * q + w2 * q_rgt + cbias2)  # (C, 1)
        xc = x * attn_c                                       # (C, HW), lane broadcast

        # ---- spatial attention: channel-wise mean/max -> 7x7 conv (as matmul) ----
        avg_sp = jnp.sum(xc, axis=0, keepdims=True) * inv_c   # (1, HW) sublane reduce
        max_sp = jnp.max(xc, axis=0, keepdims=True)           # (1, HW)
        sp = jnp.concatenate([avg_sp, max_sp], axis=-1)       # (1, 2*HW) tile-aligned
        acc = jnp.dot(sp, convm,
                      precision=jax.lax.Precision.HIGHEST,
                      preferred_element_type=jnp.float32)     # (1, HW) on the MXU
        attn_s = jax.nn.sigmoid(acc + sbias)                  # (1, HW)

        out_ref[b] = (xc * attn_s).astype(out_ref.dtype)      # (C, HW) sublane bcast


def build_spatial_conv_matrix(sw, H, W):
    """Dense matrix M (2*H*W, H*W) such that
    concat([avg_flat, max_flat], -1) @ M == 7x7 'same' conv (zero pad 3) of the
    stacked [avg, max] maps with weights sw (bias excluded). Built in the wrapper."""
    hi = jnp.arange(H)[:, None, None, None]
    wi = jnp.arange(W)[None, :, None, None]
    ho = jnp.arange(H)[None, None, :, None]
    wo = jnp.arange(W)[None, None, None, :]
    dy = hi - ho + 3
    dx = wi - wo + 3
    valid = (dy >= 0) & (dy < 7) & (dx >= 0) & (dx < 7)
    dyc = jnp.clip(dy, 0, 6)
    dxc = jnp.clip(dx, 0, 6)
    k = sw[:, dyc, dxc]                                   # (2, H, W, H, W)
    k = jnp.where(valid[None], k, 0.0)
    return k.reshape(2 * H * W, H * W).astype(jnp.float32)


def ham_pallas(x, cw, cb, sw, sb):
    B, C, H, W = x.shape
    HW = H * W
    x_flat = x.reshape(B, C, HW)                          # free view of contiguous NCHW
    conv_mat = build_spatial_conv_matrix(sw.astype(jnp.float32), H, W)

    # Batch elements per grid step: amortize per-step overhead for small slabs while
    # keeping the block well inside the VMEM budget on all chips (v7x: 64 MiB VMEM).
    per_elem = C * HW * 4
    bb = max(1, min(B, 8, (2 * 1024 * 1024) // max(per_elem, 1)))
    while B % bb:
        bb -= 1
    grid = (B // bb,)

    out_flat = pl.pallas_call(
        ham_kernel,
        out_shape=jax.ShapeDtypeStruct((B, C, HW), x.dtype),
        grid=grid,
        in_specs=[
            pl.BlockSpec((bb, C, HW), lambda i: (i, 0, 0)),
            pl.BlockSpec((2 * HW, HW), lambda i: (0, 0)),   # resident, not re-fetched
            pl.BlockSpec(memory_space=pltpu.MemorySpace.SMEM),
            pl.BlockSpec(memory_space=pltpu.MemorySpace.SMEM),
            pl.BlockSpec(memory_space=pltpu.MemorySpace.SMEM),
        ],
        out_specs=pl.BlockSpec((bb, C, HW), lambda i: (i, 0, 0)),
        compiler_params=pltpu.CompilerParams(
            dimension_semantics=("parallel",),
            vmem_limit_bytes=32 * 1024 * 1024,
        ),
    )(x_flat, conv_mat, cw.astype(jnp.float32), cb.astype(jnp.float32),
      sb.astype(jnp.float32))
    return out_flat.reshape(B, C, H, W)


def ham_reference(x, cw, cb, sw, sb):
    """Pure-JAX reference matching the PyTorch forward exactly."""
    b, c, h, w = x.shape
    avg_p = x.mean(axis=(2, 3))  # (b, c)
    max_p = x.max(axis=(2, 3))   # (b, c)

    def conv1d(p):
        pp = jnp.pad(p, ((0, 0), (1, 1)))
        return cw[0] * pp[:, :-2] + cw[1] * pp[:, 1:-1] + cw[2] * pp[:, 2:] + cb[0]

    attn_c = jax.nn.sigmoid(conv1d(avg_p) + conv1d(max_p))        # (b, c)
    xc = x * attn_c[:, :, None, None]
    avg_s = xc.mean(axis=1)                                        # (b, h, w)
    max_s = xc.max(axis=1)
    sm = jnp.stack([avg_s, max_s], axis=1)                         # (b, 2, h, w)
    smp = jnp.pad(sm, ((0, 0), (0, 0), (3, 3), (3, 3)))
    acc = jnp.full((b, h, w), sb[0])
    for ch in range(2):
        for dy in range(7):
            for dx in range(7):
                acc = acc + sw[ch, dy, dx] * smp[:, ch, dy:dy + h, dx:dx + w]
    attn_s = jax.nn.sigmoid(acc)[:, None]
    return xc * attn_s


if __name__ == "__main__":
    B, C, H, W = 2, 4, 16, 16
    key = jax.random.PRNGKey(0)
    kx, k1, k2, k3, k4 = jax.random.split(key, 5)

    x = jax.random.normal(kx, (B, C, H, W), jnp.float32)

    # Deterministic param init (shapes per nn.Conv1d(1,1,3) and nn.Conv2d(2,1,7)).
    b1 = 1.0 / jnp.sqrt(3.0)    # channel conv fan_in = 1*3
    b2 = 1.0 / jnp.sqrt(98.0)   # spatial conv fan_in = 2*7*7
    cw = jax.random.uniform(k1, (3,), jnp.float32, -b1, b1)        # Conv1d weight [0,0,:]
    cb = jax.random.uniform(k2, (1,), jnp.float32, -b1, b1)        # Conv1d bias
    sw = jax.random.uniform(k3, (2, 7, 7), jnp.float32, -b2, b2)   # Conv2d weight [0,:,:,:]
    sb = jax.random.uniform(k4, (1,), jnp.float32, -b2, b2)        # Conv2d bias

    out = jax.block_until_ready(ham_pallas(x, cw, cb, sw, sb))
    ref = jax.block_until_ready(ham_reference(x, cw, cb, sw, sb))

    assert out.shape == (B, C, H, W)
    err = float(jnp.abs(out - ref).max())
    assert jnp.allclose(out, ref, rtol=1e-3, atol=1e-3), err
    print("KERNEL_OK")
</pallas_src>

<mosaic_0001>
module attributes {stable_mosaic.version = 11 : i64} {
  func.func @ham_kernel(%arg0: i32, %arg1: memref<2x4x256xf32, #tpu.memory_space<vmem>>, %arg2: memref<512x256xf32, #tpu.memory_space<vmem>>, %arg3: memref<3xf32, #tpu.memory_space<smem>>, %arg4: memref<1xf32, #tpu.memory_space<smem>>, %arg5: memref<1xf32, #tpu.memory_space<smem>>, %arg6: memref<2x4x256xf32, #tpu.memory_space<vmem>>) attributes {dimension_semantics = [#tpu.dimension_semantics<parallel>], iteration_bounds = array<i64: 1>, scalar_prefetch = 0 : i64, scratch_operands = 0 : i64, tpu.core_type = #tpu.core_type<tc>, window_params = [{transform_indices = @transform_0, window_bounds = array<i64: 2, 4, 256>}, {pipeline_mode = #tpu.pipeline_mode<synchronous>, transform_indices = @transform_1, window_bounds = array<i64: 512, 256>}, {transform_indices = @transform_2, window_bounds = array<i64: 3>}, {transform_indices = @transform_3, window_bounds = array<i64: 1>}, {transform_indices = @transform_4, window_bounds = array<i64: 1>}, {transform_indices = @transform_5, window_bounds = array<i64: 2, 4, 256>}]} {
    %c0 = arith.constant 0 : index
    %0 = memref.load %arg3[%c0] : memref<3xf32, #tpu.memory_space<smem>>
    %c1 = arith.constant 1 : index
    %1 = memref.load %arg3[%c1] : memref<3xf32, #tpu.memory_space<smem>>
    %c2 = arith.constant 2 : index
    %2 = memref.load %arg3[%c2] : memref<3xf32, #tpu.memory_space<smem>>
    %c0_0 = arith.constant 0 : index
    %3 = memref.load %arg4[%c0_0] : memref<1xf32, #tpu.memory_space<smem>>
    %cst = arith.constant 2.000000e+00 : f32
    %4 = arith.mulf %cst, %3 : f32
    %c0_1 = arith.constant 0 : index
    %5 = memref.load %arg5[%c0_1] : memref<1xf32, #tpu.memory_space<smem>>
    %c0_2 = arith.constant 0 : index
    %c0_3 = arith.constant 0 : index
    %6 = vector.load %arg2[%c0_2, %c0_3] : memref<512x256xf32, #tpu.memory_space<vmem>>, vector<512x256xf32>
    %cst_4 = arith.constant 0.000000e+00 : f32
    %7 = vector.broadcast %cst_4 : f32 to vector<1x1xf32>
    %c0_5 = arith.constant 0 : index
    %c0_6 = arith.constant 0 : index
    %c0_7 = arith.constant 0 : index
    %8 = vector.load %arg1[%c0_5, %c0_6, %c0_7] : memref<2x4x256xf32, #tpu.memory_space<vmem>>, vector<1x4x256xf32>
    %9 = vector.shape_cast %8 : vector<1x4x256xf32> to vector<4x256xf32>
    %cst_8 = arith.constant dense<0.000000e+00> : vector<4xf32>
    %10 = vector.multi_reduction <add>, %9, %cst_8 [1] : vector<4x256xf32> to vector<4xf32>
    %11 = vector.shape_cast %10 : vector<4xf32> to vector<4x1xf32>
    %cst_9 = arith.constant 3.906250e-03 : f32
    %12 = vector.broadcast %cst_9 : f32 to vector<4x1xf32>
    %13 = arith.mulf %11, %12 : vector<4x1xf32>
    %cst_10 = arith.constant dense<0xFF800000> : vector<4xf32>
    %14 = vector.multi_reduction <maximumf>, %9, %cst_10 [1] : vector<4x256xf32> to vector<4xf32>
    %15 = vector.shape_cast %14 : vector<4xf32> to vector<4x1xf32>
    %16 = arith.addf %13, %15 : vector<4x1xf32>
    %17 = vector.extract_strided_slice %16 {offsets = [0, 0], sizes = [3, 1], strides = [1, 1]} : vector<4x1xf32> to vector<3x1xf32>
    %18 = tpu.concatenate %7, %17 in 0 : vector<1x1xf32>, vector<3x1xf32> -> vector<4x1xf32>
    %19 = vector.extract_strided_slice %16 {offsets = [1, 0], sizes = [3, 1], strides = [1, 1]} : vector<4x1xf32> to vector<3x1xf32>
    %20 = tpu.concatenate %19, %7 in 0 : vector<3x1xf32>, vector<1x1xf32> -> vector<4x1xf32>
    %21 = vector.broadcast %0 : f32 to vector<4x1xf32>
    %22 = arith.mulf %21, %18 : vector<4x1xf32>
    %23 = vector.broadcast %1 : f32 to vector<4x1xf32>
    %24 = arith.mulf %23, %16 : vector<4x1xf32>
    %25 = arith.addf %22, %24 : vector<4x1xf32>
    %26 = vector.broadcast %2 : f32 to vector<4x1xf32>
    %27 = arith.mulf %26, %20 : vector<4x1xf32>
    %28 = arith.addf %25, %27 : vector<4x1xf32>
    %29 = vector.broadcast %4 : f32 to vector<4x1xf32>
    %30 = arith.addf %28, %29 : vector<4x1xf32>
    %31 = arith.negf %30 : vector<4x1xf32>
    %32 = math.exp %31 : vector<4x1xf32>
    %cst_11 = arith.constant 1.000000e+00 : f32
    %33 = vector.broadcast %cst_11 : f32 to vector<4x1xf32>
    %34 = arith.addf %33, %32 : vector<4x1xf32>
    %35 = arith.divf %33, %34 : vector<4x1xf32>
    %36 = vector.broadcast %35 : vector<4x1xf32> to vector<4x256xf32>
    %37 = arith.mulf %9, %36 : vector<4x256xf32>
    %cst_12 = arith.constant dense<0.000000e+00> : vector<256xf32>
    %38 = vector.multi_reduction <add>, %37, %cst_12 [0] : vector<4x256xf32> to vector<256xf32>
    %39 = vector.shape_cast %38 : vector<256xf32> to vector<1x256xf32>
    %cst_13 = arith.constant 2.500000e-01 : f32
    %40 = vector.broadcast %cst_13 : f32 to vector<1x256xf32>
    %41 = arith.mulf %39, %40 : vector<1x256xf32>
    %cst_14 = arith.constant dense<0xFF800000> : vector<256xf32>
    %42 = vector.multi_reduction <maximumf>, %37, %cst_14 [0] : vector<4x256xf32> to vector<256xf32>
    %43 = vector.shape_cast %42 : vector<256xf32> to vector<1x256xf32>
    %44 = tpu.concatenate %41, %43 in 1 : vector<1x256xf32>, vector<1x256xf32> -> vector<1x512xf32>
    %cst_15 = arith.constant dense<0.000000e+00> : vector<1x256xf32>
    %45 = tpu.matmul %44, %6, %cst_15 {dimension_numbers = #tpu.dot_dimension_numbers<[1], [0], [0], [1], [0, 0, 1, 1], [], []>, precision = #tpu.contract_precision<fp32>} : vector<1x512xf32>, vector<512x256xf32>, vector<1x256xf32> -> vector<1x256xf32>
    %46 = vector.broadcast %5 : f32 to vector<1x256xf32>
    %47 = arith.addf %45, %46 : vector<1x256xf32>
    %48 = arith.negf %47 : vector<1x256xf32>
    %49 = math.exp %48 : vector<1x256xf32>
    %cst_16 = arith.constant 1.000000e+00 : f32
    %50 = vector.broadcast %cst_16 : f32 to vector<1x256xf32>
    %51 = arith.addf %50, %49 : vector<1x256xf32>
    %52 = arith.divf %50, %51 : vector<1x256xf32>
    %53 = vector.broadcast %52 : vector<1x256xf32> to vector<4x256xf32>
    %54 = arith.mulf %37, %53 : vector<4x256xf32>
    %c0_17 = arith.constant 0 : index
    %c0_18 = arith.constant 0 : index
    %c0_19 = arith.constant 0 : index
    %55 = vector.load %arg6[%c0_17, %c0_18, %c0_19] : memref<2x4x256xf32, #tpu.memory_space<vmem>>, vector<1x4x256xf32>
    %56 = vector.shape_cast %55 : vector<1x4x256xf32> to vector<4x256xf32>
    %57 = vector.shape_cast %54 : vector<4x256xf32> to vector<1x4x256xf32>
    tpu.vector_store %arg6[%c0_17, %c0_18, %c0_19], %57 {strides = array<i32>} : memref<2x4x256xf32, #tpu.memory_space<vmem>>, vector<1x4x256xf32>,
    %c1_20 = arith.constant 1 : index
    %c0_21 = arith.constant 0 : index
    %c0_22 = arith.constant 0 : index
    %58 = vector.load %arg1[%c1_20, %c0_21, %c0_22] : memref<2x4x256xf32, #tpu.memory_space<vmem>>, vector<1x4x256xf32>
    %59 = vector.shape_cast %58 : vector<1x4x256xf32> to vector<4x256xf32>
    %cst_23 = arith.constant dense<0.000000e+00> : vector<4xf32>
    %60 = vector.multi_reduction <add>, %59, %cst_23 [1] : vector<4x256xf32> to vector<4xf32>
    %61 = vector.shape_cast %60 : vector<4xf32> to vector<4x1xf32>
    %cst_24 = arith.constant 3.906250e-03 : f32
    %62 = vector.broadcast %cst_24 : f32 to vector<4x1xf32>
    %63 = arith.mulf %61, %62 : vector<4x1xf32>
    %cst_25 = arith.constant dense<0xFF800000> : vector<4xf32>
    %64 = vector.multi_reduction <maximumf>, %59, %cst_25 [1] : vector<4x256xf32> to vector<4xf32>
    %65 = vector.shape_cast %64 : vector<4xf32> to vector<4x1xf32>
    %66 = arith.addf %63, %65 : vector<4x1xf32>
    %67 = vector.extract_strided_slice %66 {offsets = [0, 0], sizes = [3, 1], strides = [1, 1]} : vector<4x1xf32> to vector<3x1xf32>
    %68 = tpu.concatenate %7, %67 in 0 : vector<1x1xf32>, vector<3x1xf32> -> vector<4x1xf32>
    %69 = vector.extract_strided_slice %66 {offsets = [1, 0], sizes = [3, 1], strides = [1, 1]} : vector<4x1xf32> to vector<3x1xf32>
    %70 = tpu.concatenate %69, %7 in 0 : vector<3x1xf32>, vector<1x1xf32> -> vector<4x1xf32>
    %71 = vector.broadcast %0 : f32 to vector<4x1xf32>
    %72 = arith.mulf %71, %68 : vector<4x1xf32>
    %73 = vector.broadcast %1 : f32 to vector<4x1xf32>
    %74 = arith.mulf %73, %66 : vector<4x1xf32>
    %75 = arith.addf %72, %74 : vector<4x1xf32>
    %76 = vector.broadcast %2 : f32 to vector<4x1xf32>
    %77 = arith.mulf %76, %70 : vector<4x1xf32>
    %78 = arith.addf %75, %77 : vector<4x1xf32>
    %79 = vector.broadcast %4 : f32 to vector<4x1xf32>
    %80 = arith.addf %78, %79 : vector<4x1xf32>
    %81 = arith.negf %80 : vector<4x1xf32>
    %82 = math.exp %81 : vector<4x1xf32>
    %cst_26 = arith.constant 1.000000e+00 : f32
    %83 = vector.broadcast %cst_26 : f32 to vector<4x1xf32>
    %84 = arith.addf %83, %82 : vector<4x1xf32>
    %85 = arith.divf %83, %84 : vector<4x1xf32>
    %86 = vector.broadcast %85 : vector<4x1xf32> to vector<4x256xf32>
    %87 = arith.mulf %59, %86 : vector<4x256xf32>
    %cst_27 = arith.constant dense<0.000000e+00> : vector<256xf32>
    %88 = vector.multi_reduction <add>, %87, %cst_27 [0] : vector<4x256xf32> to vector<256xf32>
    %89 = vector.shape_cast %88 : vector<256xf32> to vector<1x256xf32>
    %cst_28 = arith.constant 2.500000e-01 : f32
    %90 = vector.broadcast %cst_28 : f32 to vector<1x256xf32>
    %91 = arith.mulf %89, %90 : vector<1x256xf32>
    %cst_29 = arith.constant dense<0xFF800000> : vector<256xf32>
    %92 = vector.multi_reduction <maximumf>, %87, %cst_29 [0] : vector<4x256xf32> to vector<256xf32>
    %93 = vector.shape_cast %92 : vector<256xf32> to vector<1x256xf32>
    %94 = tpu.concatenate %91, %93 in 1 : vector<1x256xf32>, vector<1x256xf32> -> vector<1x512xf32>
    %cst_30 = arith.constant dense<0.000000e+00> : vector<1x256xf32>
    %95 = tpu.matmul %94, %6, %cst_30 {dimension_numbers = #tpu.dot_dimension_numbers<[1], [0], [0], [1], [0, 0, 1, 1], [], []>, precision = #tpu.contract_precision<fp32>} : vector<1x512xf32>, vector<512x256xf32>, vector<1x256xf32> -> vector<1x256xf32>
    %96 = vector.broadcast %5 : f32 to vector<1x256xf32>
    %97 = arith.addf %95, %96 : vector<1x256xf32>
    %98 = arith.negf %97 : vector<1x256xf32>
    %99 = math.exp %98 : vector<1x256xf32>
    %cst_31 = arith.constant 1.000000e+00 : f32
    %100 = vector.broadcast %cst_31 : f32 to vector<1x256xf32>
    %101 = arith.addf %100, %99 : vector<1x256xf32>
    %102 = arith.divf %100, %101 : vector<1x256xf32>
    %103 = vector.broadcast %102 : vector<1x256xf32> to vector<4x256xf32>
    %104 = arith.mulf %87, %103 : vector<4x256xf32>
    %c1_32 = arith.constant 1 : index
    %c0_33 = arith.constant 0 : index
    %c0_34 = arith.constant 0 : index
    %105 = vector.load %arg6[%c1_32, %c0_33, %c0_34] : memref<2x4x256xf32, #tpu.memory_space<vmem>>, vector<1x4x256xf32>
    %106 = vector.shape_cast %105 : vector<1x4x256xf32> to vector<4x256xf32>
    %107 = vector.shape_cast %104 : vector<4x256xf32> to vector<1x4x256xf32>
    tpu.vector_store %arg6[%c1_32, %c0_33, %c0_34], %107 {strides = array<i32>} : memref<2x4x256xf32, #tpu.memory_space<vmem>>, vector<1x4x256xf32>,
    return
  }
  func.func @transform_0(%arg0: i32) -> (i32, i32, i32) {
    %c0_i32 = arith.constant 0 : i32
    %c0_i32_0 = arith.constant 0 : i32
    %c0_i32_1 = arith.constant 0 : i32
    return %arg0, %c0_i32, %c0_i32_0 : i32, i32, i32
  }
  func.func @transform_1(%arg0: i32) -> (i32, i32) {
    %c0_i32 = arith.constant 0 : i32
    %c0_i32_0 = arith.constant 0 : i32
    %c0_i32_1 = arith.constant 0 : i32
    return %c0_i32, %c0_i32_0 : i32, i32
  }
  func.func @transform_2(%arg0: i32) -> i32 {
    %c0_i32 = arith.constant 0 : i32
    %c0_i32_0 = arith.constant 0 : i32
    return %c0_i32 : i32
  }
  func.func @transform_3(%arg0: i32) -> i32 {
    %c0_i32 = arith.constant 0 : i32
    %c0_i32_0 = arith.constant 0 : i32
    return %c0_i32 : i32
  }
  func.func @transform_4(%arg0: i32) -> i32 {
    %c0_i32 = arith.constant 0 : i32
    %c0_i32_0 = arith.constant 0 : i32
    return %c0_i32 : i32
  }
  func.func @transform_5(%arg0: i32) -> (i32, i32, i32) {
    %c0_i32 = arith.constant 0 : i32
    %c0_i32_0 = arith.constant 0 : i32
    %c0_i32_1 = arith.constant 0 : i32
    return %arg0, %c0_i32, %c0_i32_0 : i32, i32, i32
  }
}

</mosaic_0001>

<llo_original>
// kernel: tpu_custom_call.1
$region0: #{tpu_custom_call.1}
  #allocation0 [shape = 'u32[]', space=smem, size = 0x4, offset = 0x4, fixed_abs, tag = 'smem constant byte address 0x4 - core index']
  #allocation1 [shape = 'u32[144,128]{1,0:T(1,128)}', space=vmem, size = 0x12000, scoped, tag = 'internal scratch']
  #allocation2 [shape = 'f32[1]{0:T(128)S(6)}', space=smem, size = 0x200, scoped, tag = 'scoped memory for tpu_custom_call.1']
  #allocation3 [shape = 'f32[1]{0:T(128)S(6)}', space=smem, size = 0x200, scoped, tag = 'scoped memory for tpu_custom_call.1']
  %s0 = inlined_call_operand.hbm [shape: f32[2,4,256], index: 0, kind: input, shape index: {}]
  %s1 = inlined_call_operand.hbm [shape: f32[512,256], index: 1, kind: input, shape index: {}]
  %s2 = inlined_call_operand.vmem [shape: f32[3], index: 2, kind: input, shape index: {}]
  %s3 = inlined_call_operand.<no memory space> [shape: f32[1], index: 3, kind: input, shape index: {}]
  %s4 = inlined_call_operand.<no memory space> [shape: f32[1], index: 4, kind: input, shape index: {}]
  %s5 = inlined_call_operand.hbm [shape: f32[2,4,256], index: 5, kind: output, shape index: {}]
  %s6 = sld [smem:[#allocation0]]
  $region42: #{tpu_custom_call.1} parent=0
    _
  %s8 = ssub.s32 1, %s6
  %s9 = scalar_select 0, %s8, %s6
  %10 = sst [smem:[#allocation2]] %s3
  %11 = sst [smem:[#allocation3]] %s4
  $region1: #{tpu_custom_call.1} parent=0
    #allocation4 [shape = 'u8[8192]{0}', space=vmem, size = 0x2000, scoped, tag = 'input window, operand 0, single buffered']
    #allocation5 [shape = 's32[1]{0}', space=sflag, size = 0x4, scoped, tag = 'scoped memory for tpu_custom_call.1']
    #allocation6 [shape = 's32[1]{0}', space=sflag, size = 0x4, scoped, tag = 'scoped memory for tpu_custom_call.1']
    #allocation7 [shape = 's32[1]{0}', space=sflag, size = 0x4, scoped, tag = 'scoped memory for tpu_custom_call.1']
    #allocation8 [shape = 'u8[524288]{0}', space=vmem, size = 0x80000, scoped, tag = 'input window, operand 1, single buffered']
    #allocation9 [shape = 's32[1]{0}', space=sflag, size = 0x4, scoped, tag = 'scoped memory for tpu_custom_call.1']
    #allocation10 [shape = 'u8[512]{0}', space=smem, size = 0x200, scoped, tag = 'input window, operand 2, single buffered']
    #allocation11 [shape = 'u8[8192]{0}', space=vmem, size = 0x2000, scoped, tag = 'output window, operand 0, single buffered']
    %12 = vsyncpa [#allocation5], 0
    %13 = vsyncpa [#allocation9], 0
    %14 = vsyncpa [#allocation7], 0
    %15 = vsyncpa [#allocation6], 0
    // Predicated region
    $region2: #{tpu_custom_call.1} parent=1 // pred_check
      _
    $region3: #{tpu_custom_call.1} parent=1 // pred_check_branch
      %17 = sbr.rel (0) target = $region5
    $region4: #{tpu_custom_call.1} parent=1 // pred_region
      %s19 = ssub.s32 256, 256
      %20 = vsyncadd [#allocation5], %s19
      %s21 = sshll.u32 [#allocation4], 4
      %s22 = int_to_ptr.vmem [resolvable:$true] %s21
      %27 = dma.hbm_to_vmem [thread:$0]  %s0, 256, %s22, [#allocation5], 128, 128, 8
    $region5: #{tpu_custom_call.1} parent=1 // pred_fallthru
      _
    // Predicated region
    $region6: #{tpu_custom_call.1} parent=1 // pred_check
      _
    $region7: #{tpu_custom_call.1} parent=1 // pred_check_branch
      %29 = sbr.rel (0) target = $region9
    $region8: #{tpu_custom_call.1} parent=1 // pred_region
      %s31 = ssub.s32 16384, 16384
      %32 = vsyncadd [#allocation9], %s31
      %s33 = sshll.u32 [#allocation8], 4
      %s34 = int_to_ptr.vmem [resolvable:$true] %s33
      %39 = dma.hbm_to_vmem [thread:$0]  %s1, 16384, %s34, [#allocation9], 256, 256, 16
    $region9: #{tpu_custom_call.1} parent=1 // pred_fallthru
      _
    // Predicated region
    $region10: #{tpu_custom_call.1} parent=1 // pred_check
      _
    $region11: #{tpu_custom_call.1} parent=1 // pred_check_branch
      %41 = sbr.rel (0) target = $region13
    $region12: #{tpu_custom_call.1} parent=1 // pred_region
      %s43 = ssub.s32 16, 16
      %44 = vsyncadd [#allocation7], %s43
      %s46 = sshll.u32 %s2, 4
      %s47 = int_to_ptr.vmem [resolvable:$true] %s46
      %49 = dma.vmem_to_smem %s47, 16, [#allocation10], [#allocation7]
    $region13: #{tpu_custom_call.1} parent=1 // pred_fallthru
      _
    // Predicated region
    $region14: #{tpu_custom_call.1} parent=1 // pred_check
      _
    $region15: #{tpu_custom_call.1} parent=1 // pred_check_branch
      %51 = sbr.rel (0) target = $region17
    $region16: #{tpu_custom_call.1} parent=1 // pred_region
      _
    $region17: #{tpu_custom_call.1} parent=1 // pred_fallthru
      _
    // Predicated region
    $region18: #{tpu_custom_call.1} parent=1 // pred_check
      _
    $region19: #{tpu_custom_call.1} parent=1 // pred_check_branch
      %53 = sbr.rel (0) target = $region21
    $region20: #{tpu_custom_call.1} parent=1 // pred_region
      _
    $region21: #{tpu_custom_call.1} parent=1 // pred_fallthru
      _
    // Predicated region
    $region22: #{tpu_custom_call.1} parent=1 // pred_check
      _
    $region23: #{tpu_custom_call.1} parent=1 // pred_check_branch
      %55 = sbr.rel (0) target = $region25
    $region24: #{tpu_custom_call.1} parent=1 // pred_region
      %56 = dma.done [#allocation5], 256
    $region25: #{tpu_custom_call.1} parent=1 // pred_fallthru
      _
    // Predicated region
    $region26: #{tpu_custom_call.1} parent=1 // pred_check
      _
    $region27: #{tpu_custom_call.1} parent=1 // pred_check_branch
      %58 = sbr.rel (0) target = $region29
    $region28: #{tpu_custom_call.1} parent=1 // pred_region
      %59 = dma.done [#allocation9], 16384
    $region29: #{tpu_custom_call.1} parent=1 // pred_fallthru
      _
    // Predicated region
    $region30: #{tpu_custom_call.1} parent=1 // pred_check
      _
    $region31: #{tpu_custom_call.1} parent=1 // pred_check_branch
      %61 = sbr.rel (0) target = $region33
    $region32: #{tpu_custom_call.1} parent=1 // pred_region
      %62 = dma.done [#allocation7], 16
    $region33: #{tpu_custom_call.1} parent=1 // pred_fallthru
      _
    %63 = sfence
    %s64 = sld [smem:[#allocation10]]
    %s65 = sld [smem:[#allocation10 + $0x1]]
    %s66 = sld [smem:[#allocation10 + $0x2]]
    %s67 = sld [smem:[#allocation2]]
    %s68 = smul.f32 %s67, 2.0
    %s69 = sld [smem:[#allocation3]]
    %v70 = vld [vmem:[#allocation8] sm:$0xff]
    %v71 = vld [vmem:[#allocation8 + $0x8] sm:$0xff]
    %v72 = vld [vmem:[#allocation8 + $0x10] sm:$0xff]
    %v73 = vld [vmem:[#allocation8 + $0x18] sm:$0xff]
    %v74 = vld [vmem:[#allocation8 + $0x20] sm:$0xff]
    %v75 = vld [vmem:[#allocation8 + $0x28] sm:$0xff]
    %v76 = vld [vmem:[#allocation8 + $0x30] sm:$0xff]
    %v77 = vld [vmem:[#allocation8 + $0x38] sm:$0xff]
    %v78 = vld [vmem:[#allocation8 + $0x40] sm:$0xff]
    %v79 = vld [vmem:[#allocation8 + $0x48] sm:$0xff]
    %v80 = vld [vmem:[#allocation8 + $0x50] sm:$0xff]
    %v81 = vld [vmem:[#allocation8 + $0x58] sm:$0xff]
    %v82 = vld [vmem:[#allocation8 + $0x60] sm:$0xff]
    %v83 = vld [vmem:[#allocation8 + $0x68] sm:$0xff]
    %v84 = vld [vmem:[#allocation8 + $0x70] sm:$0xff]
    %v85 = vld [vmem:[#allocation8 + $0x78] sm:$0xff]
    %v86 = vld [vmem:[#allocation8 + $0x80] sm:$0xff]
    %v87 = vld [vmem:[#allocation8 + $0x88] sm:$0xff]
    %v88 = vld [vmem:[#allocation8 + $0x90] sm:$0xff]
    %v89 = vld [vmem:[#allocation8 + $0x98] sm:$0xff]
    %v90 = vld [vmem:[#allocation8 + $0xa0] sm:$0xff]
    %v91 = vld [vmem:[#allocation8 + $0xa8] sm:$0xff]
    %v92 = vld [vmem:[#allocation8 + $0xb0] sm:$0xff]
    %v93 = vld [vmem:[#allocation8 + $0xb8] sm:$0xff]
    %v94 = vld [vmem:[#allocation8 + $0xc0] sm:$0xff]
    %v95 = vld [vmem:[#allocation8 + $0xc8] sm:$0xff]
    %v96 = vld [vmem:[#allocation8 + $0xd0] sm:$0xff]
    %v97 = vld [vmem:[#allocation8 + $0xd8] sm:$0xff]
    %v98 = vld [vmem:[#allocation8 + $0xe0] sm:$0xff]
    %v99 = vld [vmem:[#allocation8 + $0xe8] sm:$0xff]
    %v100 = vld [vmem:[#allocation8 + $0xf0] sm:$0xff]
    %v101 = vld [vmem:[#allocation8 + $0xf8] sm:$0xff]
    %v102 = vld [vmem:[#allocation8 + $0x100] sm:$0xff]
    %v103 = vld [vmem:[#allocation8 + $0x108] sm:$0xff]
    %v104 = vld [vmem:[#allocation8 + $0x110] sm:$0xff]
    %v105 = vld [vmem:[#allocation8 + $0x118] sm:$0xff]
    %v106 = vld [vmem:[#allocation8 + $0x120] sm:$0xff]
    %v107 = vld [vmem:[#allocation8 + $0x128] sm:$0xff]
    %v108 = vld [vmem:[#allocation8 + $0x130] sm:$0xff]
    %v109 = vld [vmem:[#allocation8 + $0x138] sm:$0xff]
    %v110 = vld [vmem:[#allocation8 + $0x140] sm:$0xff]
    %v111 = vld [vmem:[#allocation8 + $0x148] sm:$0xff]
    %v112 = vld [vmem:[#allocation8 + $0x150] sm:$0xff]
    %v113 = vld [vmem:[#allocation8 + $0x158] sm:$0xff]
    %v114 = vld [vmem:[#allocation8 + $0x160] sm:$0xff]
    %v115 = vld [vmem:[#allocation8 + $0x168] sm:$0xff]
    %v116 = vld [vmem:[#allocation8 + $0x170] sm:$0xff]
    %v117 = vld [vmem:[#allocation8 + $0x178] sm:$0xff]
    %v118 = vld [vmem:[#allocation8 + $0x180] sm:$0xff]
    %v119 = vld [vmem:[#allocation8 + $0x188] sm:$0xff]
    %v120 = vld [vmem:[#allocation8 + $0x190] sm:$0xff]
    %v121 = vld [vmem:[#allocation8 + $0x198] sm:$0xff]
    %v122 = vld [vmem:[#allocation8 + $0x1a0] sm:$0xff]
    %v123 = vld [vmem:[#allocation8 + $0x1a8] sm:$0xff]
    %v124 = vld [vmem:[#allocation8 + $0x1b0] sm:$0xff]
    %v125 = vld [vmem:[#allocation8 + $0x1b8] sm:$0xff]
    %v126 = vld [vmem:[#allocation8 + $0x1c0] sm:$0xff]
    %v127 = vld [vmem:[#allocation8 + $0x1c8] sm:$0xff]
    %v128 = vld [vmem:[#allocation8 + $0x1d0] sm:$0xff]
    %v129 = vld [vmem:[#allocation8 + $0x1d8] sm:$0xff]
    %v130 = vld [vmem:[#allocation8 + $0x1e0] sm:$0xff]
    %v131 = vld [vmem:[#allocation8 + $0x1e8] sm:$0xff]
    %v132 = vld [vmem:[#allocation8 + $0x1f0] sm:$0xff]
    %v133 = vld [vmem:[#allocation8 + $0x1f8] sm:$0xff]
    %v134 = vld [vmem:[#allocation8 + $0x200] sm:$0xff]
    %v135 = vld [vmem:[#allocation8 + $0x208] sm:$0xff]
    %v136 = vld [vmem:[#allocation8 + $0x210] sm:$0xff]
    %v137 = vld [vmem:[#allocation8 + $0x218] sm:$0xff]
    %v138 = vld [vmem:[#allocation8 + $0x220] sm:$0xff]
    %v139 = vld [vmem:[#allocation8 + $0x228] sm:$0xff]
    %v140 = vld [vmem:[#allocation8 + $0x230] sm:$0xff]
    %v141 = vld [vmem:[#allocation8 + $0x238] sm:$0xff]
    %v142 = vld [vmem:[#allocation8 + $0x240] sm:$0xff]
    %v143 = vld [vmem:[#allocation8 + $0x248] sm:$0xff]
    %v144 = vld [vmem:[#allocation8 + $0x250] sm:$0xff]
    %v145 = vld [vmem:[#allocation8 + $0x258] sm:$0xff]
    %v146 = vld [vmem:[#allocation8 + $0x260] sm:$0xff]
    %v147 = vld [vmem:[#allocation8 + $0x268] sm:$0xff]
    %v148 = vld [vmem:[#allocation8 + $0x270] sm:$0xff]
    %v149 = vld [vmem:[#allocation8 + $0x278] sm:$0xff]
    %v150 = vld [vmem:[#allocation8 + $0x280] sm:$0xff]
    %v151 = vld [vmem:[#allocation8 + $0x288] sm:$0xff]
    %v152 = vld [vmem:[#allocation8 + $0x290] sm:$0xff]
    %v153 = vld [vmem:[#allocation8 + $0x298] sm:$0xff]
    %v154 = vld [vmem:[#allocation8 + $0x2a0] sm:$0xff]
    %v155 = vld [vmem:[#allocation8 + $0x2a8] sm:$0xff]
    %v156 = vld [vmem:[#allocation8 + $0x2b0] sm:$0xff]
    %v157 = vld [vmem:[#allocation8 + $0x2b8] sm:$0xff]
    %v158 = vld [vmem:[#allocation8 + $0x2c0] sm:$0xff]
    %v159 = vld [vmem:[#allocation8 + $0x2c8] sm:$0xff]
    %v160 = vld [vmem:[#allocation8 + $0x2d0] sm:$0xff]
    %v161 = vld [vmem:[#allocation8 + $0x2d8] sm:$0xff]
    %v162 = vld [vmem:[#allocation8 + $0x2e0] sm:$0xff]
    %v163 = vld [vmem:[#allocation8 + $0x2e8] sm:$0xff]
    %v164 = vld [vmem:[#allocation8 + $0x2f0] sm:$0xff]
    %v165 = vld [vmem:[#allocation8 + $0x2f8] sm:$0xff]
    %v166 = vld [vmem:[#allocation8 + $0x300] sm:$0xff]
    %v167 = vld [vmem:[#allocation8 + $0x308] sm:$0xff]
    %v168 = vld [vmem:[#allocation8 + $0x310] sm:$0xff]
    %v169 = vld [vmem:[#allocation8 + $0x318] sm:$0xff]
    %v170 = vld [vmem:[#allocation8 + $0x320] sm:$0xff]
    %v171 = vld [vmem:[#allocation8 + $0x328] sm:$0xff]
    %v172 = vld [vmem:[#allocation8 + $0x330] sm:$0xff]
    %v173 = vld [vmem:[#allocation8 + $0x338] sm:$0xff]
    %v174 = vld [vmem:[#allocation8 + $0x340] sm:$0xff]
    %v175 = vld [vmem:[#allocation8 + $0x348] sm:$0xff]
    %v176 = vld [vmem:[#allocation8 + $0x350] sm:$0xff]
    %v177 = vld [vmem:[#allocation8 + $0x358] sm:$0xff]
    %v178 = vld [vmem:[#allocation8 + $0x360] sm:$0xff]
    %v179 = vld [vmem:[#allocation8 + $0x368] sm:$0xff]
    %v180 = vld [vmem:[#allocation8 + $0x370] sm:$0xff]
    %v181 = vld [vmem:[#allocation8 + $0x378] sm:$0xff]
    %v182 = vld [vmem:[#allocation8 + $0x380] sm:$0xff]
    %v183 = vld [vmem:[#allocation8 + $0x388] sm:$0xff]
    %v184 = vld [vmem:[#allocation8 + $0x390] sm:$0xff]
    %v185 = vld [vmem:[#allocation8 + $0x398] sm:$0xff]
    %v186 = vld [vmem:[#allocation8 + $0x3a0] sm:$0xff]
    %v187 = vld [vmem:[#allocation8 + $0x3a8] sm:$0xff]
    %v188 = vld [vmem:[#allocation8 + $0x3b0] sm:$0xff]
    %v189 = vld [vmem:[#allocation8 + $0x3b8] sm:$0xff]
    %v190 = vld [vmem:[#allocation8 + $0x3c0] sm:$0xff]
    %v191 = vld [vmem:[#allocation8 + $0x3c8] sm:$0xff]
    %v192 = vld [vmem:[#allocation8 + $0x3d0] sm:$0xff]
    %v193 = vld [vmem:[#allocation8 + $0x3d8] sm:$0xff]
    %v194 = vld [vmem:[#allocation8 + $0x3e0] sm:$0xff]
    %v195 = vld [vmem:[#allocation8 + $0x3e8] sm:$0xff]
    %v196 = vld [vmem:[#allocation8 + $0x3f0] sm:$0xff]
    %v197 = vld [vmem:[#allocation8 + $0x3f8] sm:$0xff]
    %v198 = vld [vmem:[#allocation4] sm:$0xff]
    %v200 = vcombine.high %v198, %v198
    %vm202 = vcmask 1043456
    %v203 = vsel %vm202, %v198, 0.0
    %v204 = vsel %vm202, %v200, 0.0
    %v205 = vadd.f32 %v203, %v204
    %206 = vadd.xlane.f32.xlu0 %v205
    %v207 = vpop.xlane.xlu0 %206
    %v208 = vmul.f32 %v207, 0.00390625
    %v209 = vsel %vm202, %v198, -inf
    %v210 = vsel %vm202, %v200, -inf
    %v211 = vmax.f32 %v209, %v210
    %212 = vmax.xlane.f32.xlu0 %v211
    %v213 = vpop.xlane.xlu0 %212
    %v214 = vadd.f32 %v208, %v213
    %v216 = vrot.slane %v214, 7
    %vm218 = vcmask 1040384
    %v219 = vsel %vm218, 0.0, %v216
    %v220 = vrot.slane %v214, 1
    %vm222 = vcmask 1042432
    %v223 = vsel %vm222, %v220, 0.0
    %v224 = vstv %s64
    %v225 = vmul.f32 %v224, %v219
    %v226 = vstv %s65
    %v227 = vmul.f32 %v226, %v214
    %v228 = vadd.f32 %v225, %v227
    %v229 = vstv %s66
    %v230 = vmul.f32 %v229, %v223
    %v231 = vadd.f32 %v228, %v230
    %v232 = vstv %s68
    %v233 = vadd.f32 %v231, %v232
    %v234 = vxor.u32 %v233, 2147483648
    %v235 = vmul.f32 %v234, 1.442695
    %v236 = vpow.pop %v235
    %v237 = vadd.f32 %v236, 1.0
    %v238 = vrcp.pop %v237
    %v239 = vmul.f32 1.0, %v238
    %241 = vset.pattern.permute.xlu0 0
    %242 = vperm.xlu0 %241, %v239
    %v243 = vpop.permute.xlu0 %242
    %v245 = vunpack.c.l.s4 839922192
    %v246 = vunpack.c.0.s8 %v245
    %v247 = vlaneseq
    %v248 = vshrl.u32 %v247, 7
    %v249 = vsub.s32 %v246, %v248
    %v250 = vrot.slane %v243, %v249
    %v252 = vmul.f32 %v198, %v250
    %v254 = vcombine.high %v252, %v252
    %v256 = vsel %vm202, %v252, 0.0
    %v257 = vrot.slane %v256, 4
    %v258 = vadd.f32 %v256, %v257
    %v259 = vrot.slane %v258, 2
    %v260 = vadd.f32 %v258, %v259
    %v261 = vrot.slane %v260, 1
    %v262 = vadd.f32 %v260, %v261
    %v263 = vsel %vm202, %v254, 0.0
    %v264 = vrot.slane %v263, 4
    %v265 = vadd.f32 %v263, %v264
    %v266 = vrot.slane %v265, 2
    %v267 = vadd.f32 %v265, %v266
    %v268 = vrot.slane %v267, 1
    %v269 = vadd.f32 %v267, %v268
    %v270 = vmul.f32 %v262, 0.25
    %v271 = vmul.f32 %v269, 0.25
    %v272 = vsel %vm202, %v252, -inf
    %v273 = vrot.slane %v272, 4
    %v274 = vmax.f32 %v272, %v273
    %v275 = vrot.slane %v274, 2
    %v276 = vmax.f32 %v274, %v275
    %v277 = vrot.slane %v276, 1
    %v278 = vmax.f32 %v276, %v277
    %v279 = vsel %vm202, %v254, -inf
    %v280 = vrot.slane %v279, 4
    %v281 = vmax.f32 %v279, %v280
    %v282 = vrot.slane %v281, 2
    %v283 = vmax.f32 %v281, %v282
    %v284 = vrot.slane %v283, 1
    %v285 = vmax.f32 %v283, %v284
    %v286 = vstv %s69
    %v287 = vand.u32 %v101, 4294901760
    %288 = vmatprep.subr.mxu0 %v287
    %v289 = vand.u32 %v100, 4294901760
    %290 = vmatpush1.msra.mxu0 %v289
    %v291 = vand.u32 %v99, 4294901760
    %292 = vmatprep.subr.mxu0 %v291
    %v293 = vand.u32 %v98, 4294901760
    %294 = vmatpush1.msra.mxu0 %v293
    %v295 = vand.u32 %v97, 4294901760
    %296 = vmatprep.subr.mxu0 %v295
    %v297 = vand.u32 %v96, 4294901760
    %298 = vmatpush1.msra.mxu0 %v297
    %v299 = vand.u32 %v95, 4294901760
    %300 = vmatprep.subr.mxu0 %v299
    %v301 = vand.u32 %v94, 4294901760
    %302 = vmatpush1.msra.mxu0 %v301
    %v303 = vand.u32 %v93, 4294901760
    %304 = vmatprep.subr.mxu0 %v303
    %v305 = vand.u32 %v92, 4294901760
    %306 = vmatpush1.msra.mxu0 %v305
    %v307 = vand.u32 %v91, 4294901760
    %308 = vmatprep.subr.mxu0 %v307
    %v309 = vand.u32 %v90, 4294901760
    %310 = vmatpush1.msra.mxu0 %v309
    %v311 = vand.u32 %v89, 4294901760
    %312 = vmatprep.subr.mxu0 %v311
    %v313 = vand.u32 %v88, 4294901760
    %314 = vmatpush1.msra.mxu0 %v313
    %v315 = vand.u32 %v87, 4294901760
    %316 = vmatprep.subr.mxu0 %v315
    %v317 = vand.u32 %v86, 4294901760
    %318 = vmatpush1.msra.mxu0 %v317
    %v319 = vand.u32 %v85, 4294901760
    %320 = vmatprep.subr.mxu0 %v319
    %v321 = vand.u32 %v84, 4294901760
    %322 = vmatpush1.msra.mxu0 %v321
    %v323 = vand.u32 %v83, 4294901760
    %324 = vmatprep.subr.mxu0 %v323
    %v325 = vand.u32 %v82, 4294901760
    %326 = vmatpush1.msra.mxu0 %v325
    %v327 = vand.u32 %v81, 4294901760
    %328 = vmatprep.subr.mxu0 %v327
    %v329 = vand.u32 %v80, 4294901760
    %330 = vmatpush1.msra.mxu0 %v329
    %v331 = vand.u32 %v79, 4294901760
    %332 = vmatprep.subr.mxu0 %v331
    %v333 = vand.u32 %v78, 4294901760
    %334 = vmatpush1.msra.mxu0 %v333
    %v335 = vand.u32 %v77, 4294901760
    %336 = vmatprep.subr.mxu0 %v335
    %v337 = vand.u32 %v76, 4294901760
    %338 = vmatpush1.msra.mxu0 %v337
    %v339 = vand.u32 %v75, 4294901760
    %340 = vmatprep.subr.mxu0 %v339
    %v341 = vand.u32 %v74, 4294901760
    %342 = vmatpush1.msra.mxu0 %v341
    %v343 = vand.u32 %v73, 4294901760
    %344 = vmatprep.subr.mxu0 %v343
    %v345 = vand.u32 %v72, 4294901760
    %346 = vmatpush1.msra.mxu0 %v345
    %v347 = vand.u32 %v71, 4294901760
    %348 = vmatprep.subr.mxu0 %v347
    %v349 = vand.u32 %v70, 4294901760
    %350 = vmatpush1.msra.mxu0 %v349
    %v351 = vand.u32 %v133, 4294901760
    %352 = vmatprep.subr.mxu0 %v351
    %v353 = vand.u32 %v132, 4294901760
    %354 = vmatpush2.msra.mxu0 %v353
    %v355 = vand.u32 %v131, 4294901760
    %356 = vmatprep.subr.mxu0 %v355
    %v357 = vand.u32 %v130, 4294901760
    %358 = vmatpush2.msra.mxu0 %v357
    %v359 = vand.u32 %v129, 4294901760
    %360 = vmatprep.subr.mxu0 %v359
    %v361 = vand.u32 %v128, 4294901760
    %362 = vmatpush2.msra.mxu0 %v361
    %v363 = vand.u32 %v127, 4294901760
    %364 = vmatprep.subr.mxu0 %v363
    %v365 = vand.u32 %v126, 4294901760
    %366 = vmatpush2.msra.mxu0 %v365
    %v367 = vand.u32 %v125, 4294901760
    %368 = vmatprep.subr.mxu0 %v367
    %v369 = vand.u32 %v124, 4294901760
    %370 = vmatpush2.msra.mxu0 %v369
    %v371 = vand.u32 %v123, 4294901760
    %372 = vmatprep.subr.mxu0 %v371
    %v373 = vand.u32 %v122, 4294901760
    %374 = vmatpush2.msra.mxu0 %v373
    %v375 = vand.u32 %v121, 4294901760
    %376 = vmatprep.subr.mxu0 %v375
    %v377 = vand.u32 %v120, 4294901760
    %378 = vmatpush2.msra.mxu0 %v377
    %v379 = vand.u32 %v119, 4294901760
    %380 = vmatprep.subr.mxu0 %v379
    %v381 = vand.u32 %v118, 4294901760
    %382 = vmatpush2.msra.mxu0 %v381
    %v383 = vand.u32 %v117, 4294901760
    %384 = vmatprep.subr.mxu0 %v383
    %v385 = vand.u32 %v116, 4294901760
    %386 = vmatpush2.msra.mxu0 %v385
    %v387 = vand.u32 %v115, 4294901760
    %388 = vmatprep.subr.mxu0 %v387
    %v389 = vand.u32 %v114, 4294901760
    %390 = vmatpush2.msra.mxu0 %v389
    %v391 = vand.u32 %v113, 4294901760
    %392 = vmatprep.subr.mxu0 %v391
    %v393 = vand.u32 %v112, 4294901760
    %394 = vmatpush2.msra.mxu0 %v393
    %v395 = vand.u32 %v111, 4294901760
    %396 = vmatprep.subr.mxu0 %v395
    %v397 = vand.u32 %v110, 4294901760
    %398 = vmatpush2.msra.mxu0 %v397
    %v399 = vand.u32 %v109, 4294901760
    %400 = vmatprep.subr.mxu0 %v399
    %v401 = vand.u32 %v108, 4294901760
    %402 = vmatpush2.msra.mxu0 %v401
    %v403 = vand.u32 %v107, 4294901760
    %404 = vmatprep.subr.mxu0 %v403
    %v405 = vand.u32 %v106, 4294901760
    %406 = vmatpush2.msra.mxu0 %v405
    %v407 = vand.u32 %v105, 4294901760
    %408 = vmatprep.subr.mxu0 %v407
    %v409 = vand.u32 %v104, 4294901760
    %410 = vmatpush2.msra.mxu0 %v409
    %v411 = vand.u32 %v103, 4294901760
    %412 = vmatprep.subr.mxu0 %v411
    %v413 = vand.u32 %v102, 4294901760
    %414 = vmatpush2.msra.mxu0 %v413
    %v415 = vand.u32 %v271, 4294901760
    %v416 = vsub.f32 %v271, %v415
    %v417 = vand.u32 %v416, 4294901760
    %v418 = vsub.f32 %v416, %v417
    %v419 = vand.u32 %v418, 4294901760
    %420 = vmatprep.mubr.f32.mxu0 %v419
    %v421 = vand.u32 %v270, 4294901760
    %v422 = vsub.f32 %v270, %v421
    %v423 = vand.u32 %v422, 4294901760
    %v424 = vsub.f32 %v422, %v423
    %v425 = vand.u32 %v424, 4294901760
    %426 = vmatmul.mubr.f32.gmra.mxu0 %v425
    %v427 = vpop.f32.mrf.mxu0
    %v428 = vadd.f32 %v286, %v427
    %v429 = vpop.f32.mrf.mxu0
    %v430 = vadd.f32 %v286, %v429
    %431 = vdwg.mxu0
    %v432 = vand.u32 %v101, 4294901760
    %v433 = vsub.f32 %v101, %v432
    %v434 = vand.u32 %v433, 4294901760
    %v435 = vsub.f32 %v433, %v434
    %v436 = vand.u32 %v435, 4294901760
    %437 = vmatprep.subr.mxu0 %v436
    %v438 = vand.u32 %v100, 4294901760
    %v439 = vsub.f32 %v100, %v438
    %v440 = vand.u32 %v439, 4294901760
    %v441 = vsub.f32 %v439, %v440
    %v442 = vand.u32 %v441, 4294901760
    %443 = vmatpush1.msra.mxu0 %v442
    %v444 = vand.u32 %v99, 4294901760
    %v445 = vsub.f32 %v99, %v444
    %v446 = vand.u32 %v445, 4294901760
    %v447 = vsub.f32 %v445, %v446
    %v448 = vand.u32 %v447, 4294901760
    %449 = vmatprep.subr.mxu0 %v448
    %v450 = vand.u32 %v98, 4294901760
    %v451 = vsub.f32 %v98, %v450
    %v452 = vand.u32 %v451, 4294901760
    %v453 = vsub.f32 %v451, %v452
    %v454 = vand.u32 %v453, 4294901760
    %455 = vmatpush1.msra.mxu0 %v454
    %v456 = vand.u32 %v97, 4294901760
    %v457 = vsub.f32 %v97, %v456
    %v458 = vand.u32 %v457, 4294901760
    %v459 = vsub.f32 %v457, %v458
    %v460 = vand.u32 %v459, 4294901760
    %461 = vmatprep.subr.mxu0 %v460
    %v462 = vand.u32 %v96, 4294901760
    %v463 = vsub.f32 %v96, %v462
    %v464 = vand.u32 %v463, 4294901760
    %v465 = vsub.f32 %v463, %v464
    %v466 = vand.u32 %v465, 4294901760
    %467 = vmatpush1.msra.mxu0 %v466
    %v468 = vand.u32 %v95, 4294901760
    %v469 = vsub.f32 %v95, %v468
    %v470 = vand.u32 %v469, 4294901760
    %v471 = vsub.f32 %v469, %v470
    %v472 = vand.u32 %v471, 4294901760
    %473 = vmatprep.subr.mxu0 %v472
    %v474 = vand.u32 %v94, 4294901760
    %v475 = vsub.f32 %v94, %v474
    %v476 = vand.u32 %v475, 4294901760
    %v477 = vsub.f32 %v475, %v476
    %v478 = vand.u32 %v477, 4294901760
    %479 = vmatpush1.msra.mxu0 %v478
    %v480 = vand.u32 %v93, 4294901760
    %v481 = vsub.f32 %v93, %v480
    %v482 = vand.u32 %v481, 4294901760
    %v483 = vsub.f32 %v481, %v482
    %v484 = vand.u32 %v483, 4294901760
    %485 = vmatprep.subr.mxu0 %v484
    %v486 = vand.u32 %v92, 4294901760
    %v487 = vsub.f32 %v92, %v486
    %v488 = vand.u32 %v487, 4294901760
    %v489 = vsub.f32 %v487, %v488
    %v490 = vand.u32 %v489, 4294901760
    %491 = vmatpush1.msra.mxu0 %v490
    %v492 = vand.u32 %v91, 4294901760
    %v493 = vsub.f32 %v91, %v492
    %v494 = vand.u32 %v493, 4294901760
    %v495 = vsub.f32 %v493, %v494
    %v496 = vand.u32 %v495, 4294901760
    %497 = vmatprep.subr.mxu0 %v496
    %v498 = vand.u32 %v90, 4294901760
    %v499 = vsub.f32 %v90, %v498
    %v500 = vand.u32 %v499, 4294901760
    %v501 = vsub.f32 %v499, %v500
    %v502 = vand.u32 %v501, 4294901760
    %503 = vmatpush1.msra.mxu0 %v502
    %v504 = vand.u32 %v89, 4294901760
    %v505 = vsub.f32 %v89, %v504
    %v506 = vand.u32 %v505, 4294901760
    %v507 = vsub.f32 %v505, %v506
    %v508 = vand.u32 %v507, 4294901760
    %509 = vmatprep.subr.mxu0 %v508
    %v510 = vand.u32 %v88, 4294901760
    %v511 = vsub.f32 %v88, %v510
    %v512 = vand.u32 %v511, 4294901760
    %v513 = vsub.f32 %v511, %v512
    %v514 = vand.u32 %v513, 4294901760
    %515 = vmatpush1.msra.mxu0 %v514
    %v516 = vand.u32 %v87, 4294901760
    %v517 = vsub.f32 %v87, %v516
    %v518 = vand.u32 %v517, 4294901760
    %v519 = vsub.f32 %v517, %v518
    %v520 = vand.u32 %v519, 4294901760
    %521 = vmatprep.subr.mxu0 %v520
    %v522 = vand.u32 %v86, 4294901760
    %v523 = vsub.f32 %v86, %v522
    %v524 = vand.u32 %v523, 4294901760
    %v525 = vsub.f32 %v523, %v524
    %v526 = vand.u32 %v525, 4294901760
    %527 = vmatpush1.msra.mxu0 %v526
    %v528 = vand.u32 %v85, 4294901760
    %v529 = vsub.f32 %v85, %v528
    %v530 = vand.u32 %v529, 4294901760
    %v531 = vsub.f32 %v529, %v530
    %v532 = vand.u32 %v531, 4294901760
    %533 = vmatprep.subr.mxu0 %v532
    %v534 = vand.u32 %v84, 4294901760
    %v535 = vsub.f32 %v84, %v534
    %v536 = vand.u32 %v535, 4294901760
    %v537 = vsub.f32 %v535, %v536
    %v538 = vand.u32 %v537, 4294901760
    %539 = vmatpush1.msra.mxu0 %v538
    %v540 = vand.u32 %v83, 4294901760
    %v541 = vsub.f32 %v83, %v540
    %v542 = vand.u32 %v541, 4294901760
    %v543 = vsub.f32 %v541, %v542
    %v544 = vand.u32 %v543, 4294901760
    %545 = vmatprep.subr.mxu0 %v544
    %v546 = vand.u32 %v82, 4294901760
    %v547 = vsub.f32 %v82, %v546
    %v548 = vand.u32 %v547, 4294901760
    %v549 = vsub.f32 %v547, %v548
    %v550 = vand.u32 %v549, 4294901760
    %551 = vmatpush1.msra.mxu0 %v550
    %v552 = vand.u32 %v81, 4294901760
    %v553 = vsub.f32 %v81, %v552
    %v554 = vand.u32 %v553, 4294901760
    %v555 = vsub.f32 %v553, %v554
    %v556 = vand.u32 %v555, 4294901760
    %557 = vmatprep.subr.mxu0 %v556
    %v558 = vand.u32 %v80, 4294901760
    %v559 = vsub.f32 %v80, %v558
    %v560 = vand.u32 %v559, 4294901760
    %v561 = vsub.f32 %v559, %v560
    %v562 = vand.u32 %v561, 4294901760
    %563 = vmatpush1.msra.mxu0 %v562
    %v564 = vand.u32 %v79, 4294901760
    %v565 = vsub.f32 %v79, %v564
    %v566 = vand.u32 %v565, 4294901760
    %v567 = vsub.f32 %v565, %v566
    %v568 = vand.u32 %v567, 4294901760
    %569 = vmatprep.subr.mxu0 %v568
    %v570 = vand.u32 %v78, 4294901760
    %v571 = vsub.f32 %v78, %v570
    %v572 = vand.u32 %v571, 4294901760
    %v573 = vsub.f32 %v571, %v572
    %v574 = vand.u32 %v573, 4294901760
    %575 = vmatpush1.msra.mxu0 %v574
    %v576 = vand.u32 %v77, 4294901760
    %v577 = vsub.f32 %v77, %v576
    %v578 = vand.u32 %v577, 4294901760
    %v579 = vsub.f32 %v577, %v578
    %v580 = vand.u32 %v579, 4294901760
    %581 = vmatprep.subr.mxu0 %v580
    %v582 = vand.u32 %v76, 4294901760
    %v583 = vsub.f32 %v76, %v582
    %v584 = vand.u32 %v583, 4294901760
    %v585 = vsub.f32 %v583, %v584
    %v586 = vand.u32 %v585, 4294901760
    %587 = vmatpush1.msra.mxu0 %v586
    %v588 = vand.u32 %v75, 4294901760
    %v589 = vsub.f32 %v75, %v588
    %v590 = vand.u32 %v589, 4294901760
    %v591 = vsub.f32 %v589, %v590
    %v592 = vand.u32 %v591, 4294901760
    %593 = vmatprep.subr.mxu0 %v592
    %v594 = vand.u32 %v74, 4294901760
    %v595 = vsub.f32 %v74, %v594
    %v596 = vand.u32 %v595, 4294901760
    %v597 = vsub.f32 %v595, %v596
    %v598 = vand.u32 %v597, 4294901760
    %599 = vmatpush1.msra.mxu0 %v598
    %v600 = vand.u32 %v73, 4294901760
    %v601 = vsub.f32 %v73, %v600
    %v602 = vand.u32 %v601, 4294901760
    %v603 = vsub.f32 %v601, %v602
    %v604 = vand.u32 %v603, 4294901760
    %605 = vmatprep.subr.mxu0 %v604
    %v606 = vand.u32 %v72, 4294901760
    %v607 = vsub.f32 %v72, %v606
    %v608 = vand.u32 %v607, 4294901760
    %v609 = vsub.f32 %v607, %v608
    %v610 = vand.u32 %v609, 4294901760
    %611 = vmatpush1.msra.mxu0 %v610
    %v612 = vand.u32 %v71, 4294901760
    %v613 = vsub.f32 %v71, %v612
    %v614 = vand.u32 %v613, 4294901760
    %v615 = vsub.f32 %v613, %v614
    %v616 = vand.u32 %v615, 4294901760
    %617 = vmatprep.subr.mxu0 %v616
    %v618 = vand.u32 %v70, 4294901760
    %v619 = vsub.f32 %v70, %v618
    %v620 = vand.u32 %v619, 4294901760
    %v621 = vsub.f32 %v619, %v620
    %v622 = vand.u32 %v621, 4294901760
    %623 = vmatpush1.msra.mxu0 %v622
    %v624 = vand.u32 %v133, 4294901760
    %v625 = vsub.f32 %v133, %v624
    %v626 = vand.u32 %v625, 4294901760
    %v627 = vsub.f32 %v625, %v626
    %v628 = vand.u32 %v627, 4294901760
    %629 = vmatprep.subr.mxu0 %v628
    %v630 = vand.u32 %v132, 4294901760
    %v631 = vsub.f32 %v132, %v630
    %v632 = vand.u32 %v631, 4294901760
    %v633 = vsub.f32 %v631, %v632
    %v634 = vand.u32 %v633, 4294901760
    %635 = vmatpush2.msra.mxu0 %v634
    %v636 = vand.u32 %v131, 4294901760
    %v637 = vsub.f32 %v131, %v636
    %v638 = vand.u32 %v637, 4294901760
    %v639 = vsub.f32 %v637, %v638
    %v640 = vand.u32 %v639, 4294901760
    %641 = vmatprep.subr.mxu0 %v640
    %v642 = vand.u32 %v130, 4294901760
    %v643 = vsub.f32 %v130, %v642
    %v644 = vand.u32 %v643, 4294901760
    %v645 = vsub.f32 %v643, %v644
    %v646 = vand.u32 %v645, 4294901760
    %647 = vmatpush2.msra.mxu0 %v646
    %v648 = vand.u32 %v129, 4294901760
    %v649 = vsub.f32 %v129, %v648
    %v650 = vand.u32 %v649, 4294901760
    %v651 = vsub.f32 %v649, %v650
    %v652 = vand.u32 %v651, 4294901760
    %653 = vmatprep.subr.mxu0 %v652
    %v654 = vand.u32 %v128, 4294901760
    %v655 = vsub.f32 %v128, %v654
    %v656 = vand.u32 %v655, 4294901760
    %v657 = vsub.f32 %v655, %v656
    %v658 = vand.u32 %v657, 4294901760
    %659 = vmatpush2.msra.mxu0 %v658
    %v660 = vand.u32 %v127, 4294901760
    %v661 = vsub.f32 %v127, %v660
    %v662 = vand.u32 %v661, 4294901760
    %v663 = vsub.f32 %v661, %v662
    %v664 = vand.u32 %v663, 4294901760
    %665 = vmatprep.subr.mxu0 %v664
    %v666 = vand.u32 %v126, 4294901760
    %v667 = vsub.f32 %v126, %v666
    %v668 = vand.u32 %v667, 4294901760
    %v669 = vsub.f32 %v667, %v668
    %v670 = vand.u32 %v669, 4294901760
    %671 = vmatpush2.msra.mxu0 %v670
    %v672 = vand.u32 %v125, 4294901760
    %v673 = vsub.f32 %v125, %v672
    %v674 = vand.u32 %v673, 4294901760
    %v675 = vsub.f32 %v673, %v674
    %v676 = vand.u32 %v675, 4294901760
    %677 = vmatprep.subr.mxu0 %v676
    %v678 = vand.u32 %v124, 4294901760
    %v679 = vsub.f32 %v124, %v678
    %v680 = vand.u32 %v679, 4294901760
    %v681 = vsub.f32 %v679, %v680
    %v682 = vand.u32 %v681, 4294901760
    %683 = vmatpush2.msra.mxu0 %v682
    %v684 = vand.u32 %v123, 4294901760
    %v685 = vsub.f32 %v123, %v684
    %v686 = vand.u32 %v685, 4294901760
    %v687 = vsub.f32 %v685, %v686
    %v688 = vand.u32 %v687, 4294901760
    %689 = vmatprep.subr.mxu0 %v688
    %v690 = vand.u32 %v122, 4294901760
    %v691 = vsub.f32 %v122, %v690
    %v692 = vand.u32 %v691, 4294901760
    %v693 = vsub.f32 %v691, %v692
    %v694 = vand.u32 %v693, 4294901760
    %695 = vmatpush2.msra.mxu0 %v694
    %v696 = vand.u32 %v121, 4294901760
    %v697 = vsub.f32 %v121, %v696
    %v698 = vand.u32 %v697, 4294901760
    %v699 = vsub.f32 %v697, %v698
    %v700 = vand.u32 %v699, 4294901760
    %701 = vmatprep.subr.mxu0 %v700
    %v702 = vand.u32 %v120, 4294901760
    %v703 = vsub.f32 %v120, %v702
    %v704 = vand.u32 %v703, 4294901760
    %v705 = vsub.f32 %v703, %v704
    %v706 = vand.u32 %v705, 4294901760
    %707 = vmatpush2.msra.mxu0 %v706
    %v708 = vand.u32 %v119, 4294901760
    %v709 = vsub.f32 %v119, %v708
    %v710 = vand.u32 %v709, 4294901760
    %v711 = vsub.f32 %v709, %v710
    %v712 = vand.u32 %v711, 4294901760
    %713 = vmatprep.subr.mxu0 %v712
    %v714 = vand.u32 %v118, 4294901760
    %v715 = vsub.f32 %v118, %v714
    %v716 = vand.u32 %v715, 4294901760
    %v717 = vsub.f32 %v715, %v716
    %v718 = vand.u32 %v717, 4294901760
    %719 = vmatpush2.msra.mxu0 %v718
    %v720 = vand.u32 %v117, 4294901760
    %v721 = vsub.f32 %v117, %v720
    %v722 = vand.u32 %v721, 4294901760
    %v723 = vsub.f32 %v721, %v722
    %v724 = vand.u32 %v723, 4294901760
    %725 = vmatprep.subr.mxu0 %v724
    %v726 = vand.u32 %v116, 4294901760
    %v727 = vsub.f32 %v116, %v726
    %v728 = vand.u32 %v727, 4294901760
    %v729 = vsub.f32 %v727, %v728
    %v730 = vand.u32 %v729, 4294901760
    %731 = vmatpush2.msra.mxu0 %v730
    %v732 = vand.u32 %v115, 4294901760
    %v733 = vsub.f32 %v115, %v732
    %v734 = vand.u32 %v733, 4294901760
    %v735 = vsub.f32 %v733, %v734
    %v736 = vand.u32 %v735, 4294901760
    %737 = vmatprep.subr.mxu0 %v736
    %v738 = vand.u32 %v114, 4294901760
    %v739 = vsub.f32 %v114, %v738
    %v740 = vand.u32 %v739, 4294901760
    %v741 = vsub.f32 %v739, %v740
    %v742 = vand.u32 %v741, 4294901760
    %743 = vmatpush2.msra.mxu0 %v742
    %v744 = vand.u32 %v113, 4294901760
    %v745 = vsub.f32 %v113, %v744
    %v746 = vand.u32 %v745, 4294901760
    %v747 = vsub.f32 %v745, %v746
    %v748 = vand.u32 %v747, 4294901760
    %749 = vmatprep.subr.mxu0 %v748
    %v750 = vand.u32 %v112, 4294901760
    %v751 = vsub.f32 %v112, %v750
    %v752 = vand.u32 %v751, 4294901760
    %v753 = vsub.f32 %v751, %v752
    %v754 = vand.u32 %v753, 4294901760
    %755 = vmatpush2.msra.mxu0 %v754
    %v756 = vand.u32 %v111, 4294901760
    %v757 = vsub.f32 %v111, %v756
    %v758 = vand.u32 %v757, 4294901760
    %v759 = vsub.f32 %v757, %v758
    %v760 = vand.u32 %v759, 4294901760
    %761 = vmatprep.subr.mxu0 %v760
    %v762 = vand.u32 %v110, 4294901760
    %v763 = vsub.f32 %v110, %v762
    %v764 = vand.u32 %v763, 4294901760
    %v765 = vsub.f32 %v763, %v764
    %v766 = vand.u32 %v765, 4294901760
    %767 = vmatpush2.msra.mxu0 %v766
    %v768 = vand.u32 %v109, 4294901760
    %v769 = vsub.f32 %v109, %v768
    %v770 = vand.u32 %v769, 4294901760
    %v771 = vsub.f32 %v769, %v770
    %v772 = vand.u32 %v771, 4294901760
    %773 = vmatprep.subr.mxu0 %v772
    %v774 = vand.u32 %v108, 4294901760
    %v775 = vsub.f32 %v108, %v774
    %v776 = vand.u32 %v775, 4294901760
    %v777 = vsub.f32 %v775, %v776
    %v778 = vand.u32 %v777, 4294901760
    %779 = vmatpush2.msra.mxu0 %v778
    %v780 = vand.u32 %v107, 4294901760
    %v781 = vsub.f32 %v107, %v780
    %v782 = vand.u32 %v781, 4294901760
    %v783 = vsub.f32 %v781, %v782
    %v784 = vand.u32 %v783, 4294901760
    %785 = vmatprep.subr.mxu0 %v784
    %v786 = vand.u32 %v106, 4294901760
    %v787 = vsub.f32 %v106, %v786
    %v788 = vand.u32 %v787, 4294901760
    %v789 = vsub.f32 %v787, %v788
    %v790 = vand.u32 %v789, 4294901760
    %791 = vmatpush2.msra.mxu0 %v790
    %v792 = vand.u32 %v105, 4294901760
    %v793 = vsub.f32 %v105, %v792
    %v794 = vand.u32 %v793, 4294901760
    %v795 = vsub.f32 %v793, %v794
    %v796 = vand.u32 %v795, 4294901760
    %797 = vmatprep.subr.mxu0 %v796
    %v798 = vand.u32 %v104, 4294901760
    %v799 = vsub.f32 %v104, %v798
    %v800 = vand.u32 %v799, 4294901760
    %v801 = vsub.f32 %v799, %v800
    %v802 = vand.u32 %v801, 4294901760
    %803 = vmatpush2.msra.mxu0 %v802
    %v804 = vand.u32 %v103, 4294901760
    %v805 = vsub.f32 %v103, %v804
    %v806 = vand.u32 %v805, 4294901760
    %v807 = vsub.f32 %v805, %v806
    %v808 = vand.u32 %v807, 4294901760
    %809 = vmatprep.subr.mxu0 %v808
    %v810 = vand.u32 %v102, 4294901760
    %v811 = vsub.f32 %v102, %v810
    %v812 = vand.u32 %v811, 4294901760
    %v813 = vsub.f32 %v811, %v812
    %v814 = vand.u32 %v813, 4294901760
    %815 = vmatpush2.msra.mxu0 %v814
    %v816 = vand.u32 %v271, 4294901760
    %817 = vmatprep.mubr.f32.mxu0 %v816
    %v818 = vand.u32 %v270, 4294901760
    %819 = vmatmul.mubr.f32.gmra.mxu0 %v818
    %v820 = vpop.f32.mrf.mxu0
    %v821 = vadd.f32 %v428, %v820
    %v822 = vpop.f32.mrf.mxu0
    %v823 = vadd.f32 %v430, %v822
    %824 = vdwg.mxu0
    %v825 = vand.u32 %v101, 4294901760
    %v826 = vsub.f32 %v101, %v825
    %827 = vmatprep.subr.mxu0 %v826
    %v828 = vand.u32 %v100, 4294901760
    %v829 = vsub.f32 %v100, %v828
    %830 = vmatpush1.msra.mxu0 %v829
    %v831 = vand.u32 %v99, 4294901760
    %v832 = vsub.f32 %v99, %v831
    %833 = vmatprep.subr.mxu0 %v832
    %v834 = vand.u32 %v98, 4294901760
    %v835 = vsub.f32 %v98, %v834
    %836 = vmatpush1.msra.mxu0 %v835
    %v837 = vand.u32 %v97, 4294901760
    %v838 = vsub.f32 %v97, %v837
    %839 = vmatprep.subr.mxu0 %v838
    %v840 = vand.u32 %v96, 4294901760
    %v841 = vsub.f32 %v96, %v840
    %842 = vmatpush1.msra.mxu0 %v841
    %v843 = vand.u32 %v95, 4294901760
    %v844 = vsub.f32 %v95, %v843
    %845 = vmatprep.subr.mxu0 %v844
    %v846 = vand.u32 %v94, 4294901760
    %v847 = vsub.f32 %v94, %v846
    %848 = vmatpush1.msra.mxu0 %v847
    %v849 = vand.u32 %v93, 4294901760
    %v850 = vsub.f32 %v93, %v849
    %851 = vmatprep.subr.mxu0 %v850
    %v852 = vand.u32 %v92, 4294901760
    %v853 = vsub.f32 %v92, %v852
    %854 = vmatpush1.msra.mxu0 %v853
    %v855 = vand.u32 %v91, 4294901760
    %v856 = vsub.f32 %v91, %v855
    %857 = vmatprep.subr.mxu0 %v856
    %v858 = vand.u32 %v90, 4294901760
    %v859 = vsub.f32 %v90, %v858
    %860 = vmatpush1.msra.mxu0 %v859
    %v861 = vand.u32 %v89, 4294901760
    %v862 = vsub.f32 %v89, %v861
    %863 = vmatprep.subr.mxu0 %v862
    %v864 = vand.u32 %v88, 4294901760
    %v865 = vsub.f32 %v88, %v864
    %866 = vmatpush1.msra.mxu0 %v865
    %v867 = vand.u32 %v87, 4294901760
    %v868 = vsub.f32 %v87, %v867
    %869 = vmatprep.subr.mxu0 %v868
    %v870 = vand.u32 %v86, 4294901760
    %v871 = vsub.f32 %v86, %v870
    %872 = vmatpush1.msra.mxu0 %v871
    %v873 = vand.u32 %v85, 4294901760
    %v874 = vsub.f32 %v85, %v873
    %875 = vmatprep.subr.mxu0 %v874
    %v876 = vand.u32 %v84, 4294901760
    %v877 = vsub.f32 %v84, %v876
    %878 = vmatpush1.msra.mxu0 %v877
    %v879 = vand.u32 %v83, 4294901760
    %v880 = vsub.f32 %v83, %v879
    %881 = vmatprep.subr.mxu0 %v880
    %v882 = vand.u32 %v82, 4294901760
    %v883 = vsub.f32 %v82, %v882
    %884 = vmatpush1.msra.mxu0 %v883
    %v885 = vand.u32 %v81, 4294901760
    %v886 = vsub.f32 %v81, %v885
    %887 = vmatprep.subr.mxu0 %v886
    %v888 = vand.u32 %v80, 4294901760
    %v889 = vsub.f32 %v80, %v888
    %890 = vmatpush1.msra.mxu0 %v889
    %v891 = vand.u32 %v79, 4294901760
    %v892 = vsub.f32 %v79, %v891
    %893 = vmatprep.subr.mxu0 %v892
    %v894 = vand.u32 %v78, 4294901760
    %v895 = vsub.f32 %v78, %v894
    %896 = vmatpush1.msra.mxu0 %v895
    %v897 = vand.u32 %v77, 4294901760
    %v898 = vsub.f32 %v77, %v897
    %899 = vmatprep.subr.mxu0 %v898
    %v900 = vand.u32 %v76, 4294901760
    %v901 = vsub.f32 %v76, %v900
    %902 = vmatpush1.msra.mxu0 %v901
    %v903 = vand.u32 %v75, 4294901760
    %v904 = vsub.f32 %v75, %v903
    %905 = vmatprep.subr.mxu0 %v904
    %v906 = vand.u32 %v74, 4294901760
    %v907 = vsub.f32 %v74, %v906
    %908 = vmatpush1.msra.mxu0 %v907
    %v909 = vand.u32 %v73, 4294901760
    %v910 = vsub.f32 %v73, %v909
    %911 = vmatprep.subr.mxu0 %v910
    %v912 = vand.u32 %v72, 4294901760
    %v913 = vsub.f32 %v72, %v912
    %914 = vmatpush1.msra.mxu0 %v913
    %v915 = vand.u32 %v71, 4294901760
    %v916 = vsub.f32 %v71, %v915
    %917 = vmatprep.subr.mxu0 %v916
    %v918 = vand.u32 %v70, 4294901760
    %v919 = vsub.f32 %v70, %v918
    %920 = vmatpush1.msra.mxu0 %v919
    %v921 = vand.u32 %v133, 4294901760
    %v922 = vsub.f32 %v133, %v921
    %923 = vmatprep.subr.mxu0 %v922
    %v924 = vand.u32 %v132, 4294901760
    %v925 = vsub.f32 %v132, %v924
    %926 = vmatpush2.msra.mxu0 %v925
    %v927 = vand.u32 %v131, 4294901760
    %v928 = vsub.f32 %v131, %v927
    %929 = vmatprep.subr.mxu0 %v928
    %v930 = vand.u32 %v130, 4294901760
    %v931 = vsub.f32 %v130, %v930
    %932 = vmatpush2.msra.mxu0 %v931
    %v933 = vand.u32 %v129, 4294901760
    %v934 = vsub.f32 %v129, %v933
    %935 = vmatprep.subr.mxu0 %v934
    %v936 = vand.u32 %v128, 4294901760
    %v937 = vsub.f32 %v128, %v936
    %938 = vmatpush2.msra.mxu0 %v937
    %v939 = vand.u32 %v127, 4294901760
    %v940 = vsub.f32 %v127, %v939
    %941 = vmatprep.subr.mxu0 %v940
    %v942 = vand.u32 %v126, 4294901760
    %v943 = vsub.f32 %v126, %v942
    %944 = vmatpush2.msra.mxu0 %v943
    %v945 = vand.u32 %v125, 4294901760
    %v946 = vsub.f32 %v125, %v945
    %947 = vmatprep.subr.mxu0 %v946
    %v948 = vand.u32 %v124, 4294901760
    %v949 = vsub.f32 %v124, %v948
    %950 = vmatpush2.msra.mxu0 %v949
    %v951 = vand.u32 %v123, 4294901760
    %v952 = vsub.f32 %v123, %v951
    %953 = vmatprep.subr.mxu0 %v952
    %v954 = vand.u32 %v122, 4294901760
    %v955 = vsub.f32 %v122, %v954
    %956 = vmatpush2.msra.mxu0 %v955
    %v957 = vand.u32 %v121, 4294901760
    %v958 = vsub.f32 %v121, %v957
    %959 = vmatprep.subr.mxu0 %v958
    %v960 = vand.u32 %v120, 4294901760
    %v961 = vsub.f32 %v120, %v960
    %962 = vmatpush2.msra.mxu0 %v961
    %v963 = vand.u32 %v119, 4294901760
    %v964 = vsub.f32 %v119, %v963
    %965 = vmatprep.subr.mxu0 %v964
    %v966 = vand.u32 %v118, 4294901760
    %v967 = vsub.f32 %v118, %v966
    %968 = vmatpush2.msra.mxu0 %v967
    %v969 = vand.u32 %v117, 4294901760
    %v970 = vsub.f32 %v117, %v969
    %971 = vmatprep.subr.mxu0 %v970
    %v972 = vand.u32 %v116, 4294901760
    %v973 = vsub.f32 %v116, %v972
    %974 = vmatpush2.msra.mxu0 %v973
    %v975 = vand.u32 %v115, 4294901760
    %v976 = vsub.f32 %v115, %v975
    %977 = vmatprep.subr.mxu0 %v976
    %v978 = vand.u32 %v114, 4294901760
    %v979 = vsub.f32 %v114, %v978
    %980 = vmatpush2.msra.mxu0 %v979
    %v981 = vand.u32 %v113, 4294901760
    %v982 = vsub.f32 %v113, %v981
    %983 = vmatprep.subr.mxu0 %v982
    %v984 = vand.u32 %v112, 4294901760
    %v985 = vsub.f32 %v112, %v984
    %986 = vmatpush2.msra.mxu0 %v985
    %v987 = vand.u32 %v111, 4294901760
    %v988 = vsub.f32 %v111, %v987
    %989 = vmatprep.subr.mxu0 %v988
    %v990 = vand.u32 %v110, 4294901760
    %v991 = vsub.f32 %v110, %v990
    %992 = vmatpush2.msra.mxu0 %v991
    %v993 = vand.u32 %v109, 4294901760
    %v994 = vsub.f32 %v109, %v993
    %995 = vmatprep.subr.mxu0 %v994
    %v996 = vand.u32 %v108, 4294901760
    %v997 = vsub.f32 %v108, %v996
    %998 = vmatpush2.msra.mxu0 %v997
    %v999 = vand.u32 %v107, 4294901760
    %v1000 = vsub.f32 %v107, %v999
    %1001 = vmatprep.subr.mxu0 %v1000
    %v1002 = vand.u32 %v106, 4294901760
    %v1003 = vsub.f32 %v106, %v1002
    %1004 = vmatpush2.msra.mxu0 %v1003
    %v1005 = vand.u32 %v105, 4294901760
    %v1006 = vsub.f32 %v105, %v1005
    %1007 = vmatprep.subr.mxu0 %v1006
    %v1008 = vand.u32 %v104, 4294901760
    %v1009 = vsub.f32 %v104, %v1008
    %1010 = vmatpush2.msra.mxu0 %v1009
    %v1011 = vand.u32 %v103, 4294901760
    %v1012 = vsub.f32 %v103, %v1011
    %1013 = vmatprep.subr.mxu0 %v1012
    %v1014 = vand.u32 %v102, 4294901760
    %v1015 = vsub.f32 %v102, %v1014
    %1016 = vmatpush2.msra.mxu0 %v1015
    %v1017 = vand.u32 %v271, 4294901760
    %v1018 = vsub.f32 %v271, %v1017
    %1019 = vmatprep.mubr.f32.mxu0 %v1018
    %v1020 = vand.u32 %v270, 4294901760
    %v1021 = vsub.f32 %v270, %v1020
    %1022 = vmatmul.mubr.f32.gmra.mxu0 %v1021
    %v1023 = vpop.f32.mrf.mxu0
    %v1024 = vadd.f32 %v821, %v1023
    %v1025 = vpop.f32.mrf.mxu0
    %v1026 = vadd.f32 %v823, %v1025
    %1027 = vdwg.mxu0
    %v1028 = vand.u32 %v101, 4294901760
    %1029 = vmatprep.subr.mxu0 %v1028
    %v1030 = vand.u32 %v100, 4294901760
    %1031 = vmatpush1.msra.mxu0 %v1030
    %v1032 = vand.u32 %v99, 4294901760
    %1033 = vmatprep.subr.mxu0 %v1032
    %v1034 = vand.u32 %v98, 4294901760
    %1035 = vmatpush1.msra.mxu0 %v1034
    %v1036 = vand.u32 %v97, 4294901760
    %1037 = vmatprep.subr.mxu0 %v1036
    %v1038 = vand.u32 %v96, 4294901760
    %1039 = vmatpush1.msra.mxu0 %v1038
    %v1040 = vand.u32 %v95, 4294901760
    %1041 = vmatprep.subr.mxu0 %v1040
    %v1042 = vand.u32 %v94, 4294901760
    %1043 = vmatpush1.msra.mxu0 %v1042
    %v1044 = vand.u32 %v93, 4294901760
    %1045 = vmatprep.subr.mxu0 %v1044
    %v1046 = vand.u32 %v92, 4294901760
    %1047 = vmatpush1.msra.mxu0 %v1046
    %v1048 = vand.u32 %v91, 4294901760
    %1049 = vmatprep.subr.mxu0 %v1048
    %v1050 = vand.u32 %v90, 4294901760
    %1051 = vmatpush1.msra.mxu0 %v1050
    %v1052 = vand.u32 %v89, 4294901760
    %1053 = vmatprep.subr.mxu0 %v1052
    %v1054 = vand.u32 %v88, 4294901760
    %1055 = vmatpush1.msra.mxu0 %v1054
    %v1056 = vand.u32 %v87, 4294901760
    %1057 = vmatprep.subr.mxu0 %v1056
    %v1058 = vand.u32 %v86, 4294901760
    %1059 = vmatpush1.msra.mxu0 %v1058
    %v1060 = vand.u32 %v85, 4294901760
    %1061 = vmatprep.subr.mxu0 %v1060
    %v1062 = vand.u32 %v84, 4294901760
    %1063 = vmatpush1.msra.mxu0 %v1062
    %v1064 = vand.u32 %v83, 4294901760
    %1065 = vmatprep.subr.mxu0 %v1064
    %v1066 = vand.u32 %v82, 4294901760
    %1067 = vmatpush1.msra.mxu0 %v1066
    %v1068 = vand.u32 %v81, 4294901760
    %1069 = vmatprep.subr.mxu0 %v1068
    %v1070 = vand.u32 %v80, 4294901760
    %1071 = vmatpush1.msra.mxu0 %v1070
    %v1072 = vand.u32 %v79, 4294901760
    %1073 = vmatprep.subr.mxu0 %v1072
    %v1074 = vand.u32 %v78, 4294901760
    %1075 = vmatpush1.msra.mxu0 %v1074
    %v1076 = vand.u32 %v77, 4294901760
    %1077 = vmatprep.subr.mxu0 %v1076
    %v1078 = vand.u32 %v76, 4294901760
    %1079 = vmatpush1.msra.mxu0 %v1078
    %v1080 = vand.u32 %v75, 4294901760
    %1081 = vmatprep.subr.mxu0 %v1080
    %v1082 = vand.u32 %v74, 4294901760
    %1083 = vmatpush1.msra.mxu0 %v1082
    %v1084 = vand.u32 %v73, 4294901760
    %1085 = vmatprep.subr.mxu0 %v1084
    %v1086 = vand.u32 %v72, 4294901760
    %1087 = vmatpush1.msra.mxu0 %v1086
    %v1088 = vand.u32 %v71, 4294901760
    %1089 = vmatprep.subr.mxu0 %v1088
    %v1090 = vand.u32 %v70, 4294901760
    %1091 = vmatpush1.msra.mxu0 %v1090
    %v1092 = vand.u32 %v133, 4294901760
    %1093 = vmatprep.subr.mxu0 %v1092
    %v1094 = vand.u32 %v132, 4294901760
    %1095 = vmatpush2.msra.mxu0 %v1094
    %v1096 = vand.u32 %v131, 4294901760
    %1097 = vmatprep.subr.mxu0 %v1096
    %v1098 = vand.u32 %v130, 4294901760
    %1099 = vmatpush2.msra.mxu0 %v1098
    %v1100 = vand.u32 %v129, 4294901760
    %1101 = vmatprep.subr.mxu0 %v1100
    %v1102 = vand.u32 %v128, 4294901760
    %1103 = vmatpush2.msra.mxu0 %v1102
    %v1104 = vand.u32 %v127, 4294901760
    %1105 = vmatprep.subr.mxu0 %v1104
    %v1106 = vand.u32 %v126, 4294901760
    %1107 = vmatpush2.msra.mxu0 %v1106
    %v1108 = vand.u32 %v125, 4294901760
    %1109 = vmatprep.subr.mxu0 %v1108
    %v1110 = vand.u32 %v124, 4294901760
    %1111 = vmatpush2.msra.mxu0 %v1110
    %v1112 = vand.u32 %v123, 4294901760
    %1113 = vmatprep.subr.mxu0 %v1112
    %v1114 = vand.u32 %v122, 4294901760
    %1115 = vmatpush2.msra.mxu0 %v1114
    %v1116 = vand.u32 %v121, 4294901760
    %1117 = vmatprep.subr.mxu0 %v1116
    %v1118 = vand.u32 %v120, 4294901760
    %1119 = vmatpush2.msra.mxu0 %v1118
    %v1120 = vand.u32 %v119, 4294901760
    %1121 = vmatprep.subr.mxu0 %v1120
    %v1122 = vand.u32 %v118, 4294901760
    %1123 = vmatpush2.msra.mxu0 %v1122
    %v1124 = vand.u32 %v117, 4294901760
    %1125 = vmatprep.subr.mxu0 %v1124
    %v1126 = vand.u32 %v116, 4294901760
    %1127 = vmatpush2.msra.mxu0 %v1126
    %v1128 = vand.u32 %v115, 4294901760
    %1129 = vmatprep.subr.mxu0 %v1128
    %v1130 = vand.u32 %v114, 4294901760
    %1131 = vmatpush2.msra.mxu0 %v1130
    %v1132 = vand.u32 %v113, 4294901760
    %1133 = vmatprep.subr.mxu0 %v1132
    %v1134 = vand.u32 %v112, 4294901760
    %1135 = vmatpush2.msra.mxu0 %v1134
    %v1136 = vand.u32 %v111, 4294901760
    %1137 = vmatprep.subr.mxu0 %v1136
    %v1138 = vand.u32 %v110, 4294901760
    %1139 = vmatpush2.msra.mxu0 %v1138
    %v1140 = vand.u32 %v109, 4294901760
    %1141 = vmatprep.subr.mxu0 %v1140
    %v1142 = vand.u32 %v108, 4294901760
    %1143 = vmatpush2.msra.mxu0 %v1142
    %v1144 = vand.u32 %v107, 4294901760
    %1145 = vmatprep.subr.mxu0 %v1144
    %v1146 = vand.u32 %v106, 4294901760
    %1147 = vmatpush2.msra.mxu0 %v1146
    %v1148 = vand.u32 %v105, 4294901760
    %1149 = vmatprep.subr.mxu0 %v1148
    %v1150 = vand.u32 %v104, 4294901760
    %1151 = vmatpush2.msra.mxu0 %v1150
    %v1152 = vand.u32 %v103, 4294901760
    %1153 = vmatprep.subr.mxu0 %v1152
    %v1154 = vand.u32 %v102, 4294901760
    %1155 = vmatpush2.msra.mxu0 %v1154
    %v1156 = vand.u32 %v271, 4294901760
    %v1157 = vsub.f32 %v271, %v1156
    %v1158 = vand.u32 %v1157, 4294901760
    %1159 = vmatprep.mubr.f32.mxu0 %v1158
    %v1160 = vand.u32 %v270, 4294901760
    %v1161 = vsub.f32 %v270, %v1160
    %v1162 = vand.u32 %v1161, 4294901760
    %1163 = vmatmul.mubr.f32.gmra.mxu0 %v1162
    %v1164 = vpop.f32.mrf.mxu0
    %v1165 = vadd.f32 %v1024, %v1164
    %v1166 = vpop.f32.mrf.mxu0
    %v1167 = vadd.f32 %v1026, %v1166
    %1168 = vdwg.mxu0
    %v1169 = vand.u32 %v101, 4294901760
    %v1170 = vsub.f32 %v101, %v1169
    %v1171 = vand.u32 %v1170, 4294901760
    %1172 = vmatprep.subr.mxu0 %v1171
    %v1173 = vand.u32 %v100, 4294901760
    %v1174 = vsub.f32 %v100, %v1173
    %v1175 = vand.u32 %v1174, 4294901760
    %1176 = vmatpush1.msra.mxu0 %v1175
    %v1177 = vand.u32 %v99, 4294901760
    %v1178 = vsub.f32 %v99, %v1177
    %v1179 = vand.u32 %v1178, 4294901760
    %1180 = vmatprep.subr.mxu0 %v1179
    %v1181 = vand.u32 %v98, 4294901760
    %v1182 = vsub.f32 %v98, %v1181
    %v1183 = vand.u32 %v1182, 4294901760
    %1184 = vmatpush1.msra.mxu0 %v1183
    %v1185 = vand.u32 %v97, 4294901760
    %v1186 = vsub.f32 %v97, %v1185
    %v1187 = vand.u32 %v1186, 4294901760
    %1188 = vmatprep.subr.mxu0 %v1187
    %v1189 = vand.u32 %v96, 4294901760
    %v1190 = vsub.f32 %v96, %v1189
    %v1191 = vand.u32 %v1190, 4294901760
    %1192 = vmatpush1.msra.mxu0 %v1191
    %v1193 = vand.u32 %v95, 4294901760
    %v1194 = vsub.f32 %v95, %v1193
    %v1195 = vand.u32 %v1194, 4294901760
    %1196 = vmatprep.subr.mxu0 %v1195
    %v1197 = vand.u32 %v94, 4294901760
    %v1198 = vsub.f32 %v94, %v1197
    %v1199 = vand.u32 %v1198, 4294901760
    %1200 = vmatpush1.msra.mxu0 %v1199
    %v1201 = vand.u32 %v93, 4294901760
    %v1202 = vsub.f32 %v93, %v1201
    %v1203 = vand.u32 %v1202, 4294901760
    %1204 = vmatprep.subr.mxu0 %v1203
    %v1205 = vand.u32 %v92, 4294901760
    %v1206 = vsub.f32 %v92, %v1205
    %v1207 = vand.u32 %v1206, 4294901760
    %1208 = vmatpush1.msra.mxu0 %v1207
    %v1209 = vand.u32 %v91, 4294901760
    %v1210 = vsub.f32 %v91, %v1209
    %v1211 = vand.u32 %v1210, 4294901760
    %1212 = vmatprep.subr.mxu0 %v1211
    %v1213 = vand.u32 %v90, 4294901760
    %v1214 = vsub.f32 %v90, %v1213
    %v1215 = vand.u32 %v1214, 4294901760
    %1216 = vmatpush1.msra.mxu0 %v1215
    %v1217 = vand.u32 %v89, 4294901760
    %v1218 = vsub.f32 %v89, %v1217
    %v1219 = vand.u32 %v1218, 4294901760
    %1220 = vmatprep.subr.mxu0 %v1219
    %v1221 = vand.u32 %v88, 4294901760
    %v1222 = vsub.f32 %v88, %v1221
    %v1223 = vand.u32 %v1222, 4294901760
    %1224 = vmatpush1.msra.mxu0 %v1223
    %v1225 = vand.u32 %v87, 4294901760
    %v1226 = vsub.f32 %v87, %v1225
    %v1227 = vand.u32 %v1226, 4294901760
    %1228 = vmatprep.subr.mxu0 %v1227
    %v1229 = vand.u32 %v86, 4294901760
    %v1230 = vsub.f32 %v86, %v1229
    %v1231 = vand.u32 %v1230, 4294901760
    %1232 = vmatpush1.msra.mxu0 %v1231
    %v1233 = vand.u32 %v85, 4294901760
    %v1234 = vsub.f32 %v85, %v1233
    %v1235 = vand.u32 %v1234, 4294901760
    %1236 = vmatprep.subr.mxu0 %v1235
    %v1237 = vand.u32 %v84, 4294901760
    %v1238 = vsub.f32 %v84, %v1237
    %v1239 = vand.u32 %v1238, 4294901760
    %1240 = vmatpush1.msra.mxu0 %v1239
    %v1241 = vand.u32 %v83, 4294901760
    %v1242 = vsub.f32 %v83, %v1241
    %v1243 = vand.u32 %v1242, 4294901760
    %1244 = vmatprep.subr.mxu0 %v1243
    %v1245 = vand.u32 %v82, 4294901760
    %v1246 = vsub.f32 %v82, %v1245
    %v1247 = vand.u32 %v1246, 4294901760
    %1248 = vmatpush1.msra.mxu0 %v1247
    %v1249 = vand.u32 %v81, 4294901760
    %v1250 = vsub.f32 %v81, %v1249
    %v1251 = vand.u32 %v1250, 4294901760
    %1252 = vmatprep.subr.mxu0 %v1251
    %v1253 = vand.u32 %v80, 4294901760
    %v1254 = vsub.f32 %v80, %v1253
    %v1255 = vand.u32 %v1254, 4294901760
    %1256 = vmatpush1.msra.mxu0 %v1255
    %v1257 = vand.u32 %v79, 4294901760
    %v1258 = vsub.f32 %v79, %v1257
    %v1259 = vand.u32 %v1258, 4294901760
    %1260 = vmatprep.subr.mxu0 %v1259
    %v1261 = vand.u32 %v78, 4294901760
    %v1262 = vsub.f32 %v78, %v1261
    %v1263 = vand.u32 %v1262, 4294901760
    %1264 = vmatpush1.msra.mxu0 %v1263
    %v1265 = vand.u32 %v77, 4294901760
    %v1266 = vsub.f32 %v77, %v1265
    %v1267 = vand.u32 %v1266, 4294901760
    %1268 = vmatprep.subr.mxu0 %v1267
    %v1269 = vand.u32 %v76, 4294901760
    %v1270 = vsub.f32 %v76, %v1269
    %v1271 = vand.u32 %v1270, 4294901760
    %1272 = vmatpush1.msra.mxu0 %v1271
    %v1273 = vand.u32 %v75, 4294901760
    %v1274 = vsub.f32 %v75, %v1273
    %v1275 = vand.u32 %v1274, 4294901760
    %1276 = vmatprep.subr.mxu0 %v1275
    %v1277 = vand.u32 %v74, 4294901760
    %v1278 = vsub.f32 %v74, %v1277
    %v1279 = vand.u32 %v1278, 4294901760
    %1280 = vmatpush1.msra.mxu0 %v1279
    %v1281 = vand.u32 %v73, 4294901760
    %v1282 = vsub.f32 %v73, %v1281
    %v1283 = vand.u32 %v1282, 4294901760
    %1284 = vmatprep.subr.mxu0 %v1283
    %v1285 = vand.u32 %v72, 4294901760
    %v1286 = vsub.f32 %v72, %v1285
    %v1287 = vand.u32 %v1286, 4294901760
    %1288 = vmatpush1.msra.mxu0 %v1287
    %v1289 = vand.u32 %v71, 4294901760
    %v1290 = vsub.f32 %v71, %v1289
    %v1291 = vand.u32 %v1290, 4294901760
    %1292 = vmatprep.subr.mxu0 %v1291
    %v1293 = vand.u32 %v70, 4294901760
    %v1294 = vsub.f32 %v70, %v1293
    %v1295 = vand.u32 %v1294, 4294901760
    %1296 = vmatpush1.msra.mxu0 %v1295
    %v1297 = vand.u32 %v133, 4294901760
    %v1298 = vsub.f32 %v133, %v1297
    %v1299 = vand.u32 %v1298, 4294901760
    %1300 = vmatprep.subr.mxu0 %v1299
    %v1301 = vand.u32 %v132, 4294901760
    %v1302 = vsub.f32 %v132, %v1301
    %v1303 = vand.u32 %v1302, 4294901760
    %1304 = vmatpush2.msra.mxu0 %v1303
    %v1305 = vand.u32 %v131, 4294901760
    %v1306 = vsub.f32 %v131, %v1305
    %v1307 = vand.u32 %v1306, 4294901760
    %1308 = vmatprep.subr.mxu0 %v1307
    %v1309 = vand.u32 %v130, 4294901760
    %v1310 = vsub.f32 %v130, %v1309
    %v1311 = vand.u32 %v1310, 4294901760
    %1312 = vmatpush2.msra.mxu0 %v1311
    %v1313 = vand.u32 %v129, 4294901760
    %v1314 = vsub.f32 %v129, %v1313
    %v1315 = vand.u32 %v1314, 4294901760
    %1316 = vmatprep.subr.mxu0 %v1315
    %v1317 = vand.u32 %v128, 4294901760
    %v1318 = vsub.f32 %v128, %v1317
    %v1319 = vand.u32 %v1318, 4294901760
    %1320 = vmatpush2.msra.mxu0 %v1319
    %v1321 = vand.u32 %v127, 4294901760
    %v1322 = vsub.f32 %v127, %v1321
    %v1323 = vand.u32 %v1322, 4294901760
    %1324 = vmatprep.subr.mxu0 %v1323
    %v1325 = vand.u32 %v126, 4294901760
    %v1326 = vsub.f32 %v126, %v1325
    %v1327 = vand.u32 %v1326, 4294901760
    %1328 = vmatpush2.msra.mxu0 %v1327
    %v1329 = vand.u32 %v125, 4294901760
    %v1330 = vsub.f32 %v125, %v1329
    %v1331 = vand.u32 %v1330, 4294901760
    %1332 = vmatprep.subr.mxu0 %v1331
    %v1333 = vand.u32 %v124, 4294901760
    %v1334 = vsub.f32 %v124, %v1333
    %v1335 = vand.u32 %v1334, 4294901760
    %1336 = vmatpush2.msra.mxu0 %v1335
    %v1337 = vand.u32 %v123, 4294901760
    %v1338 = vsub.f32 %v123, %v1337
    %v1339 = vand.u32 %v1338, 4294901760
    %1340 = vmatprep.subr.mxu0 %v1339
    %v1341 = vand.u32 %v122, 4294901760
    %v1342 = vsub.f32 %v122, %v1341
    %v1343 = vand.u32 %v1342, 4294901760
    %1344 = vmatpush2.msra.mxu0 %v1343
    %v1345 = vand.u32 %v121, 4294901760
    %v1346 = vsub.f32 %v121, %v1345
    %v1347 = vand.u32 %v1346, 4294901760
    %1348 = vmatprep.subr.mxu0 %v1347
    %v1349 = vand.u32 %v120, 4294901760
    %v1350 = vsub.f32 %v120, %v1349
    %v1351 = vand.u32 %v1350, 4294901760
    %1352 = vmatpush2.msra.mxu0 %v1351
    %v1353 = vand.u32 %v119, 4294901760
    %v1354 = vsub.f32 %v119, %v1353
    %v1355 = vand.u32 %v1354, 4294901760
    %1356 = vmatprep.subr.mxu0 %v1355
    %v1357 = vand.u32 %v118, 4294901760
    %v1358 = vsub.f32 %v118, %v1357
    %v1359 = vand.u32 %v1358, 4294901760
    %1360 = vmatpush2.msra.mxu0 %v1359
    %v1361 = vand.u32 %v117, 4294901760
    %v1362 = vsub.f32 %v117, %v1361
    %v1363 = vand.u32 %v1362, 4294901760
    %1364 = vmatprep.subr.mxu0 %v1363
    %v1365 = vand.u32 %v116, 4294901760
    %v1366 = vsub.f32 %v116, %v1365
    %v1367 = vand.u32 %v1366, 4294901760
    %1368 = vmatpush2.msra.mxu0 %v1367
    %v1369 = vand.u32 %v115, 4294901760
    %v1370 = vsub.f32 %v115, %v1369
    %v1371 = vand.u32 %v1370, 4294901760
    %1372 = vmatprep.subr.mxu0 %v1371
    %v1373 = vand.u32 %v114, 4294901760
    %v1374 = vsub.f32 %v114, %v1373
    %v1375 = vand.u32 %v1374, 4294901760
    %1376 = vmatpush2.msra.mxu0 %v1375
    %v1377 = vand.u32 %v113, 4294901760
    %v1378 = vsub.f32 %v113, %v1377
    %v1379 = vand.u32 %v1378, 4294901760
    %1380 = vmatprep.subr.mxu0 %v1379
    %v1381 = vand.u32 %v112, 4294901760
    %v1382 = vsub.f32 %v112, %v1381
    %v1383 = vand.u32 %v1382, 4294901760
    %1384 = vmatpush2.msra.mxu0 %v1383
    %v1385 = vand.u32 %v111, 4294901760
    %v1386 = vsub.f32 %v111, %v1385
    %v1387 = vand.u32 %v1386, 4294901760
    %1388 = vmatprep.subr.mxu0 %v1387
    %v1389 = vand.u32 %v110, 4294901760
    %v1390 = vsub.f32 %v110, %v1389
    %v1391 = vand.u32 %v1390, 4294901760
    %1392 = vmatpush2.msra.mxu0 %v1391
    %v1393 = vand.u32 %v109, 4294901760
    %v1394 = vsub.f32 %v109, %v1393
    %v1395 = vand.u32 %v1394, 4294901760
    %1396 = vmatprep.subr.mxu0 %v1395
    %v1397 = vand.u32 %v108, 4294901760
    %v1398 = vsub.f32 %v108, %v1397
    %v1399 = vand.u32 %v1398, 4294901760
    %1400 = vmatpush2.msra.mxu0 %v1399
    %v1401 = vand.u32 %v107, 4294901760
    %v1402 = vsub.f32 %v107, %v1401
    %v1403 = vand.u32 %v1402, 4294901760
    %1404 = vmatprep.subr.mxu0 %v1403
    %v1405 = vand.u32 %v106, 4294901760
    %v1406 = vsub.f32 %v106, %v1405
    %v1407 = vand.u32 %v1406, 4294901760
    %1408 = vmatpush2.msra.mxu0 %v1407
    %v1409 = vand.u32 %v105, 4294901760
    %v1410 = vsub.f32 %v105, %v1409
    %v1411 = vand.u32 %v1410, 4294901760
    %1412 = vmatprep.subr.mxu0 %v1411
    %v1413 = vand.u32 %v104, 4294901760
    %v1414 = vsub.f32 %v104, %v1413
    %v1415 = vand.u32 %v1414, 4294901760
    %1416 = vmatpush2.msra.mxu0 %v1415
    %v1417 = vand.u32 %v103, 4294901760
    %v1418 = vsub.f32 %v103, %v1417
    %v1419 = vand.u32 %v1418, 4294901760
    %1420 = vmatprep.subr.mxu0 %v1419
    %v1421 = vand.u32 %v102, 4294901760
    %v1422 = vsub.f32 %v102, %v1421
    %v1423 = vand.u32 %v1422, 4294901760
    %1424 = vmatpush2.msra.mxu0 %v1423
    %v1425 = vand.u32 %v271, 4294901760
    %1426 = vmatprep.mubr.f32.mxu0 %v1425
    %v1427 = vand.u32 %v270, 4294901760
    %1428 = vmatmul.mubr.f32.gmra.mxu0 %v1427
    %v1429 = vpop.f32.mrf.mxu0
    %v1430 = vadd.f32 %v1165, %v1429
    %v1431 = vpop.f32.mrf.mxu0
    %v1432 = vadd.f32 %v1167, %v1431
    %1433 = vdwg.mxu0
    %v1434 = vand.u32 %v101, 4294901760
    %1435 = vmatprep.subr.mxu0 %v1434
    %v1436 = vand.u32 %v100, 4294901760
    %1437 = vmatpush1.msra.mxu0 %v1436
    %v1438 = vand.u32 %v99, 4294901760
    %1439 = vmatprep.subr.mxu0 %v1438
    %v1440 = vand.u32 %v98, 4294901760
    %1441 = vmatpush1.msra.mxu0 %v1440
    %v1442 = vand.u32 %v97, 4294901760
    %1443 = vmatprep.subr.mxu0 %v1442
    %v1444 = vand.u32 %v96, 4294901760
    %1445 = vmatpush1.msra.mxu0 %v1444
    %v1446 = vand.u32 %v95, 4294901760
    %1447 = vmatprep.subr.mxu0 %v1446
    %v1448 = vand.u32 %v94, 4294901760
    %1449 = vmatpush1.msra.mxu0 %v1448
    %v1450 = vand.u32 %v93, 4294901760
    %1451 = vmatprep.subr.mxu0 %v1450
    %v1452 = vand.u32 %v92, 4294901760
    %1453 = vmatpush1.msra.mxu0 %v1452
    %v1454 = vand.u32 %v91, 4294901760
    %1455 = vmatprep.subr.mxu0 %v1454
    %v1456 = vand.u32 %v90, 4294901760
    %1457 = vmatpush1.msra.mxu0 %v1456
    %v1458 = vand.u32 %v89, 4294901760
    %1459 = vmatprep.subr.mxu0 %v1458
    %v1460 = vand.u32 %v88, 4294901760
    %1461 = vmatpush1.msra.mxu0 %v1460
    %v1462 = vand.u32 %v87, 4294901760
    %1463 = vmatprep.subr.mxu0 %v1462
    %v1464 = vand.u32 %v86, 4294901760
    %1465 = vmatpush1.msra.mxu0 %v1464
    %v1466 = vand.u32 %v85, 4294901760
    %1467 = vmatprep.subr.mxu0 %v1466
    %v1468 = vand.u32 %v84, 4294901760
    %1469 = vmatpush1.msra.mxu0 %v1468
    %v1470 = vand.u32 %v83, 4294901760
    %1471 = vmatprep.subr.mxu0 %v1470
    %v1472 = vand.u32 %v82, 4294901760
    %1473 = vmatpush1.msra.mxu0 %v1472
    %v1474 = vand.u32 %v81, 4294901760
    %1475 = vmatprep.subr.mxu0 %v1474
    %v1476 = vand.u32 %v80, 4294901760
    %1477 = vmatpush1.msra.mxu0 %v1476
    %v1478 = vand.u32 %v79, 4294901760
    %1479 = vmatprep.subr.mxu0 %v1478
    %v1480 = vand.u32 %v78, 4294901760
    %1481 = vmatpush1.msra.mxu0 %v1480
    %v1482 = vand.u32 %v77, 4294901760
    %1483 = vmatprep.subr.mxu0 %v1482
    %v1484 = vand.u32 %v76, 4294901760
    %1485 = vmatpush1.msra.mxu0 %v1484
    %v1486 = vand.u32 %v75, 4294901760
    %1487 = vmatprep.subr.mxu0 %v1486
    %v1488 = vand.u32 %v74, 4294901760
    %1489 = vmatpush1.msra.mxu0 %v1488
    %v1490 = vand.u32 %v73, 4294901760
    %1491 = vmatprep.subr.mxu0 %v1490
    %v1492 = vand.u32 %v72, 4294901760
    %1493 = vmatpush1.msra.mxu0 %v1492
    %v1494 = vand.u32 %v71, 4294901760
    %1495 = vmatprep.subr.mxu0 %v1494
    %v1496 = vand.u32 %v70, 4294901760
    %1497 = vmatpush1.msra.mxu0 %v1496
    %v1498 = vand.u32 %v133, 4294901760
    %1499 = vmatprep.subr.mxu0 %v1498
    %v1500 = vand.u32 %v132, 4294901760
    %1501 = vmatpush2.msra.mxu0 %v1500
    %v1502 = vand.u32 %v131, 4294901760
    %1503 = vmatprep.subr.mxu0 %v1502
    %v1504 = vand.u32 %v130, 4294901760
    %1505 = vmatpush2.msra.mxu0 %v1504
    %v1506 = vand.u32 %v129, 4294901760
    %1507 = vmatprep.subr.mxu0 %v1506
    %v1508 = vand.u32 %v128, 4294901760
    %1509 = vmatpush2.msra.mxu0 %v1508
    %v1510 = vand.u32 %v127, 4294901760
    %1511 = vmatprep.subr.mxu0 %v1510
    %v1512 = vand.u32 %v126, 4294901760
    %1513 = vmatpush2.msra.mxu0 %v1512
    %v1514 = vand.u32 %v125, 4294901760
    %1515 = vmatprep.subr.mxu0 %v1514
    %v1516 = vand.u32 %v124, 4294901760
    %1517 = vmatpush2.msra.mxu0 %v1516
    %v1518 = vand.u32 %v123, 4294901760
    %1519 = vmatprep.subr.mxu0 %v1518
    %v1520 = vand.u32 %v122, 4294901760
    %1521 = vmatpush2.msra.mxu0 %v1520
    %v1522 = vand.u32 %v121, 4294901760
    %1523 = vmatprep.subr.mxu0 %v1522
    %v1524 = vand.u32 %v120, 4294901760
    %1525 = vmatpush2.msra.mxu0 %v1524
    %v1526 = vand.u32 %v119, 4294901760
    %1527 = vmatprep.subr.mxu0 %v1526
    %v1528 = vand.u32 %v118, 4294901760
    %1529 = vmatpush2.msra.mxu0 %v1528
    %v1530 = vand.u32 %v117, 4294901760
    %1531 = vmatprep.subr.mxu0 %v1530
    %v1532 = vand.u32 %v116, 4294901760
    %1533 = vmatpush2.msra.mxu0 %v1532
    %v1534 = vand.u32 %v115, 4294901760
    %1535 = vmatprep.subr.mxu0 %v1534
    %v1536 = vand.u32 %v114, 4294901760
    %1537 = vmatpush2.msra.mxu0 %v1536
    %v1538 = vand.u32 %v113, 4294901760
    %1539 = vmatprep.subr.mxu0 %v1538
    %v1540 = vand.u32 %v112, 4294901760
    %1541 = vmatpush2.msra.mxu0 %v1540
    %v1542 = vand.u32 %v111, 4294901760
    %1543 = vmatprep.subr.mxu0 %v1542
    %v1544 = vand.u32 %v110, 4294901760
    %1545 = vmatpush2.msra.mxu0 %v1544
    %v1546 = vand.u32 %v109, 4294901760
    %1547 = vmatprep.subr.mxu0 %v1546
    %v1548 = vand.u32 %v108, 4294901760
    %1549 = vmatpush2.msra.mxu0 %v1548
    %v1550 = vand.u32 %v107, 4294901760
    %1551 = vmatprep.subr.mxu0 %v1550
    %v1552 = vand.u32 %v106, 4294901760
    %1553 = vmatpush2.msra.mxu0 %v1552
    %v1554 = vand.u32 %v105, 4294901760
    %1555 = vmatprep.subr.mxu0 %v1554
    %v1556 = vand.u32 %v104, 4294901760
    %1557 = vmatpush2.msra.mxu0 %v1556
    %v1558 = vand.u32 %v103, 4294901760
    %1559 = vmatprep.subr.mxu0 %v1558
    %v1560 = vand.u32 %v102, 4294901760
    %1561 = vmatpush2.msra.mxu0 %v1560
    %v1562 = vand.u32 %v271, 4294901760
    %1563 = vmatprep.mubr.f32.mxu0 %v1562
    %v1564 = vand.u32 %v270, 4294901760
    %1565 = vmatmul.mubr.f32.gmra.mxu0 %v1564
    %v1566 = vpop.f32.mrf.mxu0
    %v1567 = vadd.f32 %v1430, %v1566
    %v1568 = vpop.f32.mrf.mxu0
    %v1569 = vadd.f32 %v1432, %v1568
    %1570 = vdwg.mxu0
    %v1571 = vand.u32 %v165, 4294901760
    %1572 = vmatprep.subr.mxu0 %v1571
    %v1573 = vand.u32 %v164, 4294901760
    %1574 = vmatpush1.msra.mxu0 %v1573
    %v1575 = vand.u32 %v163, 4294901760
    %1576 = vmatprep.subr.mxu0 %v1575
    %v1577 = vand.u32 %v162, 4294901760
    %1578 = vmatpush1.msra.mxu0 %v1577
    %v1579 = vand.u32 %v161, 4294901760
    %1580 = vmatprep.subr.mxu0 %v1579
    %v1581 = vand.u32 %v160, 4294901760
    %1582 = vmatpush1.msra.mxu0 %v1581
    %v1583 = vand.u32 %v159, 4294901760
    %1584 = vmatprep.subr.mxu0 %v1583
    %v1585 = vand.u32 %v158, 4294901760
    %1586 = vmatpush1.msra.mxu0 %v1585
    %v1587 = vand.u32 %v157, 4294901760
    %1588 = vmatprep.subr.mxu0 %v1587
    %v1589 = vand.u32 %v156, 4294901760
    %1590 = vmatpush1.msra.mxu0 %v1589
    %v1591 = vand.u32 %v155, 4294901760
    %1592 = vmatprep.subr.mxu0 %v1591
    %v1593 = vand.u32 %v154, 4294901760
    %1594 = vmatpush1.msra.mxu0 %v1593
    %v1595 = vand.u32 %v153, 4294901760
    %1596 = vmatprep.subr.mxu0 %v1595
    %v1597 = vand.u32 %v152, 4294901760
    %1598 = vmatpush1.msra.mxu0 %v1597
    %v1599 = vand.u32 %v151, 4294901760
    %1600 = vmatprep.subr.mxu0 %v1599
    %v1601 = vand.u32 %v150, 4294901760
    %1602 = vmatpush1.msra.mxu0 %v1601
    %v1603 = vand.u32 %v149, 4294901760
    %1604 = vmatprep.subr.mxu0 %v1603
    %v1605 = vand.u32 %v148, 4294901760
    %1606 = vmatpush1.msra.mxu0 %v1605
    %v1607 = vand.u32 %v147, 4294901760
    %1608 = vmatprep.subr.mxu0 %v1607
    %v1609 = vand.u32 %v146, 4294901760
    %1610 = vmatpush1.msra.mxu0 %v1609
    %v1611 = vand.u32 %v145, 4294901760
    %1612 = vmatprep.subr.mxu0 %v1611
    %v1613 = vand.u32 %v144, 4294901760
    %1614 = vmatpush1.msra.mxu0 %v1613
    %v1615 = vand.u32 %v143, 4294901760
    %1616 = vmatprep.subr.mxu0 %v1615
    %v1617 = vand.u32 %v142, 4294901760
    %1618 = vmatpush1.msra.mxu0 %v1617
    %v1619 = vand.u32 %v141, 4294901760
    %1620 = vmatprep.subr.mxu0 %v1619
    %v1621 = vand.u32 %v140, 4294901760
    %1622 = vmatpush1.msra.mxu0 %v1621
    %v1623 = vand.u32 %v139, 4294901760
    %1624 = vmatprep.subr.mxu0 %v1623
    %v1625 = vand.u32 %v138, 4294901760
    %1626 = vmatpush1.msra.mxu0 %v1625
    %v1627 = vand.u32 %v137, 4294901760
    %1628 = vmatprep.subr.mxu0 %v1627
    %v1629 = vand.u32 %v136, 4294901760
    %1630 = vmatpush1.msra.mxu0 %v1629
    %v1631 = vand.u32 %v135, 4294901760
    %1632 = vmatprep.subr.mxu0 %v1631
    %v1633 = vand.u32 %v134, 4294901760
    %1634 = vmatpush1.msra.mxu0 %v1633
    %v1635 = vand.u32 %v197, 4294901760
    %1636 = vmatprep.subr.mxu0 %v1635
    %v1637 = vand.u32 %v196, 4294901760
    %1638 = vmatpush2.msra.mxu0 %v1637
    %v1639 = vand.u32 %v195, 4294901760
    %1640 = vmatprep.subr.mxu0 %v1639
    %v1641 = vand.u32 %v194, 4294901760
    %1642 = vmatpush2.msra.mxu0 %v1641
    %v1643 = vand.u32 %v193, 4294901760
    %1644 = vmatprep.subr.mxu0 %v1643
    %v1645 = vand.u32 %v192, 4294901760
    %1646 = vmatpush2.msra.mxu0 %v1645
    %v1647 = vand.u32 %v191, 4294901760
    %1648 = vmatprep.subr.mxu0 %v1647
    %v1649 = vand.u32 %v190, 4294901760
    %1650 = vmatpush2.msra.mxu0 %v1649
    %v1651 = vand.u32 %v189, 4294901760
    %1652 = vmatprep.subr.mxu0 %v1651
    %v1653 = vand.u32 %v188, 4294901760
    %1654 = vmatpush2.msra.mxu0 %v1653
    %v1655 = vand.u32 %v187, 4294901760
    %1656 = vmatprep.subr.mxu0 %v1655
    %v1657 = vand.u32 %v186, 4294901760
    %1658 = vmatpush2.msra.mxu0 %v1657
    %v1659 = vand.u32 %v185, 4294901760
    %1660 = vmatprep.subr.mxu0 %v1659
    %v1661 = vand.u32 %v184, 4294901760
    %1662 = vmatpush2.msra.mxu0 %v1661
    %v1663 = vand.u32 %v183, 4294901760
    %1664 = vmatprep.subr.mxu0 %v1663
    %v1665 = vand.u32 %v182, 4294901760
    %1666 = vmatpush2.msra.mxu0 %v1665
    %v1667 = vand.u32 %v181, 4294901760
    %1668 = vmatprep.subr.mxu0 %v1667
    %v1669 = vand.u32 %v180, 4294901760
    %1670 = vmatpush2.msra.mxu0 %v1669
    %v1671 = vand.u32 %v179, 4294901760
    %1672 = vmatprep.subr.mxu0 %v1671
    %v1673 = vand.u32 %v178, 4294901760
    %1674 = vmatpush2.msra.mxu0 %v1673
    %v1675 = vand.u32 %v177, 4294901760
    %1676 = vmatprep.subr.mxu0 %v1675
    %v1677 = vand.u32 %v176, 4294901760
    %1678 = vmatpush2.msra.mxu0 %v1677
    %v1679 = vand.u32 %v175, 4294901760
    %1680 = vmatprep.subr.mxu0 %v1679
    %v1681 = vand.u32 %v174, 4294901760
    %1682 = vmatpush2.msra.mxu0 %v1681
    %v1683 = vand.u32 %v173, 4294901760
    %1684 = vmatprep.subr.mxu0 %v1683
    %v1685 = vand.u32 %v172, 4294901760
    %1686 = vmatpush2.msra.mxu0 %v1685
    %v1687 = vand.u32 %v171, 4294901760
    %1688 = vmatprep.subr.mxu0 %v1687
    %v1689 = vand.u32 %v170, 4294901760
    %1690 = vmatpush2.msra.mxu0 %v1689
    %v1691 = vand.u32 %v169, 4294901760
    %1692 = vmatprep.subr.mxu0 %v1691
    %v1693 = vand.u32 %v168, 4294901760
    %1694 = vmatpush2.msra.mxu0 %v1693
    %v1695 = vand.u32 %v167, 4294901760
    %1696 = vmatprep.subr.mxu0 %v1695
    %v1697 = vand.u32 %v166, 4294901760
    %1698 = vmatpush2.msra.mxu0 %v1697
    %v1699 = vand.u32 %v285, 4294901760
    %v1700 = vsub.f32 %v285, %v1699
    %v1701 = vand.u32 %v1700, 4294901760
    %v1702 = vsub.f32 %v1700, %v1701
    %v1703 = vand.u32 %v1702, 4294901760
    %1704 = vmatprep.mubr.f32.mxu0 %v1703
    %v1705 = vand.u32 %v278, 4294901760
    %v1706 = vsub.f32 %v278, %v1705
    %v1707 = vand.u32 %v1706, 4294901760
    %v1708 = vsub.f32 %v1706, %v1707
    %v1709 = vand.u32 %v1708, 4294901760
    %1710 = vmatmul.mubr.f32.gmra.mxu0 %v1709
    %v1711 = vpop.f32.mrf.mxu0
    %v1712 = vadd.f32 %v1567, %v1711
    %v1713 = vpop.f32.mrf.mxu0
    %v1714 = vadd.f32 %v1569, %v1713
    %1715 = vdwg.mxu0
    %v1716 = vand.u32 %v165, 4294901760
    %v1717 = vsub.f32 %v165, %v1716
    %v1718 = vand.u32 %v1717, 4294901760
    %v1719 = vsub.f32 %v1717, %v1718
    %v1720 = vand.u32 %v1719, 4294901760
    %1721 = vmatprep.subr.mxu0 %v1720
    %v1722 = vand.u32 %v164, 4294901760
    %v1723 = vsub.f32 %v164, %v1722
    %v1724 = vand.u32 %v1723, 4294901760
    %v1725 = vsub.f32 %v1723, %v1724
    %v1726 = vand.u32 %v1725, 4294901760
    %1727 = vmatpush1.msra.mxu0 %v1726
    %v1728 = vand.u32 %v163, 4294901760
    %v1729 = vsub.f32 %v163, %v1728
    %v1730 = vand.u32 %v1729, 4294901760
    %v1731 = vsub.f32 %v1729, %v1730
    %v1732 = vand.u32 %v1731, 4294901760
    %1733 = vmatprep.subr.mxu0 %v1732
    %v1734 = vand.u32 %v162, 4294901760
    %v1735 = vsub.f32 %v162, %v1734
    %v1736 = vand.u32 %v1735, 4294901760
    %v1737 = vsub.f32 %v1735, %v1736
    %v1738 = vand.u32 %v1737, 4294901760
    %1739 = vmatpush1.msra.mxu0 %v1738
    %v1740 = vand.u32 %v161, 4294901760
    %v1741 = vsub.f32 %v161, %v1740
    %v1742 = vand.u32 %v1741, 4294901760
    %v1743 = vsub.f32 %v1741, %v1742
    %v1744 = vand.u32 %v1743, 4294901760
    %1745 = vmatprep.subr.mxu0 %v1744
    %v1746 = vand.u32 %v160, 4294901760
    %v1747 = vsub.f32 %v160, %v1746
    %v1748 = vand.u32 %v1747, 4294901760
    %v1749 = vsub.f32 %v1747, %v1748
    %v1750 = vand.u32 %v1749, 4294901760
    %1751 = vmatpush1.msra.mxu0 %v1750
    %v1752 = vand.u32 %v159, 4294901760
    %v1753 = vsub.f32 %v159, %v1752
    %v1754 = vand.u32 %v1753, 4294901760
    %v1755 = vsub.f32 %v1753, %v1754
    %v1756 = vand.u32 %v1755, 4294901760
    %1757 = vmatprep.subr.mxu0 %v1756
    %v1758 = vand.u32 %v158, 4294901760
    %v1759 = vsub.f32 %v158, %v1758
    %v1760 = vand.u32 %v1759, 4294901760
    %v1761 = vsub.f32 %v1759, %v1760
    %v1762 = vand.u32 %v1761, 4294901760
    %1763 = vmatpush1.msra.mxu0 %v1762
    %v1764 = vand.u32 %v157, 4294901760
    %v1765 = vsub.f32 %v157, %v1764
    %v1766 = vand.u32 %v1765, 4294901760
    %v1767 = vsub.f32 %v1765, %v1766
    %v1768 = vand.u32 %v1767, 4294901760
    %1769 = vmatprep.subr.mxu0 %v1768
    %v1770 = vand.u32 %v156, 4294901760
    %v1771 = vsub.f32 %v156, %v1770
    %v1772 = vand.u32 %v1771, 4294901760
    %v1773 = vsub.f32 %v1771, %v1772
    %v1774 = vand.u32 %v1773, 4294901760
    %1775 = vmatpush1.msra.mxu0 %v1774
    %v1776 = vand.u32 %v155, 4294901760
    %v1777 = vsub.f32 %v155, %v1776
    %v1778 = vand.u32 %v1777, 4294901760
    %v1779 = vsub.f32 %v1777, %v1778
    %v1780 = vand.u32 %v1779, 4294901760
    %1781 = vmatprep.subr.mxu0 %v1780
    %v1782 = vand.u32 %v154, 4294901760
    %v1783 = vsub.f32 %v154, %v1782
    %v1784 = vand.u32 %v1783, 4294901760
    %v1785 = vsub.f32 %v1783, %v1784
    %v1786 = vand.u32 %v1785, 4294901760
    %1787 = vmatpush1.msra.mxu0 %v1786
    %v1788 = vand.u32 %v153, 4294901760
    %v1789 = vsub.f32 %v153, %v1788
    %v1790 = vand.u32 %v1789, 4294901760
    %v1791 = vsub.f32 %v1789, %v1790
    %v1792 = vand.u32 %v1791, 4294901760
    %1793 = vmatprep.subr.mxu0 %v1792
    %v1794 = vand.u32 %v152, 4294901760
    %v1795 = vsub.f32 %v152, %v1794
    %v1796 = vand.u32 %v1795, 4294901760
    %v1797 = vsub.f32 %v1795, %v1796
    %v1798 = vand.u32 %v1797, 4294901760
    %1799 = vmatpush1.msra.mxu0 %v1798
    %v1800 = vand.u32 %v151, 4294901760
    %v1801 = vsub.f32 %v151, %v1800
    %v1802 = vand.u32 %v1801, 4294901760
    %v1803 = vsub.f32 %v1801, %v1802
    %v1804 = vand.u32 %v1803, 4294901760
    %1805 = vmatprep.subr.mxu0 %v1804
    %v1806 = vand.u32 %v150, 4294901760
    %v1807 = vsub.f32 %v150, %v1806
    %v1808 = vand.u32 %v1807, 4294901760
    %v1809 = vsub.f32 %v1807, %v1808
    %v1810 = vand.u32 %v1809, 4294901760
    %1811 = vmatpush1.msra.mxu0 %v1810
    %v1812 = vand.u32 %v149, 4294901760
    %v1813 = vsub.f32 %v149, %v1812
    %v1814 = vand.u32 %v1813, 4294901760
    %v1815 = vsub.f32 %v1813, %v1814
    %v1816 = vand.u32 %v1815, 4294901760
    %1817 = vmatprep.subr.mxu0 %v1816
    %v1818 = vand.u32 %v148, 4294901760
    %v1819 = vsub.f32 %v148, %v1818
    %v1820 = vand.u32 %v1819, 4294901760
    %v1821 = vsub.f32 %v1819, %v1820
    %v1822 = vand.u32 %v1821, 4294901760
    %1823 = vmatpush1.msra.mxu0 %v1822
    %v1824 = vand.u32 %v147, 4294901760
    %v1825 = vsub.f32 %v147, %v1824
    %v1826 = vand.u32 %v1825, 4294901760
    %v1827 = vsub.f32 %v1825, %v1826
    %v1828 = vand.u32 %v1827, 4294901760
    %1829 = vmatprep.subr.mxu0 %v1828
    %v1830 = vand.u32 %v146, 4294901760
    %v1831 = vsub.f32 %v146, %v1830
    %v1832 = vand.u32 %v1831, 4294901760
    %v1833 = vsub.f32 %v1831, %v1832
    %v1834 = vand.u32 %v1833, 4294901760
    %1835 = vmatpush1.msra.mxu0 %v1834
    %v1836 = vand.u32 %v145, 4294901760
    %v1837 = vsub.f32 %v145, %v1836
    %v1838 = vand.u32 %v1837, 4294901760
    %v1839 = vsub.f32 %v1837, %v1838
    %v1840 = vand.u32 %v1839, 4294901760
    %1841 = vmatprep.subr.mxu0 %v1840
    %v1842 = vand.u32 %v144, 4294901760
    %v1843 = vsub.f32 %v144, %v1842
    %v1844 = vand.u32 %v1843, 4294901760
    %v1845 = vsub.f32 %v1843, %v1844
    %v1846 = vand.u32 %v1845, 4294901760
    %1847 = vmatpush1.msra.mxu0 %v1846
    %v1848 = vand.u32 %v143, 4294901760
    %v1849 = vsub.f32 %v143, %v1848
    %v1850 = vand.u32 %v1849, 4294901760
    %v1851 = vsub.f32 %v1849, %v1850
    %v1852 = vand.u32 %v1851, 4294901760
    %1853 = vmatprep.subr.mxu0 %v1852
    %v1854 = vand.u32 %v142, 4294901760
    %v1855 = vsub.f32 %v142, %v1854
    %v1856 = vand.u32 %v1855, 4294901760
    %v1857 = vsub.f32 %v1855, %v1856
    %v1858 = vand.u32 %v1857, 4294901760
    %1859 = vmatpush1.msra.mxu0 %v1858
    %v1860 = vand.u32 %v141, 4294901760
    %v1861 = vsub.f32 %v141, %v1860
    %v1862 = vand.u32 %v1861, 4294901760
    %v1863 = vsub.f32 %v1861, %v1862
    %v1864 = vand.u32 %v1863, 4294901760
    %1865 = vmatprep.subr.mxu0 %v1864
    %v1866 = vand.u32 %v140, 4294901760
    %v1867 = vsub.f32 %v140, %v1866
    %v1868 = vand.u32 %v1867, 4294901760
    %v1869 = vsub.f32 %v1867, %v1868
    %v1870 = vand.u32 %v1869, 4294901760
    %1871 = vmatpush1.msra.mxu0 %v1870
    %v1872 = vand.u32 %v139, 4294901760
    %v1873 = vsub.f32 %v139, %v1872
    %v1874 = vand.u32 %v1873, 4294901760
    %v1875 = vsub.f32 %v1873, %v1874
    %v1876 = vand.u32 %v1875, 4294901760
    %1877 = vmatprep.subr.mxu0 %v1876
    %v1878 = vand.u32 %v138, 4294901760
    %v1879 = vsub.f32 %v138, %v1878
    %v1880 = vand.u32 %v1879, 4294901760
    %v1881 = vsub.f32 %v1879, %v1880
    %v1882 = vand.u32 %v1881, 4294901760
    %1883 = vmatpush1.msra.mxu0 %v1882
    %v1884 = vand.u32 %v137, 4294901760
    %v1885 = vsub.f32 %v137, %v1884
    %v1886 = vand.u32 %v1885, 4294901760
    %v1887 = vsub.f32 %v1885, %v1886
    %v1888 = vand.u32 %v1887, 4294901760
    %1889 = vmatprep.subr.mxu0 %v1888
    %v1890 = vand.u32 %v136, 4294901760
    %v1891 = vsub.f32 %v136, %v1890
    %v1892 = vand.u32 %v1891, 4294901760
    %v1893 = vsub.f32 %v1891, %v1892
    %v1894 = vand.u32 %v1893, 4294901760
    %1895 = vmatpush1.msra.mxu0 %v1894
    %v1896 = vand.u32 %v135, 4294901760
    %v1897 = vsub.f32 %v135, %v1896
    %v1898 = vand.u32 %v1897, 4294901760
    %v1899 = vsub.f32 %v1897, %v1898
    %v1900 = vand.u32 %v1899, 4294901760
    %1901 = vmatprep.subr.mxu0 %v1900
    %v1902 = vand.u32 %v134, 4294901760
    %v1903 = vsub.f32 %v134, %v1902
    %v1904 = vand.u32 %v1903, 4294901760
    %v1905 = vsub.f32 %v1903, %v1904
    %v1906 = vand.u32 %v1905, 4294901760
    %1907 = vmatpush1.msra.mxu0 %v1906
    %v1908 = vand.u32 %v197, 4294901760
    %v1909 = vsub.f32 %v197, %v1908
    %v1910 = vand.u32 %v1909, 4294901760
    %v1911 = vsub.f32 %v1909, %v1910
    %v1912 = vand.u32 %v1911, 4294901760
    %1913 = vmatprep.subr.mxu0 %v1912
    %v1914 = vand.u32 %v196, 4294901760
    %v1915 = vsub.f32 %v196, %v1914
    %v1916 = vand.u32 %v1915, 4294901760
    %v1917 = vsub.f32 %v1915, %v1916
    %v1918 = vand.u32 %v1917, 4294901760
    %1919 = vmatpush2.msra.mxu0 %v1918
    %v1920 = vand.u32 %v195, 4294901760
    %v1921 = vsub.f32 %v195, %v1920
    %v1922 = vand.u32 %v1921, 4294901760
    %v1923 = vsub.f32 %v1921, %v1922
    %v1924 = vand.u32 %v1923, 4294901760
    %1925 = vmatprep.subr.mxu0 %v1924
    %v1926 = vand.u32 %v194, 4294901760
    %v1927 = vsub.f32 %v194, %v1926
    %v1928 = vand.u32 %v1927, 4294901760
    %v1929 = vsub.f32 %v1927, %v1928
    %v1930 = vand.u32 %v1929, 4294901760
    %1931 = vmatpush2.msra.mxu0 %v1930
    %v1932 = vand.u32 %v193, 4294901760
    %v1933 = vsub.f32 %v193, %v1932
    %v1934 = vand.u32 %v1933, 4294901760
    %v1935 = vsub.f32 %v1933, %v1934
    %v1936 = vand.u32 %v1935, 4294901760
    %1937 = vmatprep.subr.mxu0 %v1936
    %v1938 = vand.u32 %v192, 4294901760
    %v1939 = vsub.f32 %v192, %v1938
    %v1940 = vand.u32 %v1939, 4294901760
    %v1941 = vsub.f32 %v1939, %v1940
    %v1942 = vand.u32 %v1941, 4294901760
    %1943 = vmatpush2.msra.mxu0 %v1942
    %v1944 = vand.u32 %v191, 4294901760
    %v1945 = vsub.f32 %v191, %v1944
    %v1946 = vand.u32 %v1945, 4294901760
    %v1947 = vsub.f32 %v1945, %v1946
    %v1948 = vand.u32 %v1947, 4294901760
    %1949 = vmatprep.subr.mxu0 %v1948
    %v1950 = vand.u32 %v190, 4294901760
    %v1951 = vsub.f32 %v190, %v1950
    %v1952 = vand.u32 %v1951, 4294901760
    %v1953 = vsub.f32 %v1951, %v1952
    %v1954 = vand.u32 %v1953, 4294901760
    %1955 = vmatpush2.msra.mxu0 %v1954
    %v1956 = vand.u32 %v189, 4294901760
    %v1957 = vsub.f32 %v189, %v1956
    %v1958 = vand.u32 %v1957, 4294901760
    %v1959 = vsub.f32 %v1957, %v1958
    %v1960 = vand.u32 %v1959, 4294901760
    %1961 = vmatprep.subr.mxu0 %v1960
    %v1962 = vand.u32 %v188, 4294901760
    %v1963 = vsub.f32 %v188, %v1962
    %v1964 = vand.u32 %v1963, 4294901760
    %v1965 = vsub.f32 %v1963, %v1964
    %v1966 = vand.u32 %v1965, 4294901760
    %1967 = vmatpush2.msra.mxu0 %v1966
    %v1968 = vand.u32 %v187, 4294901760
    %v1969 = vsub.f32 %v187, %v1968
    %v1970 = vand.u32 %v1969, 4294901760
    %v1971 = vsub.f32 %v1969, %v1970
    %v1972 = vand.u32 %v1971, 4294901760
    %1973 = vmatprep.subr.mxu0 %v1972
    %v1974 = vand.u32 %v186, 4294901760
    %v1975 = vsub.f32 %v186, %v1974
    %v1976 = vand.u32 %v1975, 4294901760
    %v1977 = vsub.f32 %v1975, %v1976
    %v1978 = vand.u32 %v1977, 4294901760
    %1979 = vmatpush2.msra.mxu0 %v1978
    %v1980 = vand.u32 %v185, 4294901760
    %v1981 = vsub.f32 %v185, %v1980
    %v1982 = vand.u32 %v1981, 4294901760
    %v1983 = vsub.f32 %v1981, %v1982
    %v1984 = vand.u32 %v1983, 4294901760
    %1985 = vmatprep.subr.mxu0 %v1984
    %v1986 = vand.u32 %v184, 4294901760
    %v1987 = vsub.f32 %v184, %v1986
    %v1988 = vand.u32 %v1987, 4294901760
    %v1989 = vsub.f32 %v1987, %v1988
    %v1990 = vand.u32 %v1989, 4294901760
    %1991 = vmatpush2.msra.mxu0 %v1990
    %v1992 = vand.u32 %v183, 4294901760
    %v1993 = vsub.f32 %v183, %v1992
    %v1994 = vand.u32 %v1993, 4294901760
    %v1995 = vsub.f32 %v1993, %v1994
    %v1996 = vand.u32 %v1995, 4294901760
    %1997 = vmatprep.subr.mxu0 %v1996
    %v1998 = vand.u32 %v182, 4294901760
    %v1999 = vsub.f32 %v182, %v1998
    %v2000 = vand.u32 %v1999, 4294901760
    %v2001 = vsub.f32 %v1999, %v2000
    %v2002 = vand.u32 %v2001, 4294901760
    %2003 = vmatpush2.msra.mxu0 %v2002
    %v2004 = vand.u32 %v181, 4294901760
    %v2005 = vsub.f32 %v181, %v2004
    %v2006 = vand.u32 %v2005, 4294901760
    %v2007 = vsub.f32 %v2005, %v2006
    %v2008 = vand.u32 %v2007, 4294901760
    %2009 = vmatprep.subr.mxu0 %v2008
    %v2010 = vand.u32 %v180, 4294901760
    %v2011 = vsub.f32 %v180, %v2010
    %v2012 = vand.u32 %v2011, 4294901760
    %v2013 = vsub.f32 %v2011, %v2012
    %v2014 = vand.u32 %v2013, 4294901760
    %2015 = vmatpush2.msra.mxu0 %v2014
    %v2016 = vand.u32 %v179, 4294901760
    %v2017 = vsub.f32 %v179, %v2016
    %v2018 = vand.u32 %v2017, 4294901760
    %v2019 = vsub.f32 %v2017, %v2018
    %v2020 = vand.u32 %v2019, 4294901760
    %2021 = vmatprep.subr.mxu0 %v2020
    %v2022 = vand.u32 %v178, 4294901760
    %v2023 = vsub.f32 %v178, %v2022
    %v2024 = vand.u32 %v2023, 4294901760
    %v2025 = vsub.f32 %v2023, %v2024
    %v2026 = vand.u32 %v2025, 4294901760
    %2027 = vmatpush2.msra.mxu0 %v2026
    %v2028 = vand.u32 %v177, 4294901760
    %v2029 = vsub.f32 %v177, %v2028
    %v2030 = vand.u32 %v2029, 4294901760
    %v2031 = vsub.f32 %v2029, %v2030
    %v2032 = vand.u32 %v2031, 4294901760
    %2033 = vmatprep.subr.mxu0 %v2032
    %v2034 = vand.u32 %v176, 4294901760
    %v2035 = vsub.f32 %v176, %v2034
    %v2036 = vand.u32 %v2035, 4294901760
    %v2037 = vsub.f32 %v2035, %v2036
    %v2038 = vand.u32 %v2037, 4294901760
    %2039 = vmatpush2.msra.mxu0 %v2038
    %v2040 = vand.u32 %v175, 4294901760
    %v2041 = vsub.f32 %v175, %v2040
    %v2042 = vand.u32 %v2041, 4294901760
    %v2043 = vsub.f32 %v2041, %v2042
    %v2044 = vand.u32 %v2043, 4294901760
    %2045 = vmatprep.subr.mxu0 %v2044
    %v2046 = vand.u32 %v174, 4294901760
    %v2047 = vsub.f32 %v174, %v2046
    %v2048 = vand.u32 %v2047, 4294901760
    %v2049 = vsub.f32 %v2047, %v2048
    %v2050 = vand.u32 %v2049, 4294901760
    %2051 = vmatpush2.msra.mxu0 %v2050
    %v2052 = vand.u32 %v173, 4294901760
    %v2053 = vsub.f32 %v173, %v2052
    %v2054 = vand.u32 %v2053, 4294901760
    %v2055 = vsub.f32 %v2053, %v2054
    %v2056 = vand.u32 %v2055, 4294901760
    %2057 = vmatprep.subr.mxu0 %v2056
    %v2058 = vand.u32 %v172, 4294901760
    %v2059 = vsub.f32 %v172, %v2058
    %v2060 = vand.u32 %v2059, 4294901760
    %v2061 = vsub.f32 %v2059, %v2060
    %v2062 = vand.u32 %v2061, 4294901760
    %2063 = vmatpush2.msra.mxu0 %v2062
    %v2064 = vand.u32 %v171, 4294901760
    %v2065 = vsub.f32 %v171, %v2064
    %v2066 = vand.u32 %v2065, 4294901760
    %v2067 = vsub.f32 %v2065, %v2066
    %v2068 = vand.u32 %v2067, 4294901760
    %2069 = vmatprep.subr.mxu0 %v2068
    %v2070 = vand.u32 %v170, 4294901760
    %v2071 = vsub.f32 %v170, %v2070
    %v2072 = vand.u32 %v2071, 4294901760
    %v2073 = vsub.f32 %v2071, %v2072
    %v2074 = vand.u32 %v2073, 4294901760
    %2075 = vmatpush2.msra.mxu0 %v2074
    %v2076 = vand.u32 %v169, 4294901760
    %v2077 = vsub.f32 %v169, %v2076
    %v2078 = vand.u32 %v2077, 4294901760
    %v2079 = vsub.f32 %v2077, %v2078
    %v2080 = vand.u32 %v2079, 4294901760
    %2081 = vmatprep.subr.mxu0 %v2080
    %v2082 = vand.u32 %v168, 4294901760
    %v2083 = vsub.f32 %v168, %v2082
    %v2084 = vand.u32 %v2083, 4294901760
    %v2085 = vsub.f32 %v2083, %v2084
    %v2086 = vand.u32 %v2085, 4294901760
    %2087 = vmatpush2.msra.mxu0 %v2086
    %v2088 = vand.u32 %v167, 4294901760
    %v2089 = vsub.f32 %v167, %v2088
    %v2090 = vand.u32 %v2089, 4294901760
    %v2091 = vsub.f32 %v2089, %v2090
    %v2092 = vand.u32 %v2091, 4294901760
    %2093 = vmatprep.subr.mxu0 %v2092
    %v2094 = vand.u32 %v166, 4294901760
    %v2095 = vsub.f32 %v166, %v2094
    %v2096 = vand.u32 %v2095, 4294901760
    %v2097 = vsub.f32 %v2095, %v2096
    %v2098 = vand.u32 %v2097, 4294901760
    %2099 = vmatpush2.msra.mxu0 %v2098
    %v2100 = vand.u32 %v285, 4294901760
    %2101 = vmatprep.mubr.f32.mxu0 %v2100
    %v2102 = vand.u32 %v278, 4294901760
    %2103 = vmatmul.mubr.f32.gmra.mxu0 %v2102
    %v2104 = vpop.f32.mrf.mxu0
    %v2105 = vadd.f32 %v1712, %v2104
    %v2106 = vpop.f32.mrf.mxu0
    %v2107 = vadd.f32 %v1714, %v2106
    %2108 = vdwg.mxu0
    %v2109 = vand.u32 %v165, 4294901760
    %v2110 = vsub.f32 %v165, %v2109
    %2111 = vmatprep.subr.mxu0 %v2110
    %v2112 = vand.u32 %v164, 4294901760
    %v2113 = vsub.f32 %v164, %v2112
    %2114 = vmatpush1.msra.mxu0 %v2113
    %v2115 = vand.u32 %v163, 4294901760
    %v2116 = vsub.f32 %v163, %v2115
    %2117 = vmatprep.subr.mxu0 %v2116
    %v2118 = vand.u32 %v162, 4294901760
    %v2119 = vsub.f32 %v162, %v2118
    %2120 = vmatpush1.msra.mxu0 %v2119
    %v2121 = vand.u32 %v161, 4294901760
    %v2122 = vsub.f32 %v161, %v2121
    %2123 = vmatprep.subr.mxu0 %v2122
    %v2124 = vand.u32 %v160, 4294901760
    %v2125 = vsub.f32 %v160, %v2124
    %2126 = vmatpush1.msra.mxu0 %v2125
    %v2127 = vand.u32 %v159, 4294901760
    %v2128 = vsub.f32 %v159, %v2127
    %2129 = vmatprep.subr.mxu0 %v2128
    %v2130 = vand.u32 %v158, 4294901760
    %v2131 = vsub.f32 %v158, %v2130
    %2132 = vmatpush1.msra.mxu0 %v2131
    %v2133 = vand.u32 %v157, 4294901760
    %v2134 = vsub.f32 %v157, %v2133
    %2135 = vmatprep.subr.mxu0 %v2134
    %v2136 = vand.u32 %v156, 4294901760
    %v2137 = vsub.f32 %v156, %v2136
    %2138 = vmatpush1.msra.mxu0 %v2137
    %v2139 = vand.u32 %v155, 4294901760
    %v2140 = vsub.f32 %v155, %v2139
    %2141 = vmatprep.subr.mxu0 %v2140
    %v2142 = vand.u32 %v154, 4294901760
    %v2143 = vsub.f32 %v154, %v2142
    %2144 = vmatpush1.msra.mxu0 %v2143
    %v2145 = vand.u32 %v153, 4294901760
    %v2146 = vsub.f32 %v153, %v2145
    %2147 = vmatprep.subr.mxu0 %v2146
    %v2148 = vand.u32 %v152, 4294901760
    %v2149 = vsub.f32 %v152, %v2148
    %2150 = vmatpush1.msra.mxu0 %v2149
    %v2151 = vand.u32 %v151, 4294901760
    %v2152 = vsub.f32 %v151, %v2151
    %2153 = vmatprep.subr.mxu0 %v2152
    %v2154 = vand.u32 %v150, 4294901760
    %v2155 = vsub.f32 %v150, %v2154
    %2156 = vmatpush1.msra.mxu0 %v2155
    %v2157 = vand.u32 %v149, 4294901760
    %v2158 = vsub.f32 %v149, %v2157
    %2159 = vmatprep.subr.mxu0 %v2158
    %v2160 = vand.u32 %v148, 4294901760
    %v2161 = vsub.f32 %v148, %v2160
    %2162 = vmatpush1.msra.mxu0 %v2161
    %v2163 = vand.u32 %v147, 4294901760
    %v2164 = vsub.f32 %v147, %v2163
    %2165 = vmatprep.subr.mxu0 %v2164
    %v2166 = vand.u32 %v146, 4294901760
    %v2167 = vsub.f32 %v146, %v2166
    %2168 = vmatpush1.msra.mxu0 %v2167
    %v2169 = vand.u32 %v145, 4294901760
    %v2170 = vsub.f32 %v145, %v2169
    %2171 = vmatprep.subr.mxu0 %v2170
    %v2172 = vand.u32 %v144, 4294901760
    %v2173 = vsub.f32 %v144, %v2172
    %2174 = vmatpush1.msra.mxu0 %v2173
    %v2175 = vand.u32 %v143, 4294901760
    %v2176 = vsub.f32 %v143, %v2175
    %2177 = vmatprep.subr.mxu0 %v2176
    %v2178 = vand.u32 %v142, 4294901760
    %v2179 = vsub.f32 %v142, %v2178
    %2180 = vmatpush1.msra.mxu0 %v2179
    %v2181 = vand.u32 %v141, 4294901760
    %v2182 = vsub.f32 %v141, %v2181
    %2183 = vmatprep.subr.mxu0 %v2182
    %v2184 = vand.u32 %v140, 4294901760
    %v2185 = vsub.f32 %v140, %v2184
    %2186 = vmatpush1.msra.mxu0 %v2185
    %v2187 = vand.u32 %v139, 4294901760
    %v2188 = vsub.f32 %v139, %v2187
    %2189 = vmatprep.subr.mxu0 %v2188
    %v2190 = vand.u32 %v138, 4294901760
    %v2191 = vsub.f32 %v138, %v2190
    %2192 = vmatpush1.msra.mxu0 %v2191
    %v2193 = vand.u32 %v137, 4294901760
    %v2194 = vsub.f32 %v137, %v2193
    %2195 = vmatprep.subr.mxu0 %v2194
    %v2196 = vand.u32 %v136, 4294901760
    %v2197 = vsub.f32 %v136, %v2196
    %2198 = vmatpush1.msra.mxu0 %v2197
    %v2199 = vand.u32 %v135, 4294901760
    %v2200 = vsub.f32 %v135, %v2199
    %2201 = vmatprep.subr.mxu0 %v2200
    %v2202 = vand.u32 %v134, 4294901760
    %v2203 = vsub.f32 %v134, %v2202
    %2204 = vmatpush1.msra.mxu0 %v2203
    %v2205 = vand.u32 %v197, 4294901760
    %v2206 = vsub.f32 %v197, %v2205
    %2207 = vmatprep.subr.mxu0 %v2206
    %v2208 = vand.u32 %v196, 4294901760
    %v2209 = vsub.f32 %v196, %v2208
    %2210 = vmatpush2.msra.mxu0 %v2209
    %v2211 = vand.u32 %v195, 4294901760
    %v2212 = vsub.f32 %v195, %v2211
    %2213 = vmatprep.subr.mxu0 %v2212
    %v2214 = vand.u32 %v194, 4294901760
    %v2215 = vsub.f32 %v194, %v2214
    %2216 = vmatpush2.msra.mxu0 %v2215
    %v2217 = vand.u32 %v193, 4294901760
    %v2218 = vsub.f32 %v193, %v2217
    %2219 = vmatprep.subr.mxu0 %v2218
    %v2220 = vand.u32 %v192, 4294901760
    %v2221 = vsub.f32 %v192, %v2220
    %2222 = vmatpush2.msra.mxu0 %v2221
    %v2223 = vand.u32 %v191, 4294901760
    %v2224 = vsub.f32 %v191, %v2223
    %2225 = vmatprep.subr.mxu0 %v2224
    %v2226 = vand.u32 %v190, 4294901760
    %v2227 = vsub.f32 %v190, %v2226
    %2228 = vmatpush2.msra.mxu0 %v2227
    %v2229 = vand.u32 %v189, 4294901760
    %v2230 = vsub.f32 %v189, %v2229
    %2231 = vmatprep.subr.mxu0 %v2230
    %v2232 = vand.u32 %v188, 4294901760
    %v2233 = vsub.f32 %v188, %v2232
    %2234 = vmatpush2.msra.mxu0 %v2233
    %v2235 = vand.u32 %v187, 4294901760
    %v2236 = vsub.f32 %v187, %v2235
    %2237 = vmatprep.subr.mxu0 %v2236
    %v2238 = vand.u32 %v186, 4294901760
    %v2239 = vsub.f32 %v186, %v2238
    %2240 = vmatpush2.msra.mxu0 %v2239
    %v2241 = vand.u32 %v185, 4294901760
    %v2242 = vsub.f32 %v185, %v2241
    %2243 = vmatprep.subr.mxu0 %v2242
    %v2244 = vand.u32 %v184, 4294901760
    %v2245 = vsub.f32 %v184, %v2244
    %2246 = vmatpush2.msra.mxu0 %v2245
    %v2247 = vand.u32 %v183, 4294901760
    %v2248 = vsub.f32 %v183, %v2247
    %2249 = vmatprep.subr.mxu0 %v2248
    %v2250 = vand.u32 %v182, 4294901760
    %v2251 = vsub.f32 %v182, %v2250
    %2252 = vmatpush2.msra.mxu0 %v2251
    %v2253 = vand.u32 %v181, 4294901760
    %v2254 = vsub.f32 %v181, %v2253
    %2255 = vmatprep.subr.mxu0 %v2254
    %v2256 = vand.u32 %v180, 4294901760
    %v2257 = vsub.f32 %v180, %v2256
    %2258 = vmatpush2.msra.mxu0 %v2257
    %v2259 = vand.u32 %v179, 4294901760
    %v2260 = vsub.f32 %v179, %v2259
    %2261 = vmatprep.subr.mxu0 %v2260
    %v2262 = vand.u32 %v178, 4294901760
    %v2263 = vsub.f32 %v178, %v2262
    %2264 = vmatpush2.msra.mxu0 %v2263
    %v2265 = vand.u32 %v177, 4294901760
    %v2266 = vsub.f32 %v177, %v2265
    %2267 = vmatprep.subr.mxu0 %v2266
    %v2268 = vand.u32 %v176, 4294901760
    %v2269 = vsub.f32 %v176, %v2268
    %2270 = vmatpush2.msra.mxu0 %v2269
    %v2271 = vand.u32 %v175, 4294901760
    %v2272 = vsub.f32 %v175, %v2271
    %2273 = vmatprep.subr.mxu0 %v2272
    %v2274 = vand.u32 %v174, 4294901760
    %v2275 = vsub.f32 %v174, %v2274
    %2276 = vmatpush2.msra.mxu0 %v2275
    %v2277 = vand.u32 %v173, 4294901760
    %v2278 = vsub.f32 %v173, %v2277
    %2279 = vmatprep.subr.mxu0 %v2278
    %v2280 = vand.u32 %v172, 4294901760
    %v2281 = vsub.f32 %v172, %v2280
    %2282 = vmatpush2.msra.mxu0 %v2281
    %v2283 = vand.u32 %v171, 4294901760
    %v2284 = vsub.f32 %v171, %v2283
    %2285 = vmatprep.subr.mxu0 %v2284
    %v2286 = vand.u32 %v170, 4294901760
    %v2287 = vsub.f32 %v170, %v2286
    %2288 = vmatpush2.msra.mxu0 %v2287
    %v2289 = vand.u32 %v169, 4294901760
    %v2290 = vsub.f32 %v169, %v2289
    %2291 = vmatprep.subr.mxu0 %v2290
    %v2292 = vand.u32 %v168, 4294901760
    %v2293 = vsub.f32 %v168, %v2292
    %2294 = vmatpush2.msra.mxu0 %v2293
    %v2295 = vand.u32 %v167, 4294901760
    %v2296 = vsub.f32 %v167, %v2295
    %2297 = vmatprep.subr.mxu0 %v2296
    %v2298 = vand.u32 %v166, 4294901760
    %v2299 = vsub.f32 %v166, %v2298
    %2300 = vmatpush2.msra.mxu0 %v2299
    %v2301 = vand.u32 %v285, 4294901760
    %v2302 = vsub.f32 %v285, %v2301
    %2303 = vmatprep.mubr.f32.mxu0 %v2302
    %v2304 = vand.u32 %v278, 4294901760
    %v2305 = vsub.f32 %v278, %v2304
    %2306 = vmatmul.mubr.f32.gmra.mxu0 %v2305
    %v2307 = vpop.f32.mrf.mxu0
    %v2308 = vadd.f32 %v2105, %v2307
    %v2309 = vpop.f32.mrf.mxu0
    %v2310 = vadd.f32 %v2107, %v2309
    %2311 = vdwg.mxu0
    %v2312 = vand.u32 %v165, 4294901760
    %2313 = vmatprep.subr.mxu0 %v2312
    %v2314 = vand.u32 %v164, 4294901760
    %2315 = vmatpush1.msra.mxu0 %v2314
    %v2316 = vand.u32 %v163, 4294901760
    %2317 = vmatprep.subr.mxu0 %v2316
    %v2318 = vand.u32 %v162, 4294901760
    %2319 = vmatpush1.msra.mxu0 %v2318
    %v2320 = vand.u32 %v161, 4294901760
    %2321 = vmatprep.subr.mxu0 %v2320
    %v2322 = vand.u32 %v160, 4294901760
    %2323 = vmatpush1.msra.mxu0 %v2322
    %v2324 = vand.u32 %v159, 4294901760
    %2325 = vmatprep.subr.mxu0 %v2324
    %v2326 = vand.u32 %v158, 4294901760
    %2327 = vmatpush1.msra.mxu0 %v2326
    %v2328 = vand.u32 %v157, 4294901760
    %2329 = vmatprep.subr.mxu0 %v2328
    %v2330 = vand.u32 %v156, 4294901760
    %2331 = vmatpush1.msra.mxu0 %v2330
    %v2332 = vand.u32 %v155, 4294901760
    %2333 = vmatprep.subr.mxu0 %v2332
    %v2334 = vand.u32 %v154, 4294901760
    %2335 = vmatpush1.msra.mxu0 %v2334
    %v2336 = vand.u32 %v153, 4294901760
    %2337 = vmatprep.subr.mxu0 %v2336
    %v2338 = vand.u32 %v152, 4294901760
    %2339 = vmatpush1.msra.mxu0 %v2338
    %v2340 = vand.u32 %v151, 4294901760
    %2341 = vmatprep.subr.mxu0 %v2340
    %v2342 = vand.u32 %v150, 4294901760
    %2343 = vmatpush1.msra.mxu0 %v2342
    %v2344 = vand.u32 %v149, 4294901760
    %2345 = vmatprep.subr.mxu0 %v2344
    %v2346 = vand.u32 %v148, 4294901760
    %2347 = vmatpush1.msra.mxu0 %v2346
    %v2348 = vand.u32 %v147, 4294901760
    %2349 = vmatprep.subr.mxu0 %v2348
    %v2350 = vand.u32 %v146, 4294901760
    %2351 = vmatpush1.msra.mxu0 %v2350
    %v2352 = vand.u32 %v145, 4294901760
    %2353 = vmatprep.subr.mxu0 %v2352
    %v2354 = vand.u32 %v144, 4294901760
    %2355 = vmatpush1.msra.mxu0 %v2354
    %v2356 = vand.u32 %v143, 4294901760
    %2357 = vmatprep.subr.mxu0 %v2356
    %v2358 = vand.u32 %v142, 4294901760
    %2359 = vmatpush1.msra.mxu0 %v2358
    %v2360 = vand.u32 %v141, 4294901760
    %2361 = vmatprep.subr.mxu0 %v2360
    %v2362 = vand.u32 %v140, 4294901760
    %2363 = vmatpush1.msra.mxu0 %v2362
    %v2364 = vand.u32 %v139, 4294901760
    %2365 = vmatprep.subr.mxu0 %v2364
    %v2366 = vand.u32 %v138, 4294901760
    %2367 = vmatpush1.msra.mxu0 %v2366
    %v2368 = vand.u32 %v137, 4294901760
    %2369 = vmatprep.subr.mxu0 %v2368
    %v2370 = vand.u32 %v136, 4294901760
    %2371 = vmatpush1.msra.mxu0 %v2370
    %v2372 = vand.u32 %v135, 4294901760
    %2373 = vmatprep.subr.mxu0 %v2372
    %v2374 = vand.u32 %v134, 4294901760
    %2375 = vmatpush1.msra.mxu0 %v2374
    %v2376 = vand.u32 %v197, 4294901760
    %2377 = vmatprep.subr.mxu0 %v2376
    %v2378 = vand.u32 %v196, 4294901760
    %2379 = vmatpush2.msra.mxu0 %v2378
    %v2380 = vand.u32 %v195, 4294901760
    %2381 = vmatprep.subr.mxu0 %v2380
    %v2382 = vand.u32 %v194, 4294901760
    %2383 = vmatpush2.msra.mxu0 %v2382
    %v2384 = vand.u32 %v193, 4294901760
    %2385 = vmatprep.subr.mxu0 %v2384
    %v2386 = vand.u32 %v192, 4294901760
    %2387 = vmatpush2.msra.mxu0 %v2386
    %v2388 = vand.u32 %v191, 4294901760
    %2389 = vmatprep.subr.mxu0 %v2388
    %v2390 = vand.u32 %v190, 4294901760
    %2391 = vmatpush2.msra.mxu0 %v2390
    %v2392 = vand.u32 %v189, 4294901760
    %2393 = vmatprep.subr.mxu0 %v2392
    %v2394 = vand.u32 %v188, 4294901760
    %2395 = vmatpush2.msra.mxu0 %v2394
    %v2396 = vand.u32 %v187, 4294901760
    %2397 = vmatprep.subr.mxu0 %v2396
    %v2398 = vand.u32 %v186, 4294901760
    %2399 = vmatpush2.msra.mxu0 %v2398
    %v2400 = vand.u32 %v185, 4294901760
    %2401 = vmatprep.subr.mxu0 %v2400
    %v2402 = vand.u32 %v184, 4294901760
    %2403 = vmatpush2.msra.mxu0 %v2402
    %v2404 = vand.u32 %v183, 4294901760
    %2405 = vmatprep.subr.mxu0 %v2404
    %v2406 = vand.u32 %v182, 4294901760
    %2407 = vmatpush2.msra.mxu0 %v2406
    %v2408 = vand.u32 %v181, 4294901760
    %2409 = vmatprep.subr.mxu0 %v2408
    %v2410 = vand.u32 %v180, 4294901760
    %2411 = vmatpush2.msra.mxu0 %v2410
    %v2412 = vand.u32 %v179, 4294901760
    %2413 = vmatprep.subr.mxu0 %v2412
    %v2414 = vand.u32 %v178, 4294901760
    %2415 = vmatpush2.msra.mxu0 %v2414
    %v2416 = vand.u32 %v177, 4294901760
    %2417 = vmatprep.subr.mxu0 %v2416
    %v2418 = vand.u32 %v176, 4294901760
    %2419 = vmatpush2.msra.mxu0 %v2418
    %v2420 = vand.u32 %v175, 4294901760
    %2421 = vmatprep.subr.mxu0 %v2420
    %v2422 = vand.u32 %v174, 4294901760
    %2423 = vmatpush2.msra.mxu0 %v2422
    %v2424 = vand.u32 %v173, 4294901760
    %2425 = vmatprep.subr.mxu0 %v2424
    %v2426 = vand.u32 %v172, 4294901760
    %2427 = vmatpush2.msra.mxu0 %v2426
    %v2428 = vand.u32 %v171, 4294901760
    %2429 = vmatprep.subr.mxu0 %v2428
    %v2430 = vand.u32 %v170, 4294901760
    %2431 = vmatpush2.msra.mxu0 %v2430
    %v2432 = vand.u32 %v169, 4294901760
    %2433 = vmatprep.subr.mxu0 %v2432
    %v2434 = vand.u32 %v168, 4294901760
    %2435 = vmatpush2.msra.mxu0 %v2434
    %v2436 = vand.u32 %v167, 4294901760
    %2437 = vmatprep.subr.mxu0 %v2436
    %v2438 = vand.u32 %v166, 4294901760
    %2439 = vmatpush2.msra.mxu0 %v2438
    %v2440 = vand.u32 %v285, 4294901760
    %v2441 = vsub.f32 %v285, %v2440
    %v2442 = vand.u32 %v2441, 4294901760
    %2443 = vmatprep.mubr.f32.mxu0 %v2442
    %v2444 = vand.u32 %v278, 4294901760
    %v2445 = vsub.f32 %v278, %v2444
    %v2446 = vand.u32 %v2445, 4294901760
    %2447 = vmatmul.mubr.f32.gmra.mxu0 %v2446
    %v2448 = vpop.f32.mrf.mxu0
    %v2449 = vadd.f32 %v2308, %v2448
    %v2450 = vpop.f32.mrf.mxu0
    %v2451 = vadd.f32 %v2310, %v2450
    %2452 = vdwg.mxu0
    %v2453 = vand.u32 %v165, 4294901760
    %v2454 = vsub.f32 %v165, %v2453
    %v2455 = vand.u32 %v2454, 4294901760
    %2456 = vmatprep.subr.mxu0 %v2455
    %v2457 = vand.u32 %v164, 4294901760
    %v2458 = vsub.f32 %v164, %v2457
    %v2459 = vand.u32 %v2458, 4294901760
    %2460 = vmatpush1.msra.mxu0 %v2459
    %v2461 = vand.u32 %v163, 4294901760
    %v2462 = vsub.f32 %v163, %v2461
    %v2463 = vand.u32 %v2462, 4294901760
    %2464 = vmatprep.subr.mxu0 %v2463
    %v2465 = vand.u32 %v162, 4294901760
    %v2466 = vsub.f32 %v162, %v2465
    %v2467 = vand.u32 %v2466, 4294901760
    %2468 = vmatpush1.msra.mxu0 %v2467
    %v2469 = vand.u32 %v161, 4294901760
    %v2470 = vsub.f32 %v161, %v2469
    %v2471 = vand.u32 %v2470, 4294901760
    %2472 = vmatprep.subr.mxu0 %v2471
    %v2473 = vand.u32 %v160, 4294901760
    %v2474 = vsub.f32 %v160, %v2473
    %v2475 = vand.u32 %v2474, 4294901760
    %2476 = vmatpush1.msra.mxu0 %v2475
    %v2477 = vand.u32 %v159, 4294901760
    %v2478 = vsub.f32 %v159, %v2477
    %v2479 = vand.u32 %v2478, 4294901760
    %2480 = vmatprep.subr.mxu0 %v2479
    %v2481 = vand.u32 %v158, 4294901760
    %v2482 = vsub.f32 %v158, %v2481
    %v2483 = vand.u32 %v2482, 4294901760
    %2484 = vmatpush1.msra.mxu0 %v2483
    %v2485 = vand.u32 %v157, 4294901760
    %v2486 = vsub.f32 %v157, %v2485
    %v2487 = vand.u32 %v2486, 4294901760
    %2488 = vmatprep.subr.mxu0 %v2487
    %v2489 = vand.u32 %v156, 4294901760
    %v2490 = vsub.f32 %v156, %v2489
    %v2491 = vand.u32 %v2490, 4294901760
    %2492 = vmatpush1.msra.mxu0 %v2491
    %v2493 = vand.u32 %v155, 4294901760
    %v2494 = vsub.f32 %v155, %v2493
    %v2495 = vand.u32 %v2494, 4294901760
    %2496 = vmatprep.subr.mxu0 %v2495
    %v2497 = vand.u32 %v154, 4294901760
    %v2498 = vsub.f32 %v154, %v2497
    %v2499 = vand.u32 %v2498, 4294901760
    %2500 = vmatpush1.msra.mxu0 %v2499
    %v2501 = vand.u32 %v153, 4294901760
    %v2502 = vsub.f32 %v153, %v2501
    %v2503 = vand.u32 %v2502, 4294901760
    %2504 = vmatprep.subr.mxu0 %v2503
    %v2505 = vand.u32 %v152, 4294901760
    %v2506 = vsub.f32 %v152, %v2505
    %v2507 = vand.u32 %v2506, 4294901760
    %2508 = vmatpush1.msra.mxu0 %v2507
    %v2509 = vand.u32 %v151, 4294901760
    %v2510 = vsub.f32 %v151, %v2509
    %v2511 = vand.u32 %v2510, 4294901760
    %2512 = vmatprep.subr.mxu0 %v2511
    %v2513 = vand.u32 %v150, 4294901760
    %v2514 = vsub.f32 %v150, %v2513
    %v2515 = vand.u32 %v2514, 4294901760
    %2516 = vmatpush1.msra.mxu0 %v2515
    %v2517 = vand.u32 %v149, 4294901760
    %v2518 = vsub.f32 %v149, %v2517
    %v2519 = vand.u32 %v2518, 4294901760
    %2520 = vmatprep.subr.mxu0 %v2519
    %v2521 = vand.u32 %v148, 4294901760
    %v2522 = vsub.f32 %v148, %v2521
    %v2523 = vand.u32 %v2522, 4294901760
    %2524 = vmatpush1.msra.mxu0 %v2523
    %v2525 = vand.u32 %v147, 4294901760
    %v2526 = vsub.f32 %v147, %v2525
    %v2527 = vand.u32 %v2526, 4294901760
    %2528 = vmatprep.subr.mxu0 %v2527
    %v2529 = vand.u32 %v146, 4294901760
    %v2530 = vsub.f32 %v146, %v2529
    %v2531 = vand.u32 %v2530, 4294901760
    %2532 = vmatpush1.msra.mxu0 %v2531
    %v2533 = vand.u32 %v145, 4294901760
    %v2534 = vsub.f32 %v145, %v2533
    %v2535 = vand.u32 %v2534, 4294901760
    %2536 = vmatprep.subr.mxu0 %v2535
    %v2537 = vand.u32 %v144, 4294901760
    %v2538 = vsub.f32 %v144, %v2537
    %v2539 = vand.u32 %v2538, 4294901760
    %2540 = vmatpush1.msra.mxu0 %v2539
    %v2541 = vand.u32 %v143, 4294901760
    %v2542 = vsub.f32 %v143, %v2541
    %v2543 = vand.u32 %v2542, 4294901760
    %2544 = vmatprep.subr.mxu0 %v2543
    %v2545 = vand.u32 %v142, 4294901760
    %v2546 = vsub.f32 %v142, %v2545
    %v2547 = vand.u32 %v2546, 4294901760
    %2548 = vmatpush1.msra.mxu0 %v2547
    %v2549 = vand.u32 %v141, 4294901760
    %v2550 = vsub.f32 %v141, %v2549
    %v2551 = vand.u32 %v2550, 4294901760
    %2552 = vmatprep.subr.mxu0 %v2551
    %v2553 = vand.u32 %v140, 4294901760
    %v2554 = vsub.f32 %v140, %v2553
    %v2555 = vand.u32 %v2554, 4294901760
    %2556 = vmatpush1.msra.mxu0 %v2555
    %v2557 = vand.u32 %v139, 4294901760
    %v2558 = vsub.f32 %v139, %v2557
    %v2559 = vand.u32 %v2558, 4294901760
    %2560 = vmatprep.subr.mxu0 %v2559
    %v2561 = vand.u32 %v138, 4294901760
    %v2562 = vsub.f32 %v138, %v2561
    %v2563 = vand.u32 %v2562, 4294901760
    %2564 = vmatpush1.msra.mxu0 %v2563
    %v2565 = vand.u32 %v137, 4294901760
    %v2566 = vsub.f32 %v137, %v2565
    %v2567 = vand.u32 %v2566, 4294901760
    %2568 = vmatprep.subr.mxu0 %v2567
    %v2569 = vand.u32 %v136, 4294901760
    %v2570 = vsub.f32 %v136, %v2569
    %v2571 = vand.u32 %v2570, 4294901760
    %2572 = vmatpush1.msra.mxu0 %v2571
    %v2573 = vand.u32 %v135, 4294901760
    %v2574 = vsub.f32 %v135, %v2573
    %v2575 = vand.u32 %v2574, 4294901760
    %2576 = vmatprep.subr.mxu0 %v2575
    %v2577 = vand.u32 %v134, 4294901760
    %v2578 = vsub.f32 %v134, %v2577
    %v2579 = vand.u32 %v2578, 4294901760
    %2580 = vmatpush1.msra.mxu0 %v2579
    %v2581 = vand.u32 %v197, 4294901760
    %v2582 = vsub.f32 %v197, %v2581
    %v2583 = vand.u32 %v2582, 4294901760
    %2584 = vmatprep.subr.mxu0 %v2583
    %v2585 = vand.u32 %v196, 4294901760
    %v2586 = vsub.f32 %v196, %v2585
    %v2587 = vand.u32 %v2586, 4294901760
    %2588 = vmatpush2.msra.mxu0 %v2587
    %v2589 = vand.u32 %v195, 4294901760
    %v2590 = vsub.f32 %v195, %v2589
    %v2591 = vand.u32 %v2590, 4294901760
    %2592 = vmatprep.subr.mxu0 %v2591
    %v2593 = vand.u32 %v194, 4294901760
    %v2594 = vsub.f32 %v194, %v2593
    %v2595 = vand.u32 %v2594, 4294901760
    %2596 = vmatpush2.msra.mxu0 %v2595
    %v2597 = vand.u32 %v193, 4294901760
    %v2598 = vsub.f32 %v193, %v2597
    %v2599 = vand.u32 %v2598, 4294901760
    %2600 = vmatprep.subr.mxu0 %v2599
    %v2601 = vand.u32 %v192, 4294901760
    %v2602 = vsub.f32 %v192, %v2601
    %v2603 = vand.u32 %v2602, 4294901760
    %2604 = vmatpush2.msra.mxu0 %v2603
    %v2605 = vand.u32 %v191, 4294901760
    %v2606 = vsub.f32 %v191, %v2605
    %v2607 = vand.u32 %v2606, 4294901760
    %2608 = vmatprep.subr.mxu0 %v2607
    %v2609 = vand.u32 %v190, 4294901760
    %v2610 = vsub.f32 %v190, %v2609
    %v2611 = vand.u32 %v2610, 4294901760
    %2612 = vmatpush2.msra.mxu0 %v2611
    %v2613 = vand.u32 %v189, 4294901760
    %v2614 = vsub.f32 %v189, %v2613
    %v2615 = vand.u32 %v2614, 4294901760
    %2616 = vmatprep.subr.mxu0 %v2615
    %v2617 = vand.u32 %v188, 4294901760
    %v2618 = vsub.f32 %v188, %v2617
    %v2619 = vand.u32 %v2618, 4294901760
    %2620 = vmatpush2.msra.mxu0 %v2619
    %v2621 = vand.u32 %v187, 4294901760
    %v2622 = vsub.f32 %v187, %v2621
    %v2623 = vand.u32 %v2622, 4294901760
    %2624 = vmatprep.subr.mxu0 %v2623
    %v2625 = vand.u32 %v186, 4294901760
    %v2626 = vsub.f32 %v186, %v2625
    %v2627 = vand.u32 %v2626, 4294901760
    %2628 = vmatpush2.msra.mxu0 %v2627
    %v2629 = vand.u32 %v185, 4294901760
    %v2630 = vsub.f32 %v185, %v2629
    %v2631 = vand.u32 %v2630, 4294901760
    %2632 = vmatprep.subr.mxu0 %v2631
    %v2633 = vand.u32 %v184, 4294901760
    %v2634 = vsub.f32 %v184, %v2633
    %v2635 = vand.u32 %v2634, 4294901760
    %2636 = vmatpush2.msra.mxu0 %v2635
    %v2637 = vand.u32 %v183, 4294901760
    %v2638 = vsub.f32 %v183, %v2637
    %v2639 = vand.u32 %v2638, 4294901760
    %2640 = vmatprep.subr.mxu0 %v2639
    %v2641 = vand.u32 %v182, 4294901760
    %v2642 = vsub.f32 %v182, %v2641
    %v2643 = vand.u32 %v2642, 4294901760
    %2644 = vmatpush2.msra.mxu0 %v2643
    %v2645 = vand.u32 %v181, 4294901760
    %v2646 = vsub.f32 %v181, %v2645
    %v2647 = vand.u32 %v2646, 4294901760
    %2648 = vmatprep.subr.mxu0 %v2647
    %v2649 = vand.u32 %v180, 4294901760
    %v2650 = vsub.f32 %v180, %v2649
    %v2651 = vand.u32 %v2650, 4294901760
    %2652 = vmatpush2.msra.mxu0 %v2651
    %v2653 = vand.u32 %v179, 4294901760
    %v2654 = vsub.f32 %v179, %v2653
    %v2655 = vand.u32 %v2654, 4294901760
    %2656 = vmatprep.subr.mxu0 %v2655
    %v2657 = vand.u32 %v178, 4294901760
    %v2658 = vsub.f32 %v178, %v2657
    %v2659 = vand.u32 %v2658, 4294901760
    %2660 = vmatpush2.msra.mxu0 %v2659
    %v2661 = vand.u32 %v177, 4294901760
    %v2662 = vsub.f32 %v177, %v2661
    %v2663 = vand.u32 %v2662, 4294901760
    %2664 = vmatprep.subr.mxu0 %v2663
    %v2665 = vand.u32 %v176, 4294901760
    %v2666 = vsub.f32 %v176, %v2665
    %v2667 = vand.u32 %v2666, 4294901760
    %2668 = vmatpush2.msra.mxu0 %v2667
    %v2669 = vand.u32 %v175, 4294901760
    %v2670 = vsub.f32 %v175, %v2669
    %v2671 = vand.u32 %v2670, 4294901760
    %2672 = vmatprep.subr.mxu0 %v2671
    %v2673 = vand.u32 %v174, 4294901760
    %v2674 = vsub.f32 %v174, %v2673
    %v2675 = vand.u32 %v2674, 4294901760
    %2676 = vmatpush2.msra.mxu0 %v2675
    %v2677 = vand.u32 %v173, 4294901760
    %v2678 = vsub.f32 %v173, %v2677
    %v2679 = vand.u32 %v2678, 4294901760
    %2680 = vmatprep.subr.mxu0 %v2679
    %v2681 = vand.u32 %v172, 4294901760
    %v2682 = vsub.f32 %v172, %v2681
    %v2683 = vand.u32 %v2682, 4294901760
    %2684 = vmatpush2.msra.mxu0 %v2683
    %v2685 = vand.u32 %v171, 4294901760
    %v2686 = vsub.f32 %v171, %v2685
    %v2687 = vand.u32 %v2686, 4294901760
    %2688 = vmatprep.subr.mxu0 %v2687
    %v2689 = vand.u32 %v170, 4294901760
    %v2690 = vsub.f32 %v170, %v2689
    %v2691 = vand.u32 %v2690, 4294901760
    %2692 = vmatpush2.msra.mxu0 %v2691
    %v2693 = vand.u32 %v169, 4294901760
    %v2694 = vsub.f32 %v169, %v2693
    %v2695 = vand.u32 %v2694, 4294901760
    %2696 = vmatprep.subr.mxu0 %v2695
    %v2697 = vand.u32 %v168, 4294901760
    %v2698 = vsub.f32 %v168, %v2697
    %v2699 = vand.u32 %v2698, 4294901760
    %2700 = vmatpush2.msra.mxu0 %v2699
    %v2701 = vand.u32 %v167, 4294901760
    %v2702 = vsub.f32 %v167, %v2701
    %v2703 = vand.u32 %v2702, 4294901760
    %2704 = vmatprep.subr.mxu0 %v2703
    %v2705 = vand.u32 %v166, 4294901760
    %v2706 = vsub.f32 %v166, %v2705
    %v2707 = vand.u32 %v2706, 4294901760
    %2708 = vmatpush2.msra.mxu0 %v2707
    %v2709 = vand.u32 %v285, 4294901760
    %2710 = vmatprep.mubr.f32.mxu0 %v2709
    %v2711 = vand.u32 %v278, 4294901760
    %2712 = vmatmul.mubr.f32.gmra.mxu0 %v2711
    %v2713 = vpop.f32.mrf.mxu0
    %v2714 = vadd.f32 %v2449, %v2713
    %v2715 = vpop.f32.mrf.mxu0
    %v2716 = vadd.f32 %v2451, %v2715
    %2717 = vdwg.mxu0
    %v2718 = vand.u32 %v165, 4294901760
    %2719 = vmatprep.subr.mxu0 %v2718
    %v2720 = vand.u32 %v164, 4294901760
    %2721 = vmatpush1.msra.mxu0 %v2720
    %v2722 = vand.u32 %v163, 4294901760
    %2723 = vmatprep.subr.mxu0 %v2722
    %v2724 = vand.u32 %v162, 4294901760
    %2725 = vmatpush1.msra.mxu0 %v2724
    %v2726 = vand.u32 %v161, 4294901760
    %2727 = vmatprep.subr.mxu0 %v2726
    %v2728 = vand.u32 %v160, 4294901760
    %2729 = vmatpush1.msra.mxu0 %v2728
    %v2730 = vand.u32 %v159, 4294901760
    %2731 = vmatprep.subr.mxu0 %v2730
    %v2732 = vand.u32 %v158, 4294901760
    %2733 = vmatpush1.msra.mxu0 %v2732
    %v2734 = vand.u32 %v157, 4294901760
    %2735 = vmatprep.subr.mxu0 %v2734
    %v2736 = vand.u32 %v156, 4294901760
    %2737 = vmatpush1.msra.mxu0 %v2736
    %v2738 = vand.u32 %v155, 4294901760
    %2739 = vmatprep.subr.mxu0 %v2738
    %v2740 = vand.u32 %v154, 4294901760
    %2741 = vmatpush1.msra.mxu0 %v2740
    %v2742 = vand.u32 %v153, 4294901760
    %2743 = vmatprep.subr.mxu0 %v2742
    %v2744 = vand.u32 %v152, 4294901760
    %2745 = vmatpush1.msra.mxu0 %v2744
    %v2746 = vand.u32 %v151, 4294901760
    %2747 = vmatprep.subr.mxu0 %v2746
    %v2748 = vand.u32 %v150, 4294901760
    %2749 = vmatpush1.msra.mxu0 %v2748
    %v2750 = vand.u32 %v149, 4294901760
    %2751 = vmatprep.subr.mxu0 %v2750
    %v2752 = vand.u32 %v148, 4294901760
    %2753 = vmatpush1.msra.mxu0 %v2752
    %v2754 = vand.u32 %v147, 4294901760
    %2755 = vmatprep.subr.mxu0 %v2754
    %v2756 = vand.u32 %v146, 4294901760
    %2757 = vmatpush1.msra.mxu0 %v2756
    %v2758 = vand.u32 %v145, 4294901760
    %2759 = vmatprep.subr.mxu0 %v2758
    %v2760 = vand.u32 %v144, 4294901760
    %2761 = vmatpush1.msra.mxu0 %v2760
    %v2762 = vand.u32 %v143, 4294901760
    %2763 = vmatprep.subr.mxu0 %v2762
    %v2764 = vand.u32 %v142, 4294901760
    %2765 = vmatpush1.msra.mxu0 %v2764
    %v2766 = vand.u32 %v141, 4294901760
    %2767 = vmatprep.subr.mxu0 %v2766
    %v2768 = vand.u32 %v140, 4294901760
    %2769 = vmatpush1.msra.mxu0 %v2768
    %v2770 = vand.u32 %v139, 4294901760
    %2771 = vmatprep.subr.mxu0 %v2770
    %v2772 = vand.u32 %v138, 4294901760
    %2773 = vmatpush1.msra.mxu0 %v2772
    %v2774 = vand.u32 %v137, 4294901760
    %2775 = vmatprep.subr.mxu0 %v2774
    %v2776 = vand.u32 %v136, 4294901760
    %2777 = vmatpush1.msra.mxu0 %v2776
    %v2778 = vand.u32 %v135, 4294901760
    %2779 = vmatprep.subr.mxu0 %v2778
    %v2780 = vand.u32 %v134, 4294901760
    %2781 = vmatpush1.msra.mxu0 %v2780
    %v2782 = vand.u32 %v197, 4294901760
    %2783 = vmatprep.subr.mxu0 %v2782
    %v2784 = vand.u32 %v196, 4294901760
    %2785 = vmatpush2.msra.mxu0 %v2784
    %v2786 = vand.u32 %v195, 4294901760
    %2787 = vmatprep.subr.mxu0 %v2786
    %v2788 = vand.u32 %v194, 4294901760
    %2789 = vmatpush2.msra.mxu0 %v2788
    %v2790 = vand.u32 %v193, 4294901760
    %2791 = vmatprep.subr.mxu0 %v2790
    %v2792 = vand.u32 %v192, 4294901760
    %2793 = vmatpush2.msra.mxu0 %v2792
    %v2794 = vand.u32 %v191, 4294901760
    %2795 = vmatprep.subr.mxu0 %v2794
    %v2796 = vand.u32 %v190, 4294901760
    %2797 = vmatpush2.msra.mxu0 %v2796
    %v2798 = vand.u32 %v189, 4294901760
    %2799 = vmatprep.subr.mxu0 %v2798
    %v2800 = vand.u32 %v188, 4294901760
    %2801 = vmatpush2.msra.mxu0 %v2800
    %v2802 = vand.u32 %v187, 4294901760
    %2803 = vmatprep.subr.mxu0 %v2802
    %v2804 = vand.u32 %v186, 4294901760
    %2805 = vmatpush2.msra.mxu0 %v2804
    %v2806 = vand.u32 %v185, 4294901760
    %2807 = vmatprep.subr.mxu0 %v2806
    %v2808 = vand.u32 %v184, 4294901760
    %2809 = vmatpush2.msra.mxu0 %v2808
    %v2810 = vand.u32 %v183, 4294901760
    %2811 = vmatprep.subr.mxu0 %v2810
    %v2812 = vand.u32 %v182, 4294901760
    %2813 = vmatpush2.msra.mxu0 %v2812
    %v2814 = vand.u32 %v181, 4294901760
    %2815 = vmatprep.subr.mxu0 %v2814
    %v2816 = vand.u32 %v180, 4294901760
    %2817 = vmatpush2.msra.mxu0 %v2816
    %v2818 = vand.u32 %v179, 4294901760
    %2819 = vmatprep.subr.mxu0 %v2818
    %v2820 = vand.u32 %v178, 4294901760
    %2821 = vmatpush2.msra.mxu0 %v2820
    %v2822 = vand.u32 %v177, 4294901760
    %2823 = vmatprep.subr.mxu0 %v2822
    %v2824 = vand.u32 %v176, 4294901760
    %2825 = vmatpush2.msra.mxu0 %v2824
    %v2826 = vand.u32 %v175, 4294901760
    %2827 = vmatprep.subr.mxu0 %v2826
    %v2828 = vand.u32 %v174, 4294901760
    %2829 = vmatpush2.msra.mxu0 %v2828
    %v2830 = vand.u32 %v173, 4294901760
    %2831 = vmatprep.subr.mxu0 %v2830
    %v2832 = vand.u32 %v172, 4294901760
    %2833 = vmatpush2.msra.mxu0 %v2832
    %v2834 = vand.u32 %v171, 4294901760
    %2835 = vmatprep.subr.mxu0 %v2834
    %v2836 = vand.u32 %v170, 4294901760
    %2837 = vmatpush2.msra.mxu0 %v2836
    %v2838 = vand.u32 %v169, 4294901760
    %2839 = vmatprep.subr.mxu0 %v2838
    %v2840 = vand.u32 %v168, 4294901760
    %2841 = vmatpush2.msra.mxu0 %v2840
    %v2842 = vand.u32 %v167, 4294901760
    %2843 = vmatprep.subr.mxu0 %v2842
    %v2844 = vand.u32 %v166, 4294901760
    %2845 = vmatpush2.msra.mxu0 %v2844
    %v2846 = vand.u32 %v285, 4294901760
    %2847 = vmatprep.mubr.f32.mxu0 %v2846
    %v2848 = vand.u32 %v278, 4294901760
    %2849 = vmatmul.mubr.f32.gmra.mxu0 %v2848
    %v2850 = vpop.f32.mrf.mxu0
    %v2851 = vadd.f32 %v2714, %v2850
    %v2852 = vpop.f32.mrf.mxu0
    %v2853 = vadd.f32 %v2716, %v2852
    %2854 = vdwg.mxu0
    %v2855 = vxor.u32 %v2851, 2147483648
    %v2856 = vxor.u32 %v2853, 2147483648
    %v2857 = vmul.f32 %v2855, 1.442695
    %v2858 = vpow.pop %v2857
    %v2859 = vmul.f32 %v2856, 1.442695
    %v2860 = vpow.pop %v2859
    %v2861 = vadd.f32 %v2858, 1.0
    %v2862 = vadd.f32 %v2860, 1.0
    %v2863 = vrcp.pop %v2861
    %v2864 = vmul.f32 1.0, %v2863
    %v2865 = vrcp.pop %v2862
    %v2866 = vmul.f32 1.0, %v2865
    %v2867 = vlaneseq
    %v2868 = vshrl.u32 %v2867, 7
    %v2869 = vsub.s32 0, %v2868
    %v2870 = vrot.slane %v2864, %v2869
    %v2871 = vlaneseq
    %v2872 = vshrl.u32 %v2871, 7
    %v2873 = vsub.s32 0, %v2872
    %v2874 = vrot.slane %v2866, %v2873
    %v2877 = vcombine.low %v2870, %v2874
    %v2879 = vmul.f32 %v252, %v2877
    %2880 = vst [vmem:[#allocation11] sm:$0xff] %v2879
    %s2881 = scalar_lea.vmem [#allocation4], 8
    %v2882 = vld [vmem:[%s2881] sm:$0xff]
    %v2884 = vcombine.high %v2882, %v2882
    %v2886 = vsel %vm202, %v2882, 0.0
    %v2887 = vsel %vm202, %v2884, 0.0
    %v2888 = vadd.f32 %v2886, %v2887
    %2889 = vadd.xlane.f32.xlu0 %v2888
    %v2890 = vpop.xlane.xlu0 %2889
    %v2891 = vmul.f32 %v2890, 0.00390625
    %v2892 = vsel %vm202, %v2882, -inf
    %v2893 = vsel %vm202, %v2884, -inf
    %v2894 = vmax.f32 %v2892, %v2893
    %2895 = vmax.xlane.f32.xlu0 %v2894
    %v2896 = vpop.xlane.xlu0 %2895
    %v2897 = vadd.f32 %v2891, %v2896
    %v2899 = vrot.slane %v2897, 7
    %v2901 = vsel %vm218, 0.0, %v2899
    %v2902 = vrot.slane %v2897, 1
    %v2904 = vsel %vm222, %v2902, 0.0
    %v2905 = vmul.f32 %v224, %v2901
    %v2906 = vmul.f32 %v226, %v2897
    %v2907 = vadd.f32 %v2905, %v2906
    %v2908 = vmul.f32 %v229, %v2904
    %v2909 = vadd.f32 %v2907, %v2908
    %v2910 = vadd.f32 %v2909, %v232
    %v2911 = vxor.u32 %v2910, 2147483648
    %v2912 = vmul.f32 %v2911, 1.442695
    %v2913 = vpow.pop %v2912
    %v2914 = vadd.f32 %v2913, 1.0
    %v2915 = vrcp.pop %v2914
    %v2916 = vmul.f32 1.0, %v2915
    %2918 = vset.pattern.permute.xlu0 0
    %2919 = vperm.xlu0 %2918, %v2916
    %v2920 = vpop.permute.xlu0 %2919
    %v2922 = vunpack.c.l.s4 839922192
    %v2923 = vunpack.c.0.s8 %v2922
    %v2924 = vlaneseq
    %v2925 = vshrl.u32 %v2924, 7
    %v2926 = vsub.s32 %v2923, %v2925
    %v2927 = vrot.slane %v2920, %v2926
    %v2929 = vmul.f32 %v2882, %v2927
    %v2931 = vcombine.high %v2929, %v2929
    %v2933 = vsel %vm202, %v2929, 0.0
    %v2934 = vrot.slane %v2933, 4
    %v2935 = vadd.f32 %v2933, %v2934
    %v2936 = vrot.slane %v2935, 2
    %v2937 = vadd.f32 %v2935, %v2936
    %v2938 = vrot.slane %v2937, 1
    %v2939 = vadd.f32 %v2937, %v2938
    %v2940 = vsel %vm202, %v2931, 0.0
    %v2941 = vrot.slane %v2940, 4
    %v2942 = vadd.f32 %v2940, %v2941
    %v2943 = vrot.slane %v2942, 2
    %v2944 = vadd.f32 %v2942, %v2943
    %v2945 = vrot.slane %v2944, 1
    %v2946 = vadd.f32 %v2944, %v2945
    %v2947 = vmul.f32 %v2939, 0.25
    %v2948 = vmul.f32 %v2946, 0.25
    %v2949 = vsel %vm202, %v2929, -inf
    %v2950 = vrot.slane %v2949, 4
    %v2951 = vmax.f32 %v2949, %v2950
    %v2952 = vrot.slane %v2951, 2
    %v2953 = vmax.f32 %v2951, %v2952
    %v2954 = vrot.slane %v2953, 1
    %v2955 = vmax.f32 %v2953, %v2954
    %v2956 = vsel %vm202, %v2931, -inf
    %v2957 = vrot.slane %v2956, 4
    %v2958 = vmax.f32 %v2956, %v2957
    %v2959 = vrot.slane %v2958, 2
    %v2960 = vmax.f32 %v2958, %v2959
    %v2961 = vrot.slane %v2960, 1
    %v2962 = vmax.f32 %v2960, %v2961
    %v2963 = vand.u32 %v101, 4294901760
    %2964 = vmatprep.subr.mxu0 %v2963
    %v2965 = vand.u32 %v100, 4294901760
    %2966 = vmatpush1.msra.mxu0 %v2965
    %v2967 = vand.u32 %v99, 4294901760
    %2968 = vmatprep.subr.mxu0 %v2967
    %v2969 = vand.u32 %v98, 4294901760
    %2970 = vmatpush1.msra.mxu0 %v2969
    %v2971 = vand.u32 %v97, 4294901760
    %2972 = vmatprep.subr.mxu0 %v2971
    %v2973 = vand.u32 %v96, 4294901760
    %2974 = vmatpush1.msra.mxu0 %v2973
    %v2975 = vand.u32 %v95, 4294901760
    %2976 = vmatprep.subr.mxu0 %v2975
    %v2977 = vand.u32 %v94, 4294901760
    %2978 = vmatpush1.msra.mxu0 %v2977
    %v2979 = vand.u32 %v93, 4294901760
    %2980 = vmatprep.subr.mxu0 %v2979
    %v2981 = vand.u32 %v92, 4294901760
    %2982 = vmatpush1.msra.mxu0 %v2981
    %v2983 = vand.u32 %v91, 4294901760
    %2984 = vmatprep.subr.mxu0 %v2983
    %v2985 = vand.u32 %v90, 4294901760
    %2986 = vmatpush1.msra.mxu0 %v2985
    %v2987 = vand.u32 %v89, 4294901760
    %2988 = vmatprep.subr.mxu0 %v2987
    %v2989 = vand.u32 %v88, 4294901760
    %2990 = vmatpush1.msra.mxu0 %v2989
    %v2991 = vand.u32 %v87, 4294901760
    %2992 = vmatprep.subr.mxu0 %v2991
    %v2993 = vand.u32 %v86, 4294901760
    %2994 = vmatpush1.msra.mxu0 %v2993
    %v2995 = vand.u32 %v85, 4294901760
    %2996 = vmatprep.subr.mxu0 %v2995
    %v2997 = vand.u32 %v84, 4294901760
    %2998 = vmatpush1.msra.mxu0 %v2997
    %v2999 = vand.u32 %v83, 4294901760
    %3000 = vmatprep.subr.mxu0 %v2999
    %v3001 = vand.u32 %v82, 4294901760
    %3002 = vmatpush1.msra.mxu0 %v3001
    %v3003 = vand.u32 %v81, 4294901760
    %3004 = vmatprep.subr.mxu0 %v3003
    %v3005 = vand.u32 %v80, 4294901760
    %3006 = vmatpush1.msra.mxu0 %v3005
    %v3007 = vand.u32 %v79, 4294901760
    %3008 = vmatprep.subr.mxu0 %v3007
    %v3009 = vand.u32 %v78, 4294901760
    %3010 = vmatpush1.msra.mxu0 %v3009
    %v3011 = vand.u32 %v77, 4294901760
    %3012 = vmatprep.subr.mxu0 %v3011
    %v3013 = vand.u32 %v76, 4294901760
    %3014 = vmatpush1.msra.mxu0 %v3013
    %v3015 = vand.u32 %v75, 4294901760
    %3016 = vmatprep.subr.mxu0 %v3015
    %v3017 = vand.u32 %v74, 4294901760
    %3018 = vmatpush1.msra.mxu0 %v3017
    %v3019 = vand.u32 %v73, 4294901760
    %3020 = vmatprep.subr.mxu0 %v3019
    %v3021 = vand.u32 %v72, 4294901760
    %3022 = vmatpush1.msra.mxu0 %v3021
    %v3023 = vand.u32 %v71, 4294901760
    %3024 = vmatprep.subr.mxu0 %v3023
    %v3025 = vand.u32 %v70, 4294901760
    %3026 = vmatpush1.msra.mxu0 %v3025
    %v3027 = vand.u32 %v133, 4294901760
    %3028 = vmatprep.subr.mxu0 %v3027
    %v3029 = vand.u32 %v132, 4294901760
    %3030 = vmatpush2.msra.mxu0 %v3029
    %v3031 = vand.u32 %v131, 4294901760
    %3032 = vmatprep.subr.mxu0 %v3031
    %v3033 = vand.u32 %v130, 4294901760
    %3034 = vmatpush2.msra.mxu0 %v3033
    %v3035 = vand.u32 %v129, 4294901760
    %3036 = vmatprep.subr.mxu0 %v3035
    %v3037 = vand.u32 %v128, 4294901760
    %3038 = vmatpush2.msra.mxu0 %v3037
    %v3039 = vand.u32 %v127, 4294901760
    %3040 = vmatprep.subr.mxu0 %v3039
    %v3041 = vand.u32 %v126, 4294901760
    %3042 = vmatpush2.msra.mxu0 %v3041
    %v3043 = vand.u32 %v125, 4294901760
    %3044 = vmatprep.subr.mxu0 %v3043
    %v3045 = vand.u32 %v124, 4294901760
    %3046 = vmatpush2.msra.mxu0 %v3045
    %v3047 = vand.u32 %v123, 4294901760
    %3048 = vmatprep.subr.mxu0 %v3047
    %v3049 = vand.u32 %v122, 4294901760
    %3050 = vmatpush2.msra.mxu0 %v3049
    %v3051 = vand.u32 %v121, 4294901760
    %3052 = vmatprep.subr.mxu0 %v3051
    %v3053 = vand.u32 %v120, 4294901760
    %3054 = vmatpush2.msra.mxu0 %v3053
    %v3055 = vand.u32 %v119, 4294901760
    %3056 = vmatprep.subr.mxu0 %v3055
    %v3057 = vand.u32 %v118, 4294901760
    %3058 = vmatpush2.msra.mxu0 %v3057
    %v3059 = vand.u32 %v117, 4294901760
    %3060 = vmatprep.subr.mxu0 %v3059
    %v3061 = vand.u32 %v116, 4294901760
    %3062 = vmatpush2.msra.mxu0 %v3061
    %v3063 = vand.u32 %v115, 4294901760
    %3064 = vmatprep.subr.mxu0 %v3063
    %v3065 = vand.u32 %v114, 4294901760
    %3066 = vmatpush2.msra.mxu0 %v3065
    %v3067 = vand.u32 %v113, 4294901760
    %3068 = vmatprep.subr.mxu0 %v3067
    %v3069 = vand.u32 %v112, 4294901760
    %3070 = vmatpush2.msra.mxu0 %v3069
    %v3071 = vand.u32 %v111, 4294901760
    %3072 = vmatprep.subr.mxu0 %v3071
    %v3073 = vand.u32 %v110, 4294901760
    %3074 = vmatpush2.msra.mxu0 %v3073
    %v3075 = vand.u32 %v109, 4294901760
    %3076 = vmatprep.subr.mxu0 %v3075
    %v3077 = vand.u32 %v108, 4294901760
    %3078 = vmatpush2.msra.mxu0 %v3077
    %v3079 = vand.u32 %v107, 4294901760
    %3080 = vmatprep.subr.mxu0 %v3079
    %v3081 = vand.u32 %v106, 4294901760
    %3082 = vmatpush2.msra.mxu0 %v3081
    %v3083 = vand.u32 %v105, 4294901760
    %3084 = vmatprep.subr.mxu0 %v3083
    %v3085 = vand.u32 %v104, 4294901760
    %3086 = vmatpush2.msra.mxu0 %v3085
    %v3087 = vand.u32 %v103, 4294901760
    %3088 = vmatprep.subr.mxu0 %v3087
    %v3089 = vand.u32 %v102, 4294901760
    %3090 = vmatpush2.msra.mxu0 %v3089
    %v3091 = vand.u32 %v2948, 4294901760
    %v3092 = vsub.f32 %v2948, %v3091
    %v3093 = vand.u32 %v3092, 4294901760
    %v3094 = vsub.f32 %v3092, %v3093
    %v3095 = vand.u32 %v3094, 4294901760
    %3096 = vmatprep.mubr.f32.mxu0 %v3095
    %v3097 = vand.u32 %v2947, 4294901760
    %v3098 = vsub.f32 %v2947, %v3097
    %v3099 = vand.u32 %v3098, 4294901760
    %v3100 = vsub.f32 %v3098, %v3099
    %v3101 = vand.u32 %v3100, 4294901760
    %3102 = vmatmul.mubr.f32.gmra.mxu0 %v3101
    %v3103 = vpop.f32.mrf.mxu0
    %v3104 = vadd.f32 %v286, %v3103
    %v3105 = vpop.f32.mrf.mxu0
    %v3106 = vadd.f32 %v286, %v3105
    %3107 = vdwg.mxu0
    %v3108 = vand.u32 %v101, 4294901760
    %v3109 = vsub.f32 %v101, %v3108
    %v3110 = vand.u32 %v3109, 4294901760
    %v3111 = vsub.f32 %v3109, %v3110
    %v3112 = vand.u32 %v3111, 4294901760
    %3113 = vmatprep.subr.mxu0 %v3112
    %v3114 = vand.u32 %v100, 4294901760
    %v3115 = vsub.f32 %v100, %v3114
    %v3116 = vand.u32 %v3115, 4294901760
    %v3117 = vsub.f32 %v3115, %v3116
    %v3118 = vand.u32 %v3117, 4294901760
    %3119 = vmatpush1.msra.mxu0 %v3118
    %v3120 = vand.u32 %v99, 4294901760
    %v3121 = vsub.f32 %v99, %v3120
    %v3122 = vand.u32 %v3121, 4294901760
    %v3123 = vsub.f32 %v3121, %v3122
    %v3124 = vand.u32 %v3123, 4294901760
    %3125 = vmatprep.subr.mxu0 %v3124
    %v3126 = vand.u32 %v98, 4294901760
    %v3127 = vsub.f32 %v98, %v3126
    %v3128 = vand.u32 %v3127, 4294901760
    %v3129 = vsub.f32 %v3127, %v3128
    %v3130 = vand.u32 %v3129, 4294901760
    %3131 = vmatpush1.msra.mxu0 %v3130
    %v3132 = vand.u32 %v97, 4294901760
    %v3133 = vsub.f32 %v97, %v3132
    %v3134 = vand.u32 %v3133, 4294901760
    %v3135 = vsub.f32 %v3133, %v3134
    %v3136 = vand.u32 %v3135, 4294901760
    %3137 = vmatprep.subr.mxu0 %v3136
    %v3138 = vand.u32 %v96, 4294901760
    %v3139 = vsub.f32 %v96, %v3138
    %v3140 = vand.u32 %v3139, 4294901760
    %v3141 = vsub.f32 %v3139, %v3140
    %v3142 = vand.u32 %v3141, 4294901760
    %3143 = vmatpush1.msra.mxu0 %v3142
    %v3144 = vand.u32 %v95, 4294901760
    %v3145 = vsub.f32 %v95, %v3144
    %v3146 = vand.u32 %v3145, 4294901760
    %v3147 = vsub.f32 %v3145, %v3146
    %v3148 = vand.u32 %v3147, 4294901760
    %3149 = vmatprep.subr.mxu0 %v3148
    %v3150 = vand.u32 %v94, 4294901760
    %v3151 = vsub.f32 %v94, %v3150
    %v3152 = vand.u32 %v3151, 4294901760
    %v3153 = vsub.f32 %v3151, %v3152
    %v3154 = vand.u32 %v3153, 4294901760
    %3155 = vmatpush1.msra.mxu0 %v3154
    %v3156 = vand.u32 %v93, 4294901760
    %v3157 = vsub.f32 %v93, %v3156
    %v3158 = vand.u32 %v3157, 4294901760
    %v3159 = vsub.f32 %v3157, %v3158
    %v3160 = vand.u32 %v3159, 4294901760
    %3161 = vmatprep.subr.mxu0 %v3160
    %v3162 = vand.u32 %v92, 4294901760
    %v3163 = vsub.f32 %v92, %v3162
    %v3164 = vand.u32 %v3163, 4294901760
    %v3165 = vsub.f32 %v3163, %v3164
    %v3166 = vand.u32 %v3165, 4294901760
    %3167 = vmatpush1.msra.mxu0 %v3166
    %v3168 = vand.u32 %v91, 4294901760
    %v3169 = vsub.f32 %v91, %v3168
    %v3170 = vand.u32 %v3169, 4294901760
    %v3171 = vsub.f32 %v3169, %v3170
    %v3172 = vand.u32 %v3171, 4294901760
    %3173 = vmatprep.subr.mxu0 %v3172
    %v3174 = vand.u32 %v90, 4294901760
    %v3175 = vsub.f32 %v90, %v3174
    %v3176 = vand.u32 %v3175, 4294901760
    %v3177 = vsub.f32 %v3175, %v3176
    %v3178 = vand.u32 %v3177, 4294901760
    %3179 = vmatpush1.msra.mxu0 %v3178
    %v3180 = vand.u32 %v89, 4294901760
    %v3181 = vsub.f32 %v89, %v3180
    %v3182 = vand.u32 %v3181, 4294901760
    %v3183 = vsub.f32 %v3181, %v3182
    %v3184 = vand.u32 %v3183, 4294901760
    %3185 = vmatprep.subr.mxu0 %v3184
    %v3186 = vand.u32 %v88, 4294901760
    %v3187 = vsub.f32 %v88, %v3186
    %v3188 = vand.u32 %v3187, 4294901760
    %v3189 = vsub.f32 %v3187, %v3188
    %v3190 = vand.u32 %v3189, 4294901760
    %3191 = vmatpush1.msra.mxu0 %v3190
    %v3192 = vand.u32 %v87, 4294901760
    %v3193 = vsub.f32 %v87, %v3192
    %v3194 = vand.u32 %v3193, 4294901760
    %v3195 = vsub.f32 %v3193, %v3194
    %v3196 = vand.u32 %v3195, 4294901760
    %3197 = vmatprep.subr.mxu0 %v3196
    %v3198 = vand.u32 %v86, 4294901760
    %v3199 = vsub.f32 %v86, %v3198
    %v3200 = vand.u32 %v3199, 4294901760
    %v3201 = vsub.f32 %v3199, %v3200
    %v3202 = vand.u32 %v3201, 4294901760
    %3203 = vmatpush1.msra.mxu0 %v3202
    %v3204 = vand.u32 %v85, 4294901760
    %v3205 = vsub.f32 %v85, %v3204
    %v3206 = vand.u32 %v3205, 4294901760
    %v3207 = vsub.f32 %v3205, %v3206
    %v3208 = vand.u32 %v3207, 4294901760
    %3209 = vmatprep.subr.mxu0 %v3208
    %v3210 = vand.u32 %v84, 4294901760
    %v3211 = vsub.f32 %v84, %v3210
    %v3212 = vand.u32 %v3211, 4294901760
    %v3213 = vsub.f32 %v3211, %v3212
    %v3214 = vand.u32 %v3213, 4294901760
    %3215 = vmatpush1.msra.mxu0 %v3214
    %v3216 = vand.u32 %v83, 4294901760
    %v3217 = vsub.f32 %v83, %v3216
    %v3218 = vand.u32 %v3217, 4294901760
    %v3219 = vsub.f32 %v3217, %v3218
    %v3220 = vand.u32 %v3219, 4294901760
    %3221 = vmatprep.subr.mxu0 %v3220
    %v3222 = vand.u32 %v82, 4294901760
    %v3223 = vsub.f32 %v82, %v3222
    %v3224 = vand.u32 %v3223, 4294901760
    %v3225 = vsub.f32 %v3223, %v3224
    %v3226 = vand.u32 %v3225, 4294901760
    %3227 = vmatpush1.msra.mxu0 %v3226
    %v3228 = vand.u32 %v81, 4294901760
    %v3229 = vsub.f32 %v81, %v3228
    %v3230 = vand.u32 %v3229, 4294901760
    %v3231 = vsub.f32 %v3229, %v3230
    %v3232 = vand.u32 %v3231, 4294901760
    %3233 = vmatprep.subr.mxu0 %v3232
    %v3234 = vand.u32 %v80, 4294901760
    %v3235 = vsub.f32 %v80, %v3234
    %v3236 = vand.u32 %v3235, 4294901760
    %v3237 = vsub.f32 %v3235, %v3236
    %v3238 = vand.u32 %v3237, 4294901760
    %3239 = vmatpush1.msra.mxu0 %v3238
    %v3240 = vand.u32 %v79, 4294901760
    %v3241 = vsub.f32 %v79, %v3240
    %v3242 = vand.u32 %v3241, 4294901760
    %v3243 = vsub.f32 %v3241, %v3242
    %v3244 = vand.u32 %v3243, 4294901760
    %3245 = vmatprep.subr.mxu0 %v3244
    %v3246 = vand.u32 %v78, 4294901760
    %v3247 = vsub.f32 %v78, %v3246
    %v3248 = vand.u32 %v3247, 4294901760
    %v3249 = vsub.f32 %v3247, %v3248
    %v3250 = vand.u32 %v3249, 4294901760
    %3251 = vmatpush1.msra.mxu0 %v3250
    %v3252 = vand.u32 %v77, 4294901760
    %v3253 = vsub.f32 %v77, %v3252
    %v3254 = vand.u32 %v3253, 4294901760
    %v3255 = vsub.f32 %v3253, %v3254
    %v3256 = vand.u32 %v3255, 4294901760
    %3257 = vmatprep.subr.mxu0 %v3256
    %v3258 = vand.u32 %v76, 4294901760
    %v3259 = vsub.f32 %v76, %v3258
    %v3260 = vand.u32 %v3259, 4294901760
    %v3261 = vsub.f32 %v3259, %v3260
    %v3262 = vand.u32 %v3261, 4294901760
    %3263 = vmatpush1.msra.mxu0 %v3262
    %v3264 = vand.u32 %v75, 4294901760
    %v3265 = vsub.f32 %v75, %v3264
    %v3266 = vand.u32 %v3265, 4294901760
    %v3267 = vsub.f32 %v3265, %v3266
    %v3268 = vand.u32 %v3267, 4294901760
    %3269 = vmatprep.subr.mxu0 %v3268
    %v3270 = vand.u32 %v74, 4294901760
    %v3271 = vsub.f32 %v74, %v3270
    %v3272 = vand.u32 %v3271, 4294901760
    %v3273 = vsub.f32 %v3271, %v3272
    %v3274 = vand.u32 %v3273, 4294901760
    %3275 = vmatpush1.msra.mxu0 %v3274
    %v3276 = vand.u32 %v73, 4294901760
    %v3277 = vsub.f32 %v73, %v3276
    %v3278 = vand.u32 %v3277, 4294901760
    %v3279 = vsub.f32 %v3277, %v3278
    %v3280 = vand.u32 %v3279, 4294901760
    %3281 = vmatprep.subr.mxu0 %v3280
    %v3282 = vand.u32 %v72, 4294901760
    %v3283 = vsub.f32 %v72, %v3282
    %v3284 = vand.u32 %v3283, 4294901760
    %v3285 = vsub.f32 %v3283, %v3284
    %v3286 = vand.u32 %v3285, 4294901760
    %3287 = vmatpush1.msra.mxu0 %v3286
    %v3288 = vand.u32 %v71, 4294901760
    %v3289 = vsub.f32 %v71, %v3288
    %v3290 = vand.u32 %v3289, 4294901760
    %v3291 = vsub.f32 %v3289, %v3290
    %v3292 = vand.u32 %v3291, 4294901760
    %3293 = vmatprep.subr.mxu0 %v3292
    %v3294 = vand.u32 %v70, 4294901760
    %v3295 = vsub.f32 %v70, %v3294
    %v3296 = vand.u32 %v3295, 4294901760
    %v3297 = vsub.f32 %v3295, %v3296
    %v3298 = vand.u32 %v3297, 4294901760
    %3299 = vmatpush1.msra.mxu0 %v3298
    %v3300 = vand.u32 %v133, 4294901760
    %v3301 = vsub.f32 %v133, %v3300
    %v3302 = vand.u32 %v3301, 4294901760
    %v3303 = vsub.f32 %v3301, %v3302
    %v3304 = vand.u32 %v3303, 4294901760
    %3305 = vmatprep.subr.mxu0 %v3304
    %v3306 = vand.u32 %v132, 4294901760
    %v3307 = vsub.f32 %v132, %v3306
    %v3308 = vand.u32 %v3307, 4294901760
    %v3309 = vsub.f32 %v3307, %v3308
    %v3310 = vand.u32 %v3309, 4294901760
    %3311 = vmatpush2.msra.mxu0 %v3310
    %v3312 = vand.u32 %v131, 4294901760
    %v3313 = vsub.f32 %v131, %v3312
    %v3314 = vand.u32 %v3313, 4294901760
    %v3315 = vsub.f32 %v3313, %v3314
    %v3316 = vand.u32 %v3315, 4294901760
    %3317 = vmatprep.subr.mxu0 %v3316
    %v3318 = vand.u32 %v130, 4294901760
    %v3319 = vsub.f32 %v130, %v3318
    %v3320 = vand.u32 %v3319, 4294901760
    %v3321 = vsub.f32 %v3319, %v3320
    %v3322 = vand.u32 %v3321, 4294901760
    %3323 = vmatpush2.msra.mxu0 %v3322
    %v3324 = vand.u32 %v129, 4294901760
    %v3325 = vsub.f32 %v129, %v3324
    %v3326 = vand.u32 %v3325, 4294901760
    %v3327 = vsub.f32 %v3325, %v3326
    %v3328 = vand.u32 %v3327, 4294901760
    %3329 = vmatprep.subr.mxu0 %v3328
    %v3330 = vand.u32 %v128, 4294901760
    %v3331 = vsub.f32 %v128, %v3330
    %v3332 = vand.u32 %v3331, 4294901760
    %v3333 = vsub.f32 %v3331, %v3332
    %v3334 = vand.u32 %v3333, 4294901760
    %3335 = vmatpush2.msra.mxu0 %v3334
    %v3336 = vand.u32 %v127, 4294901760
    %v3337 = vsub.f32 %v127, %v3336
    %v3338 = vand.u32 %v3337, 4294901760
    %v3339 = vsub.f32 %v3337, %v3338
    %v3340 = vand.u32 %v3339, 4294901760
    %3341 = vmatprep.subr.mxu0 %v3340
    %v3342 = vand.u32 %v126, 4294901760
    %v3343 = vsub.f32 %v126, %v3342
    %v3344 = vand.u32 %v3343, 4294901760
    %v3345 = vsub.f32 %v3343, %v3344
    %v3346 = vand.u32 %v3345, 4294901760
    %3347 = vmatpush2.msra.mxu0 %v3346
    %v3348 = vand.u32 %v125, 4294901760
    %v3349 = vsub.f32 %v125, %v3348
    %v3350 = vand.u32 %v3349, 4294901760
    %v3351 = vsub.f32 %v3349, %v3350
    %v3352 = vand.u32 %v3351, 4294901760
    %3353 = vmatprep.subr.mxu0 %v3352
    %v3354 = vand.u32 %v124, 4294901760
    %v3355 = vsub.f32 %v124, %v3354
    %v3356 = vand.u32 %v3355, 4294901760
    %v3357 = vsub.f32 %v3355, %v3356
    %v3358 = vand.u32 %v3357, 4294901760
    %3359 = vmatpush2.msra.mxu0 %v3358
    %v3360 = vand.u32 %v123, 4294901760
    %v3361 = vsub.f32 %v123, %v3360
    %v3362 = vand.u32 %v3361, 4294901760
    %v3363 = vsub.f32 %v3361, %v3362
    %v3364 = vand.u32 %v3363, 4294901760
    %3365 = vmatprep.subr.mxu0 %v3364
    %v3366 = vand.u32 %v122, 4294901760
    %v3367 = vsub.f32 %v122, %v3366
    %v3368 = vand.u32 %v3367, 4294901760
    %v3369 = vsub.f32 %v3367, %v3368
    %v3370 = vand.u32 %v3369, 4294901760
    %3371 = vmatpush2.msra.mxu0 %v3370
    %v3372 = vand.u32 %v121, 4294901760
    %v3373 = vsub.f32 %v121, %v3372
    %v3374 = vand.u32 %v3373, 4294901760
    %v3375 = vsub.f32 %v3373, %v3374
    %v3376 = vand.u32 %v3375, 4294901760
    %3377 = vmatprep.subr.mxu0 %v3376
    %v3378 = vand.u32 %v120, 4294901760
    %v3379 = vsub.f32 %v120, %v3378
    %v3380 = vand.u32 %v3379, 4294901760
    %v3381 = vsub.f32 %v3379, %v3380
    %v3382 = vand.u32 %v3381, 4294901760
    %3383 = vmatpush2.msra.mxu0 %v3382
    %v3384 = vand.u32 %v119, 4294901760
    %v3385 = vsub.f32 %v119, %v3384
    %v3386 = vand.u32 %v3385, 4294901760
    %v3387 = vsub.f32 %v3385, %v3386
    %v3388 = vand.u32 %v3387, 4294901760
    %3389 = vmatprep.subr.mxu0 %v3388
    %v3390 = vand.u32 %v118, 4294901760
    %v3391 = vsub.f32 %v118, %v3390
    %v3392 = vand.u32 %v3391, 4294901760
    %v3393 = vsub.f32 %v3391, %v3392
    %v3394 = vand.u32 %v3393, 4294901760
    %3395 = vmatpush2.msra.mxu0 %v3394
    %v3396 = vand.u32 %v117, 4294901760
    %v3397 = vsub.f32 %v117, %v3396
    %v3398 = vand.u32 %v3397, 4294901760
    %v3399 = vsub.f32 %v3397, %v3398
    %v3400 = vand.u32 %v3399, 4294901760
    %3401 = vmatprep.subr.mxu0 %v3400
    %v3402 = vand.u32 %v116, 4294901760
    %v3403 = vsub.f32 %v116, %v3402
    %v3404 = vand.u32 %v3403, 4294901760
    %v3405 = vsub.f32 %v3403, %v3404
    %v3406 = vand.u32 %v3405, 4294901760
    %3407 = vmatpush2.msra.mxu0 %v3406
    %v3408 = vand.u32 %v115, 4294901760
    %v3409 = vsub.f32 %v115, %v3408
    %v3410 = vand.u32 %v3409, 4294901760
    %v3411 = vsub.f32 %v3409, %v3410
    %v3412 = vand.u32 %v3411, 4294901760
    %3413 = vmatprep.subr.mxu0 %v3412
    %v3414 = vand.u32 %v114, 4294901760
    %v3415 = vsub.f32 %v114, %v3414
    %v3416 = vand.u32 %v3415, 4294901760
    %v3417 = vsub.f32 %v3415, %v3416
    %v3418 = vand.u32 %v3417, 4294901760
    %3419 = vmatpush2.msra.mxu0 %v3418
    %v3420 = vand.u32 %v113, 4294901760
    %v3421 = vsub.f32 %v113, %v3420
    %v3422 = vand.u32 %v3421, 4294901760
    %v3423 = vsub.f32 %v3421, %v3422
    %v3424 = vand.u32 %v3423, 4294901760
    %3425 = vmatprep.subr.mxu0 %v3424
    %v3426 = vand.u32 %v112, 4294901760
    %v3427 = vsub.f32 %v112, %v3426
    %v3428 = vand.u32 %v3427, 4294901760
    %v3429 = vsub.f32 %v3427, %v3428
    %v3430 = vand.u32 %v3429, 4294901760
    %3431 = vmatpush2.msra.mxu0 %v3430
    %v3432 = vand.u32 %v111, 4294901760
    %v3433 = vsub.f32 %v111, %v3432
    %v3434 = vand.u32 %v3433, 4294901760
    %v3435 = vsub.f32 %v3433, %v3434
    %v3436 = vand.u32 %v3435, 4294901760
    %3437 = vmatprep.subr.mxu0 %v3436
    %v3438 = vand.u32 %v110, 4294901760
    %v3439 = vsub.f32 %v110, %v3438
    %v3440 = vand.u32 %v3439, 4294901760
    %v3441 = vsub.f32 %v3439, %v3440
    %v3442 = vand.u32 %v3441, 4294901760
    %3443 = vmatpush2.msra.mxu0 %v3442
    %v3444 = vand.u32 %v109, 4294901760
    %v3445 = vsub.f32 %v109, %v3444
    %v3446 = vand.u32 %v3445, 4294901760
    %v3447 = vsub.f32 %v3445, %v3446
    %v3448 = vand.u32 %v3447, 4294901760
    %3449 = vmatprep.subr.mxu0 %v3448
    %v3450 = vand.u32 %v108, 4294901760
    %v3451 = vsub.f32 %v108, %v3450
    %v3452 = vand.u32 %v3451, 4294901760
    %v3453 = vsub.f32 %v3451, %v3452
    %v3454 = vand.u32 %v3453, 4294901760
    %3455 = vmatpush2.msra.mxu0 %v3454
    %v3456 = vand.u32 %v107, 4294901760
    %v3457 = vsub.f32 %v107, %v3456
    %v3458 = vand.u32 %v3457, 4294901760
    %v3459 = vsub.f32 %v3457, %v3458
    %v3460 = vand.u32 %v3459, 4294901760
    %3461 = vmatprep.subr.mxu0 %v3460
    %v3462 = vand.u32 %v106, 4294901760
    %v3463 = vsub.f32 %v106, %v3462
    %v3464 = vand.u32 %v3463, 4294901760
    %v3465 = vsub.f32 %v3463, %v3464
    %v3466 = vand.u32 %v3465, 4294901760
    %3467 = vmatpush2.msra.mxu0 %v3466
    %v3468 = vand.u32 %v105, 4294901760
    %v3469 = vsub.f32 %v105, %v3468
    %v3470 = vand.u32 %v3469, 4294901760
    %v3471 = vsub.f32 %v3469, %v3470
    %v3472 = vand.u32 %v3471, 4294901760
    %3473 = vmatprep.subr.mxu0 %v3472
    %v3474 = vand.u32 %v104, 4294901760
    %v3475 = vsub.f32 %v104, %v3474
    %v3476 = vand.u32 %v3475, 4294901760
    %v3477 = vsub.f32 %v3475, %v3476
    %v3478 = vand.u32 %v3477, 4294901760
    %3479 = vmatpush2.msra.mxu0 %v3478
    %v3480 = vand.u32 %v103, 4294901760
    %v3481 = vsub.f32 %v103, %v3480
    %v3482 = vand.u32 %v3481, 4294901760
    %v3483 = vsub.f32 %v3481, %v3482
    %v3484 = vand.u32 %v3483, 4294901760
    %3485 = vmatprep.subr.mxu0 %v3484
    %v3486 = vand.u32 %v102, 4294901760
    %v3487 = vsub.f32 %v102, %v3486
    %v3488 = vand.u32 %v3487, 4294901760
    %v3489 = vsub.f32 %v3487, %v3488
    %v3490 = vand.u32 %v3489, 4294901760
    %3491 = vmatpush2.msra.mxu0 %v3490
    %v3492 = vand.u32 %v2948, 4294901760
    %3493 = vmatprep.mubr.f32.mxu0 %v3492
    %v3494 = vand.u32 %v2947, 4294901760
    %3495 = vmatmul.mubr.f32.gmra.mxu0 %v3494
    %v3496 = vpop.f32.mrf.mxu0
    %v3497 = vadd.f32 %v3104, %v3496
    %v3498 = vpop.f32.mrf.mxu0
    %v3499 = vadd.f32 %v3106, %v3498
    %3500 = vdwg.mxu0
    %v3501 = vand.u32 %v101, 4294901760
    %v3502 = vsub.f32 %v101, %v3501
    %3503 = vmatprep.subr.mxu0 %v3502
    %v3504 = vand.u32 %v100, 4294901760
    %v3505 = vsub.f32 %v100, %v3504
    %3506 = vmatpush1.msra.mxu0 %v3505
    %v3507 = vand.u32 %v99, 4294901760
    %v3508 = vsub.f32 %v99, %v3507
    %3509 = vmatprep.subr.mxu0 %v3508
    %v3510 = vand.u32 %v98, 4294901760
    %v3511 = vsub.f32 %v98, %v3510
    %3512 = vmatpush1.msra.mxu0 %v3511
    %v3513 = vand.u32 %v97, 4294901760
    %v3514 = vsub.f32 %v97, %v3513
    %3515 = vmatprep.subr.mxu0 %v3514
    %v3516 = vand.u32 %v96, 4294901760
    %v3517 = vsub.f32 %v96, %v3516
    %3518 = vmatpush1.msra.mxu0 %v3517
    %v3519 = vand.u32 %v95, 4294901760
    %v3520 = vsub.f32 %v95, %v3519
    %3521 = vmatprep.subr.mxu0 %v3520
    %v3522 = vand.u32 %v94, 4294901760
    %v3523 = vsub.f32 %v94, %v3522
    %3524 = vmatpush1.msra.mxu0 %v3523
    %v3525 = vand.u32 %v93, 4294901760
    %v3526 = vsub.f32 %v93, %v3525
    %3527 = vmatprep.subr.mxu0 %v3526
    %v3528 = vand.u32 %v92, 4294901760
    %v3529 = vsub.f32 %v92, %v3528
    %3530 = vmatpush1.msra.mxu0 %v3529
    %v3531 = vand.u32 %v91, 4294901760
    %v3532 = vsub.f32 %v91, %v3531
    %3533 = vmatprep.subr.mxu0 %v3532
    %v3534 = vand.u32 %v90, 4294901760
    %v3535 = vsub.f32 %v90, %v3534
    %3536 = vmatpush1.msra.mxu0 %v3535
    %v3537 = vand.u32 %v89, 4294901760
    %v3538 = vsub.f32 %v89, %v3537
    %3539 = vmatprep.subr.mxu0 %v3538
    %v3540 = vand.u32 %v88, 4294901760
    %v3541 = vsub.f32 %v88, %v3540
    %3542 = vmatpush1.msra.mxu0 %v3541
    %v3543 = vand.u32 %v87, 4294901760
    %v3544 = vsub.f32 %v87, %v3543
    %3545 = vmatprep.subr.mxu0 %v3544
    %v3546 = vand.u32 %v86, 4294901760
    %v3547 = vsub.f32 %v86, %v3546
    %3548 = vmatpush1.msra.mxu0 %v3547
    %v3549 = vand.u32 %v85, 4294901760
    %v3550 = vsub.f32 %v85, %v3549
    %3551 = vmatprep.subr.mxu0 %v3550
    %v3552 = vand.u32 %v84, 4294901760
    %v3553 = vsub.f32 %v84, %v3552
    %3554 = vmatpush1.msra.mxu0 %v3553
    %v3555 = vand.u32 %v83, 4294901760
    %v3556 = vsub.f32 %v83, %v3555
    %3557 = vmatprep.subr.mxu0 %v3556
    %v3558 = vand.u32 %v82, 4294901760
    %v3559 = vsub.f32 %v82, %v3558
    %3560 = vmatpush1.msra.mxu0 %v3559
    %v3561 = vand.u32 %v81, 4294901760
    %v3562 = vsub.f32 %v81, %v3561
    %3563 = vmatprep.subr.mxu0 %v3562
    %v3564 = vand.u32 %v80, 4294901760
    %v3565 = vsub.f32 %v80, %v3564
    %3566 = vmatpush1.msra.mxu0 %v3565
    %v3567 = vand.u32 %v79, 4294901760
    %v3568 = vsub.f32 %v79, %v3567
    %3569 = vmatprep.subr.mxu0 %v3568
    %v3570 = vand.u32 %v78, 4294901760
    %v3571 = vsub.f32 %v78, %v3570
    %3572 = vmatpush1.msra.mxu0 %v3571
    %v3573 = vand.u32 %v77, 4294901760
    %v3574 = vsub.f32 %v77, %v3573
    %3575 = vmatprep.subr.mxu0 %v3574
    %v3576 = vand.u32 %v76, 4294901760
    %v3577 = vsub.f32 %v76, %v3576
    %3578 = vmatpush1.msra.mxu0 %v3577
    %v3579 = vand.u32 %v75, 4294901760
    %v3580 = vsub.f32 %v75, %v3579
    %3581 = vmatprep.subr.mxu0 %v3580
    %v3582 = vand.u32 %v74, 4294901760
    %v3583 = vsub.f32 %v74, %v3582
    %3584 = vmatpush1.msra.mxu0 %v3583
    %v3585 = vand.u32 %v73, 4294901760
    %v3586 = vsub.f32 %v73, %v3585
    %3587 = vmatprep.subr.mxu0 %v3586
    %v3588 = vand.u32 %v72, 4294901760
    %v3589 = vsub.f32 %v72, %v3588
    %3590 = vmatpush1.msra.mxu0 %v3589
    %v3591 = vand.u32 %v71, 4294901760
    %v3592 = vsub.f32 %v71, %v3591
    %3593 = vmatprep.subr.mxu0 %v3592
    %v3594 = vand.u32 %v70, 4294901760
    %v3595 = vsub.f32 %v70, %v3594
    %3596 = vmatpush1.msra.mxu0 %v3595
    %v3597 = vand.u32 %v133, 4294901760
    %v3598 = vsub.f32 %v133, %v3597
    %3599 = vmatprep.subr.mxu0 %v3598
    %v3600 = vand.u32 %v132, 4294901760
    %v3601 = vsub.f32 %v132, %v3600
    %3602 = vmatpush2.msra.mxu0 %v3601
    %v3603 = vand.u32 %v131, 4294901760
    %v3604 = vsub.f32 %v131, %v3603
    %3605 = vmatprep.subr.mxu0 %v3604
    %v3606 = vand.u32 %v130, 4294901760
    %v3607 = vsub.f32 %v130, %v3606
    %3608 = vmatpush2.msra.mxu0 %v3607
    %v3609 = vand.u32 %v129, 4294901760
    %v3610 = vsub.f32 %v129, %v3609
    %3611 = vmatprep.subr.mxu0 %v3610
    %v3612 = vand.u32 %v128, 4294901760
    %v3613 = vsub.f32 %v128, %v3612
    %3614 = vmatpush2.msra.mxu0 %v3613
    %v3615 = vand.u32 %v127, 4294901760
    %v3616 = vsub.f32 %v127, %v3615
    %3617 = vmatprep.subr.mxu0 %v3616
    %v3618 = vand.u32 %v126, 4294901760
    %v3619 = vsub.f32 %v126, %v3618
    %3620 = vmatpush2.msra.mxu0 %v3619
    %v3621 = vand.u32 %v125, 4294901760
    %v3622 = vsub.f32 %v125, %v3621
    %3623 = vmatprep.subr.mxu0 %v3622
    %v3624 = vand.u32 %v124, 4294901760
    %v3625 = vsub.f32 %v124, %v3624
    %3626 = vmatpush2.msra.mxu0 %v3625
    %v3627 = vand.u32 %v123, 4294901760
    %v3628 = vsub.f32 %v123, %v3627
    %3629 = vmatprep.subr.mxu0 %v3628
    %v3630 = vand.u32 %v122, 4294901760
    %v3631 = vsub.f32 %v122, %v3630
    %3632 = vmatpush2.msra.mxu0 %v3631
    %v3633 = vand.u32 %v121, 4294901760
    %v3634 = vsub.f32 %v121, %v3633
    %3635 = vmatprep.subr.mxu0 %v3634
    %v3636 = vand.u32 %v120, 4294901760
    %v3637 = vsub.f32 %v120, %v3636
    %3638 = vmatpush2.msra.mxu0 %v3637
    %v3639 = vand.u32 %v119, 4294901760
    %v3640 = vsub.f32 %v119, %v3639
    %3641 = vmatprep.subr.mxu0 %v3640
    %v3642 = vand.u32 %v118, 4294901760
    %v3643 = vsub.f32 %v118, %v3642
    %3644 = vmatpush2.msra.mxu0 %v3643
    %v3645 = vand.u32 %v117, 4294901760
    %v3646 = vsub.f32 %v117, %v3645
    %3647 = vmatprep.subr.mxu0 %v3646
    %v3648 = vand.u32 %v116, 4294901760
    %v3649 = vsub.f32 %v116, %v3648
    %3650 = vmatpush2.msra.mxu0 %v3649
    %v3651 = vand.u32 %v115, 4294901760
    %v3652 = vsub.f32 %v115, %v3651
    %3653 = vmatprep.subr.mxu0 %v3652
    %v3654 = vand.u32 %v114, 4294901760
    %v3655 = vsub.f32 %v114, %v3654
    %3656 = vmatpush2.msra.mxu0 %v3655
    %v3657 = vand.u32 %v113, 4294901760
    %v3658 = vsub.f32 %v113, %v3657
    %3659 = vmatprep.subr.mxu0 %v3658
    %v3660 = vand.u32 %v112, 4294901760
    %v3661 = vsub.f32 %v112, %v3660
    %3662 = vmatpush2.msra.mxu0 %v3661
    %v3663 = vand.u32 %v111, 4294901760
    %v3664 = vsub.f32 %v111, %v3663
    %3665 = vmatprep.subr.mxu0 %v3664
    %v3666 = vand.u32 %v110, 4294901760
    %v3667 = vsub.f32 %v110, %v3666
    %3668 = vmatpush2.msra.mxu0 %v3667
    %v3669 = vand.u32 %v109, 4294901760
    %v3670 = vsub.f32 %v109, %v3669
    %3671 = vmatprep.subr.mxu0 %v3670
    %v3672 = vand.u32 %v108, 4294901760
    %v3673 = vsub.f32 %v108, %v3672
    %3674 = vmatpush2.msra.mxu0 %v3673
    %v3675 = vand.u32 %v107, 4294901760
    %v3676 = vsub.f32 %v107, %v3675
    %3677 = vmatprep.subr.mxu0 %v3676
    %v3678 = vand.u32 %v106, 4294901760
    %v3679 = vsub.f32 %v106, %v3678
    %3680 = vmatpush2.msra.mxu0 %v3679
    %v3681 = vand.u32 %v105, 4294901760
    %v3682 = vsub.f32 %v105, %v3681
    %3683 = vmatprep.subr.mxu0 %v3682
    %v3684 = vand.u32 %v104, 4294901760
    %v3685 = vsub.f32 %v104, %v3684
    %3686 = vmatpush2.msra.mxu0 %v3685
    %v3687 = vand.u32 %v103, 4294901760
    %v3688 = vsub.f32 %v103, %v3687
    %3689 = vmatprep.subr.mxu0 %v3688
    %v3690 = vand.u32 %v102, 4294901760
    %v3691 = vsub.f32 %v102, %v3690
    %3692 = vmatpush2.msra.mxu0 %v3691
    %v3693 = vand.u32 %v2948, 4294901760
    %v3694 = vsub.f32 %v2948, %v3693
    %3695 = vmatprep.mubr.f32.mxu0 %v3694
    %v3696 = vand.u32 %v2947, 4294901760
    %v3697 = vsub.f32 %v2947, %v3696
    %3698 = vmatmul.mubr.f32.gmra.mxu0 %v3697
    %v3699 = vpop.f32.mrf.mxu0
    %v3700 = vadd.f32 %v3497, %v3699
    %v3701 = vpop.f32.mrf.mxu0
    %v3702 = vadd.f32 %v3499, %v3701
    %3703 = vdwg.mxu0
    %v3704 = vand.u32 %v101, 4294901760
    %3705 = vmatprep.subr.mxu0 %v3704
    %v3706 = vand.u32 %v100, 4294901760
    %3707 = vmatpush1.msra.mxu0 %v3706
    %v3708 = vand.u32 %v99, 4294901760
    %3709 = vmatprep.subr.mxu0 %v3708
    %v3710 = vand.u32 %v98, 4294901760
    %3711 = vmatpush1.msra.mxu0 %v3710
    %v3712 = vand.u32 %v97, 4294901760
    %3713 = vmatprep.subr.mxu0 %v3712
    %v3714 = vand.u32 %v96, 4294901760
    %3715 = vmatpush1.msra.mxu0 %v3714
    %v3716 = vand.u32 %v95, 4294901760
    %3717 = vmatprep.subr.mxu0 %v3716
    %v3718 = vand.u32 %v94, 4294901760
    %3719 = vmatpush1.msra.mxu0 %v3718
    %v3720 = vand.u32 %v93, 4294901760
    %3721 = vmatprep.subr.mxu0 %v3720
    %v3722 = vand.u32 %v92, 4294901760
    %3723 = vmatpush1.msra.mxu0 %v3722
    %v3724 = vand.u32 %v91, 4294901760
    %3725 = vmatprep.subr.mxu0 %v3724
    %v3726 = vand.u32 %v90, 4294901760
    %3727 = vmatpush1.msra.mxu0 %v3726
    %v3728 = vand.u32 %v89, 4294901760
    %3729 = vmatprep.subr.mxu0 %v3728
    %v3730 = vand.u32 %v88, 4294901760
    %3731 = vmatpush1.msra.mxu0 %v3730
    %v3732 = vand.u32 %v87, 4294901760
    %3733 = vmatprep.subr.mxu0 %v3732
    %v3734 = vand.u32 %v86, 4294901760
    %3735 = vmatpush1.msra.mxu0 %v3734
    %v3736 = vand.u32 %v85, 4294901760
    %3737 = vmatprep.subr.mxu0 %v3736
    %v3738 = vand.u32 %v84, 4294901760
    %3739 = vmatpush1.msra.mxu0 %v3738
    %v3740 = vand.u32 %v83, 4294901760
    %3741 = vmatprep.subr.mxu0 %v3740
    %v3742 = vand.u32 %v82, 4294901760
    %3743 = vmatpush1.msra.mxu0 %v3742
    %v3744 = vand.u32 %v81, 4294901760
    %3745 = vmatprep.subr.mxu0 %v3744
    %v3746 = vand.u32 %v80, 4294901760
    %3747 = vmatpush1.msra.mxu0 %v3746
    %v3748 = vand.u32 %v79, 4294901760
    %3749 = vmatprep.subr.mxu0 %v3748
    %v3750 = vand.u32 %v78, 4294901760
    %3751 = vmatpush1.msra.mxu0 %v3750
    %v3752 = vand.u32 %v77, 4294901760
    %3753 = vmatprep.subr.mxu0 %v3752
    %v3754 = vand.u32 %v76, 4294901760
    %3755 = vmatpush1.msra.mxu0 %v3754
    %v3756 = vand.u32 %v75, 4294901760
    %3757 = vmatprep.subr.mxu0 %v3756
    %v3758 = vand.u32 %v74, 4294901760
    %3759 = vmatpush1.msra.mxu0 %v3758
    %v3760 = vand.u32 %v73, 4294901760
    %3761 = vmatprep.subr.mxu0 %v3760
    %v3762 = vand.u32 %v72, 4294901760
    %3763 = vmatpush1.msra.mxu0 %v3762
    %v3764 = vand.u32 %v71, 4294901760
    %3765 = vmatprep.subr.mxu0 %v3764
    %v3766 = vand.u32 %v70, 4294901760
    %3767 = vmatpush1.msra.mxu0 %v3766
    %v3768 = vand.u32 %v133, 4294901760
    %3769 = vmatprep.subr.mxu0 %v3768
    %v3770 = vand.u32 %v132, 4294901760
    %3771 = vmatpush2.msra.mxu0 %v3770
    %v3772 = vand.u32 %v131, 4294901760
    %3773 = vmatprep.subr.mxu0 %v3772
    %v3774 = vand.u32 %v130, 4294901760
    %3775 = vmatpush2.msra.mxu0 %v3774
    %v3776 = vand.u32 %v129, 4294901760
    %3777 = vmatprep.subr.mxu0 %v3776
    %v3778 = vand.u32 %v128, 4294901760
    %3779 = vmatpush2.msra.mxu0 %v3778
    %v3780 = vand.u32 %v127, 4294901760
    %3781 = vmatprep.subr.mxu0 %v3780
    %v3782 = vand.u32 %v126, 4294901760
    %3783 = vmatpush2.msra.mxu0 %v3782
    %v3784 = vand.u32 %v125, 4294901760
    %3785 = vmatprep.subr.mxu0 %v3784
    %v3786 = vand.u32 %v124, 4294901760
    %3787 = vmatpush2.msra.mxu0 %v3786
    %v3788 = vand.u32 %v123, 4294901760
    %3789 = vmatprep.subr.mxu0 %v3788
    %v3790 = vand.u32 %v122, 4294901760
    %3791 = vmatpush2.msra.mxu0 %v3790
    %v3792 = vand.u32 %v121, 4294901760
    %3793 = vmatprep.subr.mxu0 %v3792
    %v3794 = vand.u32 %v120, 4294901760
    %3795 = vmatpush2.msra.mxu0 %v3794
    %v3796 = vand.u32 %v119, 4294901760
    %3797 = vmatprep.subr.mxu0 %v3796
    %v3798 = vand.u32 %v118, 4294901760
    %3799 = vmatpush2.msra.mxu0 %v3798
    %v3800 = vand.u32 %v117, 4294901760
    %3801 = vmatprep.subr.mxu0 %v3800
    %v3802 = vand.u32 %v116, 4294901760
    %3803 = vmatpush2.msra.mxu0 %v3802
    %v3804 = vand.u32 %v115, 4294901760
    %3805 = vmatprep.subr.mxu0 %v3804
    %v3806 = vand.u32 %v114, 4294901760
    %3807 = vmatpush2.msra.mxu0 %v3806
    %v3808 = vand.u32 %v113, 4294901760
    %3809 = vmatprep.subr.mxu0 %v3808
    %v3810 = vand.u32 %v112, 4294901760
    %3811 = vmatpush2.msra.mxu0 %v3810
    %v3812 = vand.u32 %v111, 4294901760
    %3813 = vmatprep.subr.mxu0 %v3812
    %v3814 = vand.u32 %v110, 4294901760
    %3815 = vmatpush2.msra.mxu0 %v3814
    %v3816 = vand.u32 %v109, 4294901760
    %3817 = vmatprep.subr.mxu0 %v3816
    %v3818 = vand.u32 %v108, 4294901760
    %3819 = vmatpush2.msra.mxu0 %v3818
    %v3820 = vand.u32 %v107, 4294901760
    %3821 = vmatprep.subr.mxu0 %v3820
    %v3822 = vand.u32 %v106, 4294901760
    %3823 = vmatpush2.msra.mxu0 %v3822
    %v3824 = vand.u32 %v105, 4294901760
    %3825 = vmatprep.subr.mxu0 %v3824
    %v3826 = vand.u32 %v104, 4294901760
    %3827 = vmatpush2.msra.mxu0 %v3826
    %v3828 = vand.u32 %v103, 4294901760
    %3829 = vmatprep.subr.mxu0 %v3828
    %v3830 = vand.u32 %v102, 4294901760
    %3831 = vmatpush2.msra.mxu0 %v3830
    %v3832 = vand.u32 %v2948, 4294901760
    %v3833 = vsub.f32 %v2948, %v3832
    %v3834 = vand.u32 %v3833, 4294901760
    %3835 = vmatprep.mubr.f32.mxu0 %v3834
    %v3836 = vand.u32 %v2947, 4294901760
    %v3837 = vsub.f32 %v2947, %v3836
    %v3838 = vand.u32 %v3837, 4294901760
    %3839 = vmatmul.mubr.f32.gmra.mxu0 %v3838
    %v3840 = vpop.f32.mrf.mxu0
    %v3841 = vadd.f32 %v3700, %v3840
    %v3842 = vpop.f32.mrf.mxu0
    %v3843 = vadd.f32 %v3702, %v3842
    %3844 = vdwg.mxu0
    %v3845 = vand.u32 %v101, 4294901760
    %v3846 = vsub.f32 %v101, %v3845
    %v3847 = vand.u32 %v3846, 4294901760
    %3848 = vmatprep.subr.mxu0 %v3847
    %v3849 = vand.u32 %v100, 4294901760
    %v3850 = vsub.f32 %v100, %v3849
    %v3851 = vand.u32 %v3850, 4294901760
    %3852 = vmatpush1.msra.mxu0 %v3851
    %v3853 = vand.u32 %v99, 4294901760
    %v3854 = vsub.f32 %v99, %v3853
    %v3855 = vand.u32 %v3854, 4294901760
    %3856 = vmatprep.subr.mxu0 %v3855
    %v3857 = vand.u32 %v98, 4294901760
    %v3858 = vsub.f32 %v98, %v3857
    %v3859 = vand.u32 %v3858, 4294901760
    %3860 = vmatpush1.msra.mxu0 %v3859
    %v3861 = vand.u32 %v97, 4294901760
    %v3862 = vsub.f32 %v97, %v3861
    %v3863 = vand.u32 %v3862, 4294901760
    %3864 = vmatprep.subr.mxu0 %v3863
    %v3865 = vand.u32 %v96, 4294901760
    %v3866 = vsub.f32 %v96, %v3865
    %v3867 = vand.u32 %v3866, 4294901760
    %3868 = vmatpush1.msra.mxu0 %v3867
    %v3869 = vand.u32 %v95, 4294901760
    %v3870 = vsub.f32 %v95, %v3869
    %v3871 = vand.u32 %v3870, 4294901760
    %3872 = vmatprep.subr.mxu0 %v3871
    %v3873 = vand.u32 %v94, 4294901760
    %v3874 = vsub.f32 %v94, %v3873
    %v3875 = vand.u32 %v3874, 4294901760
    %3876 = vmatpush1.msra.mxu0 %v3875
    %v3877 = vand.u32 %v93, 4294901760
    %v3878 = vsub.f32 %v93, %v3877
    %v3879 = vand.u32 %v3878, 4294901760
    %3880 = vmatprep.subr.mxu0 %v3879
    %v3881 = vand.u32 %v92, 4294901760
    %v3882 = vsub.f32 %v92, %v3881
    %v3883 = vand.u32 %v3882, 4294901760
    %3884 = vmatpush1.msra.mxu0 %v3883
    %v3885 = vand.u32 %v91, 4294901760
    %v3886 = vsub.f32 %v91, %v3885
    %v3887 = vand.u32 %v3886, 4294901760
    %3888 = vmatprep.subr.mxu0 %v3887
    %v3889 = vand.u32 %v90, 4294901760
    %v3890 = vsub.f32 %v90, %v3889
    %v3891 = vand.u32 %v3890, 4294901760
    %3892 = vmatpush1.msra.mxu0 %v3891
    %v3893 = vand.u32 %v89, 4294901760
    %v3894 = vsub.f32 %v89, %v3893
    %v3895 = vand.u32 %v3894, 4294901760
    %3896 = vmatprep.subr.mxu0 %v3895
    %v3897 = vand.u32 %v88, 4294901760
    %v3898 = vsub.f32 %v88, %v3897
    %v3899 = vand.u32 %v3898, 4294901760
    %3900 = vmatpush1.msra.mxu0 %v3899
    %v3901 = vand.u32 %v87, 4294901760
    %v3902 = vsub.f32 %v87, %v3901
    %v3903 = vand.u32 %v3902, 4294901760
    %3904 = vmatprep.subr.mxu0 %v3903
    %v3905 = vand.u32 %v86, 4294901760
    %v3906 = vsub.f32 %v86, %v3905
    %v3907 = vand.u32 %v3906, 4294901760
    %3908 = vmatpush1.msra.mxu0 %v3907
    %v3909 = vand.u32 %v85, 4294901760
    %v3910 = vsub.f32 %v85, %v3909
    %v3911 = vand.u32 %v3910, 4294901760
    %3912 = vmatprep.subr.mxu0 %v3911
    %v3913 = vand.u32 %v84, 4294901760
    %v3914 = vsub.f32 %v84, %v3913
    %v3915 = vand.u32 %v3914, 4294901760
    %3916 = vmatpush1.msra.mxu0 %v3915
    %v3917 = vand.u32 %v83, 4294901760
    %v3918 = vsub.f32 %v83, %v3917
    %v3919 = vand.u32 %v3918, 4294901760
    %3920 = vmatprep.subr.mxu0 %v3919
    %v3921 = vand.u32 %v82, 4294901760
    %v3922 = vsub.f32 %v82, %v3921
    %v3923 = vand.u32 %v3922, 4294901760
    %3924 = vmatpush1.msra.mxu0 %v3923
    %v3925 = vand.u32 %v81, 4294901760
    %v3926 = vsub.f32 %v81, %v3925
    %v3927 = vand.u32 %v3926, 4294901760
    %3928 = vmatprep.subr.mxu0 %v3927
    %v3929 = vand.u32 %v80, 4294901760
    %v3930 = vsub.f32 %v80, %v3929
    %v3931 = vand.u32 %v3930, 4294901760
    %3932 = vmatpush1.msra.mxu0 %v3931
    %v3933 = vand.u32 %v79, 4294901760
    %v3934 = vsub.f32 %v79, %v3933
    %v3935 = vand.u32 %v3934, 4294901760
    %3936 = vmatprep.subr.mxu0 %v3935
    %v3937 = vand.u32 %v78, 4294901760
    %v3938 = vsub.f32 %v78, %v3937
    %v3939 = vand.u32 %v3938, 4294901760
    %3940 = vmatpush1.msra.mxu0 %v3939
    %v3941 = vand.u32 %v77, 4294901760
    %v3942 = vsub.f32 %v77, %v3941
    %v3943 = vand.u32 %v3942, 4294901760
    %3944 = vmatprep.subr.mxu0 %v3943
    %v3945 = vand.u32 %v76, 4294901760
    %v3946 = vsub.f32 %v76, %v3945
    %v3947 = vand.u32 %v3946, 4294901760
    %3948 = vmatpush1.msra.mxu0 %v3947
    %v3949 = vand.u32 %v75, 4294901760
    %v3950 = vsub.f32 %v75, %v3949
    %v3951 = vand.u32 %v3950, 4294901760
    %3952 = vmatprep.subr.mxu0 %v3951
    %v3953 = vand.u32 %v74, 4294901760
    %v3954 = vsub.f32 %v74, %v3953
    %v3955 = vand.u32 %v3954, 4294901760
    %3956 = vmatpush1.msra.mxu0 %v3955
    %v3957 = vand.u32 %v73, 4294901760
    %v3958 = vsub.f32 %v73, %v3957
    %v3959 = vand.u32 %v3958, 4294901760
    %3960 = vmatprep.subr.mxu0 %v3959
    %v3961 = vand.u32 %v72, 4294901760
    %v3962 = vsub.f32 %v72, %v3961
    %v3963 = vand.u32 %v3962, 4294901760
    %3964 = vmatpush1.msra.mxu0 %v3963
    %v3965 = vand.u32 %v71, 4294901760
    %v3966 = vsub.f32 %v71, %v3965
    %v3967 = vand.u32 %v3966, 4294901760
    %3968 = vmatprep.subr.mxu0 %v3967
    %v3969 = vand.u32 %v70, 4294901760
    %v3970 = vsub.f32 %v70, %v3969
    %v3971 = vand.u32 %v3970, 4294901760
    %3972 = vmatpush1.msra.mxu0 %v3971
    %v3973 = vand.u32 %v133, 4294901760
    %v3974 = vsub.f32 %v133, %v3973
    %v3975 = vand.u32 %v3974, 4294901760
    %3976 = vmatprep.subr.mxu0 %v3975
    %v3977 = vand.u32 %v132, 4294901760
    %v3978 = vsub.f32 %v132, %v3977
    %v3979 = vand.u32 %v3978, 4294901760
    %3980 = vmatpush2.msra.mxu0 %v3979
    %v3981 = vand.u32 %v131, 4294901760
    %v3982 = vsub.f32 %v131, %v3981
    %v3983 = vand.u32 %v3982, 4294901760
    %3984 = vmatprep.subr.mxu0 %v3983
    %v3985 = vand.u32 %v130, 4294901760
    %v3986 = vsub.f32 %v130, %v3985
    %v3987 = vand.u32 %v3986, 4294901760
    %3988 = vmatpush2.msra.mxu0 %v3987
    %v3989 = vand.u32 %v129, 4294901760
    %v3990 = vsub.f32 %v129, %v3989
    %v3991 = vand.u32 %v3990, 4294901760
    %3992 = vmatprep.subr.mxu0 %v3991
    %v3993 = vand.u32 %v128, 4294901760
    %v3994 = vsub.f32 %v128, %v3993
    %v3995 = vand.u32 %v3994, 4294901760
    %3996 = vmatpush2.msra.mxu0 %v3995
    %v3997 = vand.u32 %v127, 4294901760
    %v3998 = vsub.f32 %v127, %v3997
    %v3999 = vand.u32 %v3998, 4294901760
    %4000 = vmatprep.subr.mxu0 %v3999
    %v4001 = vand.u32 %v126, 4294901760
    %v4002 = vsub.f32 %v126, %v4001
    %v4003 = vand.u32 %v4002, 4294901760
    %4004 = vmatpush2.msra.mxu0 %v4003
    %v4005 = vand.u32 %v125, 4294901760
    %v4006 = vsub.f32 %v125, %v4005
    %v4007 = vand.u32 %v4006, 4294901760
    %4008 = vmatprep.subr.mxu0 %v4007
    %v4009 = vand.u32 %v124, 4294901760
    %v4010 = vsub.f32 %v124, %v4009
    %v4011 = vand.u32 %v4010, 4294901760
    %4012 = vmatpush2.msra.mxu0 %v4011
    %v4013 = vand.u32 %v123, 4294901760
    %v4014 = vsub.f32 %v123, %v4013
    %v4015 = vand.u32 %v4014, 4294901760
    %4016 = vmatprep.subr.mxu0 %v4015
    %v4017 = vand.u32 %v122, 4294901760
    %v4018 = vsub.f32 %v122, %v4017
    %v4019 = vand.u32 %v4018, 4294901760
    %4020 = vmatpush2.msra.mxu0 %v4019
    %v4021 = vand.u32 %v121, 4294901760
    %v4022 = vsub.f32 %v121, %v4021
    %v4023 = vand.u32 %v4022, 4294901760
    %4024 = vmatprep.subr.mxu0 %v4023
    %v4025 = vand.u32 %v120, 4294901760
    %v4026 = vsub.f32 %v120, %v4025
    %v4027 = vand.u32 %v4026, 4294901760
    %4028 = vmatpush2.msra.mxu0 %v4027
    %v4029 = vand.u32 %v119, 4294901760
    %v4030 = vsub.f32 %v119, %v4029
    %v4031 = vand.u32 %v4030, 4294901760
    %4032 = vmatprep.subr.mxu0 %v4031
    %v4033 = vand.u32 %v118, 4294901760
    %v4034 = vsub.f32 %v118, %v4033
    %v4035 = vand.u32 %v4034, 4294901760
    %4036 = vmatpush2.msra.mxu0 %v4035
    %v4037 = vand.u32 %v117, 4294901760
    %v4038 = vsub.f32 %v117, %v4037
    %v4039 = vand.u32 %v4038, 4294901760
    %4040 = vmatprep.subr.mxu0 %v4039
    %v4041 = vand.u32 %v116, 4294901760
    %v4042 = vsub.f32 %v116, %v4041
    %v4043 = vand.u32 %v4042, 4294901760
    %4044 = vmatpush2.msra.mxu0 %v4043
    %v4045 = vand.u32 %v115, 4294901760
    %v4046 = vsub.f32 %v115, %v4045
    %v4047 = vand.u32 %v4046, 4294901760
    %4048 = vmatprep.subr.mxu0 %v4047
    %v4049 = vand.u32 %v114, 4294901760
    %v4050 = vsub.f32 %v114, %v4049
    %v4051 = vand.u32 %v4050, 4294901760
    %4052 = vmatpush2.msra.mxu0 %v4051
    %v4053 = vand.u32 %v113, 4294901760
    %v4054 = vsub.f32 %v113, %v4053
    %v4055 = vand.u32 %v4054, 4294901760
    %4056 = vmatprep.subr.mxu0 %v4055
    %v4057 = vand.u32 %v112, 4294901760
    %v4058 = vsub.f32 %v112, %v4057
    %v4059 = vand.u32 %v4058, 4294901760
    %4060 = vmatpush2.msra.mxu0 %v4059
    %v4061 = vand.u32 %v111, 4294901760
    %v4062 = vsub.f32 %v111, %v4061
    %v4063 = vand.u32 %v4062, 4294901760
    %4064 = vmatprep.subr.mxu0 %v4063
    %v4065 = vand.u32 %v110, 4294901760
    %v4066 = vsub.f32 %v110, %v4065
    %v4067 = vand.u32 %v4066, 4294901760
    %4068 = vmatpush2.msra.mxu0 %v4067
    %v4069 = vand.u32 %v109, 4294901760
    %v4070 = vsub.f32 %v109, %v4069
    %v4071 = vand.u32 %v4070, 4294901760
    %4072 = vmatprep.subr.mxu0 %v4071
    %v4073 = vand.u32 %v108, 4294901760
    %v4074 = vsub.f32 %v108, %v4073
    %v4075 = vand.u32 %v4074, 4294901760
    %4076 = vmatpush2.msra.mxu0 %v4075
    %v4077 = vand.u32 %v107, 4294901760
    %v4078 = vsub.f32 %v107, %v4077
    %v4079 = vand.u32 %v4078, 4294901760
    %4080 = vmatprep.subr.mxu0 %v4079
    %v4081 = vand.u32 %v106, 4294901760
    %v4082 = vsub.f32 %v106, %v4081
    %v4083 = vand.u32 %v4082, 4294901760
    %4084 = vmatpush2.msra.mxu0 %v4083
    %v4085 = vand.u32 %v105, 4294901760
    %v4086 = vsub.f32 %v105, %v4085
    %v4087 = vand.u32 %v4086, 4294901760
    %4088 = vmatprep.subr.mxu0 %v4087
    %v4089 = vand.u32 %v104, 4294901760
    %v4090 = vsub.f32 %v104, %v4089
    %v4091 = vand.u32 %v4090, 4294901760
    %4092 = vmatpush2.msra.mxu0 %v4091
    %v4093 = vand.u32 %v103, 4294901760
    %v4094 = vsub.f32 %v103, %v4093
    %v4095 = vand.u32 %v4094, 4294901760
    %4096 = vmatprep.subr.mxu0 %v4095
    %v4097 = vand.u32 %v102, 4294901760
    %v4098 = vsub.f32 %v102, %v4097
    %v4099 = vand.u32 %v4098, 4294901760
    %4100 = vmatpush2.msra.mxu0 %v4099
    %v4101 = vand.u32 %v2948, 4294901760
    %4102 = vmatprep.mubr.f32.mxu0 %v4101
    %v4103 = vand.u32 %v2947, 4294901760
    %4104 = vmatmul.mubr.f32.gmra.mxu0 %v4103
    %v4105 = vpop.f32.mrf.mxu0
    %v4106 = vadd.f32 %v3841, %v4105
    %v4107 = vpop.f32.mrf.mxu0
    %v4108 = vadd.f32 %v3843, %v4107
    %4109 = vdwg.mxu0
    %v4110 = vand.u32 %v101, 4294901760
    %4111 = vmatprep.subr.mxu0 %v4110
    %v4112 = vand.u32 %v100, 4294901760
    %4113 = vmatpush1.msra.mxu0 %v4112
    %v4114 = vand.u32 %v99, 4294901760
    %4115 = vmatprep.subr.mxu0 %v4114
    %v4116 = vand.u32 %v98, 4294901760
    %4117 = vmatpush1.msra.mxu0 %v4116
    %v4118 = vand.u32 %v97, 4294901760
    %4119 = vmatprep.subr.mxu0 %v4118
    %v4120 = vand.u32 %v96, 4294901760
    %4121 = vmatpush1.msra.mxu0 %v4120
    %v4122 = vand.u32 %v95, 4294901760
    %4123 = vmatprep.subr.mxu0 %v4122
    %v4124 = vand.u32 %v94, 4294901760
    %4125 = vmatpush1.msra.mxu0 %v4124
    %v4126 = vand.u32 %v93, 4294901760
    %4127 = vmatprep.subr.mxu0 %v4126
    %v4128 = vand.u32 %v92, 4294901760
    %4129 = vmatpush1.msra.mxu0 %v4128
    %v4130 = vand.u32 %v91, 4294901760
    %4131 = vmatprep.subr.mxu0 %v4130
    %v4132 = vand.u32 %v90, 4294901760
    %4133 = vmatpush1.msra.mxu0 %v4132
    %v4134 = vand.u32 %v89, 4294901760
    %4135 = vmatprep.subr.mxu0 %v4134
    %v4136 = vand.u32 %v88, 4294901760
    %4137 = vmatpush1.msra.mxu0 %v4136
    %v4138 = vand.u32 %v87, 4294901760
    %4139 = vmatprep.subr.mxu0 %v4138
    %v4140 = vand.u32 %v86, 4294901760
    %4141 = vmatpush1.msra.mxu0 %v4140
    %v4142 = vand.u32 %v85, 4294901760
    %4143 = vmatprep.subr.mxu0 %v4142
    %v4144 = vand.u32 %v84, 4294901760
    %4145 = vmatpush1.msra.mxu0 %v4144
    %v4146 = vand.u32 %v83, 4294901760
    %4147 = vmatprep.subr.mxu0 %v4146
    %v4148 = vand.u32 %v82, 4294901760
    %4149 = vmatpush1.msra.mxu0 %v4148
    %v4150 = vand.u32 %v81, 4294901760
    %4151 = vmatprep.subr.mxu0 %v4150
    %v4152 = vand.u32 %v80, 4294901760
    %4153 = vmatpush1.msra.mxu0 %v4152
    %v4154 = vand.u32 %v79, 4294901760
    %4155 = vmatprep.subr.mxu0 %v4154
    %v4156 = vand.u32 %v78, 4294901760
    %4157 = vmatpush1.msra.mxu0 %v4156
    %v4158 = vand.u32 %v77, 4294901760
    %4159 = vmatprep.subr.mxu0 %v4158
    %v4160 = vand.u32 %v76, 4294901760
    %4161 = vmatpush1.msra.mxu0 %v4160
    %v4162 = vand.u32 %v75, 4294901760
    %4163 = vmatprep.subr.mxu0 %v4162
    %v4164 = vand.u32 %v74, 4294901760
    %4165 = vmatpush1.msra.mxu0 %v4164
    %v4166 = vand.u32 %v73, 4294901760
    %4167 = vmatprep.subr.mxu0 %v4166
    %v4168 = vand.u32 %v72, 4294901760
    %4169 = vmatpush1.msra.mxu0 %v4168
    %v4170 = vand.u32 %v71, 4294901760
    %4171 = vmatprep.subr.mxu0 %v4170
    %v4172 = vand.u32 %v70, 4294901760
    %4173 = vmatpush1.msra.mxu0 %v4172
    %v4174 = vand.u32 %v133, 4294901760
    %4175 = vmatprep.subr.mxu0 %v4174
    %v4176 = vand.u32 %v132, 4294901760
    %4177 = vmatpush2.msra.mxu0 %v4176
    %v4178 = vand.u32 %v131, 4294901760
    %4179 = vmatprep.subr.mxu0 %v4178
    %v4180 = vand.u32 %v130, 4294901760
    %4181 = vmatpush2.msra.mxu0 %v4180
    %v4182 = vand.u32 %v129, 4294901760
    %4183 = vmatprep.subr.mxu0 %v4182
    %v4184 = vand.u32 %v128, 4294901760
    %4185 = vmatpush2.msra.mxu0 %v4184
    %v4186 = vand.u32 %v127, 4294901760
    %4187 = vmatprep.subr.mxu0 %v4186
    %v4188 = vand.u32 %v126, 4294901760
    %4189 = vmatpush2.msra.mxu0 %v4188
    %v4190 = vand.u32 %v125, 4294901760
    %4191 = vmatprep.subr.mxu0 %v4190
    %v4192 = vand.u32 %v124, 4294901760
    %4193 = vmatpush2.msra.mxu0 %v4192
    %v4194 = vand.u32 %v123, 4294901760
    %4195 = vmatprep.subr.mxu0 %v4194
    %v4196 = vand.u32 %v122, 4294901760
    %4197 = vmatpush2.msra.mxu0 %v4196
    %v4198 = vand.u32 %v121, 4294901760
    %4199 = vmatprep.subr.mxu0 %v4198
    %v4200 = vand.u32 %v120, 4294901760
    %4201 = vmatpush2.msra.mxu0 %v4200
    %v4202 = vand.u32 %v119, 4294901760
    %4203 = vmatprep.subr.mxu0 %v4202
    %v4204 = vand.u32 %v118, 4294901760
    %4205 = vmatpush2.msra.mxu0 %v4204
    %v4206 = vand.u32 %v117, 4294901760
    %4207 = vmatprep.subr.mxu0 %v4206
    %v4208 = vand.u32 %v116, 4294901760
    %4209 = vmatpush2.msra.mxu0 %v4208
    %v4210 = vand.u32 %v115, 4294901760
    %4211 = vmatprep.subr.mxu0 %v4210
    %v4212 = vand.u32 %v114, 4294901760
    %4213 = vmatpush2.msra.mxu0 %v4212
    %v4214 = vand.u32 %v113, 4294901760
    %4215 = vmatprep.subr.mxu0 %v4214
    %v4216 = vand.u32 %v112, 4294901760
    %4217 = vmatpush2.msra.mxu0 %v4216
    %v4218 = vand.u32 %v111, 4294901760
    %4219 = vmatprep.subr.mxu0 %v4218
    %v4220 = vand.u32 %v110, 4294901760
    %4221 = vmatpush2.msra.mxu0 %v4220
    %v4222 = vand.u32 %v109, 4294901760
    %4223 = vmatprep.subr.mxu0 %v4222
    %v4224 = vand.u32 %v108, 4294901760
    %4225 = vmatpush2.msra.mxu0 %v4224
    %v4226 = vand.u32 %v107, 4294901760
    %4227 = vmatprep.subr.mxu0 %v4226
    %v4228 = vand.u32 %v106, 4294901760
    %4229 = vmatpush2.msra.mxu0 %v4228
    %v4230 = vand.u32 %v105, 4294901760
    %4231 = vmatprep.subr.mxu0 %v4230
    %v4232 = vand.u32 %v104, 4294901760
    %4233 = vmatpush2.msra.mxu0 %v4232
    %v4234 = vand.u32 %v103, 4294901760
    %4235 = vmatprep.subr.mxu0 %v4234
    %v4236 = vand.u32 %v102, 4294901760
    %4237 = vmatpush2.msra.mxu0 %v4236
    %v4238 = vand.u32 %v2948, 4294901760
    %4239 = vmatprep.mubr.f32.mxu0 %v4238
    %v4240 = vand.u32 %v2947, 4294901760
    %4241 = vmatmul.mubr.f32.gmra.mxu0 %v4240
    %v4242 = vpop.f32.mrf.mxu0
    %v4243 = vadd.f32 %v4106, %v4242
    %v4244 = vpop.f32.mrf.mxu0
    %v4245 = vadd.f32 %v4108, %v4244
    %4246 = vdwg.mxu0
    %v4247 = vand.u32 %v165, 4294901760
    %4248 = vmatprep.subr.mxu0 %v4247
    %v4249 = vand.u32 %v164, 4294901760
    %4250 = vmatpush1.msra.mxu0 %v4249
    %v4251 = vand.u32 %v163, 4294901760
    %4252 = vmatprep.subr.mxu0 %v4251
    %v4253 = vand.u32 %v162, 4294901760
    %4254 = vmatpush1.msra.mxu0 %v4253
    %v4255 = vand.u32 %v161, 4294901760
    %4256 = vmatprep.subr.mxu0 %v4255
    %v4257 = vand.u32 %v160, 4294901760
    %4258 = vmatpush1.msra.mxu0 %v4257
    %v4259 = vand.u32 %v159, 4294901760
    %4260 = vmatprep.subr.mxu0 %v4259
    %v4261 = vand.u32 %v158, 4294901760
    %4262 = vmatpush1.msra.mxu0 %v4261
    %v4263 = vand.u32 %v157, 4294901760
    %4264 = vmatprep.subr.mxu0 %v4263
    %v4265 = vand.u32 %v156, 4294901760
    %4266 = vmatpush1.msra.mxu0 %v4265
    %v4267 = vand.u32 %v155, 4294901760
    %4268 = vmatprep.subr.mxu0 %v4267
    %v4269 = vand.u32 %v154, 4294901760
    %4270 = vmatpush1.msra.mxu0 %v4269
    %v4271 = vand.u32 %v153, 4294901760
    %4272 = vmatprep.subr.mxu0 %v4271
    %v4273 = vand.u32 %v152, 4294901760
    %4274 = vmatpush1.msra.mxu0 %v4273
    %v4275 = vand.u32 %v151, 4294901760
    %4276 = vmatprep.subr.mxu0 %v4275
    %v4277 = vand.u32 %v150, 4294901760
    %4278 = vmatpush1.msra.mxu0 %v4277
    %v4279 = vand.u32 %v149, 4294901760
    %4280 = vmatprep.subr.mxu0 %v4279
    %v4281 = vand.u32 %v148, 4294901760
    %4282 = vmatpush1.msra.mxu0 %v4281
    %v4283 = vand.u32 %v147, 4294901760
    %4284 = vmatprep.subr.mxu0 %v4283
    %v4285 = vand.u32 %v146, 4294901760
    %4286 = vmatpush1.msra.mxu0 %v4285
    %v4287 = vand.u32 %v145, 4294901760
    %4288 = vmatprep.subr.mxu0 %v4287
    %v4289 = vand.u32 %v144, 4294901760
    %4290 = vmatpush1.msra.mxu0 %v4289
    %v4291 = vand.u32 %v143, 4294901760
    %4292 = vmatprep.subr.mxu0 %v4291
    %v4293 = vand.u32 %v142, 4294901760
    %4294 = vmatpush1.msra.mxu0 %v4293
    %v4295 = vand.u32 %v141, 4294901760
    %4296 = vmatprep.subr.mxu0 %v4295
    %v4297 = vand.u32 %v140, 4294901760
    %4298 = vmatpush1.msra.mxu0 %v4297
    %v4299 = vand.u32 %v139, 4294901760
    %4300 = vmatprep.subr.mxu0 %v4299
    %v4301 = vand.u32 %v138, 4294901760
    %4302 = vmatpush1.msra.mxu0 %v4301
    %v4303 = vand.u32 %v137, 4294901760
    %4304 = vmatprep.subr.mxu0 %v4303
    %v4305 = vand.u32 %v136, 4294901760
    %4306 = vmatpush1.msra.mxu0 %v4305
    %v4307 = vand.u32 %v135, 4294901760
    %4308 = vmatprep.subr.mxu0 %v4307
    %v4309 = vand.u32 %v134, 4294901760
    %4310 = vmatpush1.msra.mxu0 %v4309
    %v4311 = vand.u32 %v197, 4294901760
    %4312 = vmatprep.subr.mxu0 %v4311
    %v4313 = vand.u32 %v196, 4294901760
    %4314 = vmatpush2.msra.mxu0 %v4313
    %v4315 = vand.u32 %v195, 4294901760
    %4316 = vmatprep.subr.mxu0 %v4315
    %v4317 = vand.u32 %v194, 4294901760
    %4318 = vmatpush2.msra.mxu0 %v4317
    %v4319 = vand.u32 %v193, 4294901760
    %4320 = vmatprep.subr.mxu0 %v4319
    %v4321 = vand.u32 %v192, 4294901760
    %4322 = vmatpush2.msra.mxu0 %v4321
    %v4323 = vand.u32 %v191, 4294901760
    %4324 = vmatprep.subr.mxu0 %v4323
    %v4325 = vand.u32 %v190, 4294901760
    %4326 = vmatpush2.msra.mxu0 %v4325
    %v4327 = vand.u32 %v189, 4294901760
    %4328 = vmatprep.subr.mxu0 %v4327
    %v4329 = vand.u32 %v188, 4294901760
    %4330 = vmatpush2.msra.mxu0 %v4329
    %v4331 = vand.u32 %v187, 4294901760
    %4332 = vmatprep.subr.mxu0 %v4331
    %v4333 = vand.u32 %v186, 4294901760
    %4334 = vmatpush2.msra.mxu0 %v4333
    %v4335 = vand.u32 %v185, 4294901760
    %4336 = vmatprep.subr.mxu0 %v4335
    %v4337 = vand.u32 %v184, 4294901760
    %4338 = vmatpush2.msra.mxu0 %v4337
    %v4339 = vand.u32 %v183, 4294901760
    %4340 = vmatprep.subr.mxu0 %v4339
    %v4341 = vand.u32 %v182, 4294901760
    %4342 = vmatpush2.msra.mxu0 %v4341
    %v4343 = vand.u32 %v181, 4294901760
    %4344 = vmatprep.subr.mxu0 %v4343
    %v4345 = vand.u32 %v180, 4294901760
    %4346 = vmatpush2.msra.mxu0 %v4345
    %v4347 = vand.u32 %v179, 4294901760
    %4348 = vmatprep.subr.mxu0 %v4347
    %v4349 = vand.u32 %v178, 4294901760
    %4350 = vmatpush2.msra.mxu0 %v4349
    %v4351 = vand.u32 %v177, 4294901760
    %4352 = vmatprep.subr.mxu0 %v4351
    %v4353 = vand.u32 %v176, 4294901760
    %4354 = vmatpush2.msra.mxu0 %v4353
    %v4355 = vand.u32 %v175, 4294901760
    %4356 = vmatprep.subr.mxu0 %v4355
    %v4357 = vand.u32 %v174, 4294901760
    %4358 = vmatpush2.msra.mxu0 %v4357
    %v4359 = vand.u32 %v173, 4294901760
    %4360 = vmatprep.subr.mxu0 %v4359
    %v4361 = vand.u32 %v172, 4294901760
    %4362 = vmatpush2.msra.mxu0 %v4361
    %v4363 = vand.u32 %v171, 4294901760
    %4364 = vmatprep.subr.mxu0 %v4363
    %v4365 = vand.u32 %v170, 4294901760
    %4366 = vmatpush2.msra.mxu0 %v4365
    %v4367 = vand.u32 %v169, 4294901760
    %4368 = vmatprep.subr.mxu0 %v4367
    %v4369 = vand.u32 %v168, 4294901760
    %4370 = vmatpush2.msra.mxu0 %v4369
    %v4371 = vand.u32 %v167, 4294901760
    %4372 = vmatprep.subr.mxu0 %v4371
    %v4373 = vand.u32 %v166, 4294901760
    %4374 = vmatpush2.msra.mxu0 %v4373
    %v4375 = vand.u32 %v2962, 4294901760
    %v4376 = vsub.f32 %v2962, %v4375
    %v4377 = vand.u32 %v4376, 4294901760
    %v4378 = vsub.f32 %v4376, %v4377
    %v4379 = vand.u32 %v4378, 4294901760
    %4380 = vmatprep.mubr.f32.mxu0 %v4379
    %v4381 = vand.u32 %v2955, 4294901760
    %v4382 = vsub.f32 %v2955, %v4381
    %v4383 = vand.u32 %v4382, 4294901760
    %v4384 = vsub.f32 %v4382, %v4383
    %v4385 = vand.u32 %v4384, 4294901760
    %4386 = vmatmul.mubr.f32.gmra.mxu0 %v4385
    %v4387 = vpop.f32.mrf.mxu0
    %v4388 = vadd.f32 %v4243, %v4387
    %v4389 = vpop.f32.mrf.mxu0
    %v4390 = vadd.f32 %v4245, %v4389
    %4391 = vdwg.mxu0
    %v4392 = vand.u32 %v165, 4294901760
    %v4393 = vsub.f32 %v165, %v4392
    %v4394 = vand.u32 %v4393, 4294901760
    %v4395 = vsub.f32 %v4393, %v4394
    %v4396 = vand.u32 %v4395, 4294901760
    %4397 = vmatprep.subr.mxu0 %v4396
    %v4398 = vand.u32 %v164, 4294901760
    %v4399 = vsub.f32 %v164, %v4398
    %v4400 = vand.u32 %v4399, 4294901760
    %v4401 = vsub.f32 %v4399, %v4400
    %v4402 = vand.u32 %v4401, 4294901760
    %4403 = vmatpush1.msra.mxu0 %v4402
    %v4404 = vand.u32 %v163, 4294901760
    %v4405 = vsub.f32 %v163, %v4404
    %v4406 = vand.u32 %v4405, 4294901760
    %v4407 = vsub.f32 %v4405, %v4406
    %v4408 = vand.u32 %v4407, 4294901760
    %4409 = vmatprep.subr.mxu0 %v4408
    %v4410 = vand.u32 %v162, 4294901760
    %v4411 = vsub.f32 %v162, %v4410
    %v4412 = vand.u32 %v4411, 4294901760
    %v4413 = vsub.f32 %v4411, %v4412
    %v4414 = vand.u32 %v4413, 4294901760
    %4415 = vmatpush1.msra.mxu0 %v4414
    %v4416 = vand.u32 %v161, 4294901760
    %v4417 = vsub.f32 %v161, %v4416
    %v4418 = vand.u32 %v4417, 4294901760
    %v4419 = vsub.f32 %v4417, %v4418
    %v4420 = vand.u32 %v4419, 4294901760
    %4421 = vmatprep.subr.mxu0 %v4420
    %v4422 = vand.u32 %v160, 4294901760
    %v4423 = vsub.f32 %v160, %v4422
    %v4424 = vand.u32 %v4423, 4294901760
    %v4425 = vsub.f32 %v4423, %v4424
    %v4426 = vand.u32 %v4425, 4294901760
    %4427 = vmatpush1.msra.mxu0 %v4426
    %v4428 = vand.u32 %v159, 4294901760
    %v4429 = vsub.f32 %v159, %v4428
    %v4430 = vand.u32 %v4429, 4294901760
    %v4431 = vsub.f32 %v4429, %v4430
    %v4432 = vand.u32 %v4431, 4294901760
    %4433 = vmatprep.subr.mxu0 %v4432
    %v4434 = vand.u32 %v158, 4294901760
    %v4435 = vsub.f32 %v158, %v4434
    %v4436 = vand.u32 %v4435, 4294901760
    %v4437 = vsub.f32 %v4435, %v4436
    %v4438 = vand.u32 %v4437, 4294901760
    %4439 = vmatpush1.msra.mxu0 %v4438
    %v4440 = vand.u32 %v157, 4294901760
    %v4441 = vsub.f32 %v157, %v4440
    %v4442 = vand.u32 %v4441, 4294901760
    %v4443 = vsub.f32 %v4441, %v4442
    %v4444 = vand.u32 %v4443, 4294901760
    %4445 = vmatprep.subr.mxu0 %v4444
    %v4446 = vand.u32 %v156, 4294901760
    %v4447 = vsub.f32 %v156, %v4446
    %v4448 = vand.u32 %v4447, 4294901760
    %v4449 = vsub.f32 %v4447, %v4448
    %v4450 = vand.u32 %v4449, 4294901760
    %4451 = vmatpush1.msra.mxu0 %v4450
    %v4452 = vand.u32 %v155, 4294901760
    %v4453 = vsub.f32 %v155, %v4452
    %v4454 = vand.u32 %v4453, 4294901760
    %v4455 = vsub.f32 %v4453, %v4454
    %v4456 = vand.u32 %v4455, 4294901760
    %4457 = vmatprep.subr.mxu0 %v4456
    %v4458 = vand.u32 %v154, 4294901760
    %v4459 = vsub.f32 %v154, %v4458
    %v4460 = vand.u32 %v4459, 4294901760
    %v4461 = vsub.f32 %v4459, %v4460
    %v4462 = vand.u32 %v4461, 4294901760
    %4463 = vmatpush1.msra.mxu0 %v4462
    %v4464 = vand.u32 %v153, 4294901760
    %v4465 = vsub.f32 %v153, %v4464
    %v4466 = vand.u32 %v4465, 4294901760
    %v4467 = vsub.f32 %v4465, %v4466
    %v4468 = vand.u32 %v4467, 4294901760
    %4469 = vmatprep.subr.mxu0 %v4468
    %v4470 = vand.u32 %v152, 4294901760
    %v4471 = vsub.f32 %v152, %v4470
    %v4472 = vand.u32 %v4471, 4294901760
    %v4473 = vsub.f32 %v4471, %v4472
    %v4474 = vand.u32 %v4473, 4294901760
    %4475 = vmatpush1.msra.mxu0 %v4474
    %v4476 = vand.u32 %v151, 4294901760
    %v4477 = vsub.f32 %v151, %v4476
    %v4478 = vand.u32 %v4477, 4294901760
    %v4479 = vsub.f32 %v4477, %v4478
    %v4480 = vand.u32 %v4479, 4294901760
    %4481 = vmatprep.subr.mxu0 %v4480
    %v4482 = vand.u32 %v150, 4294901760
    %v4483 = vsub.f32 %v150, %v4482
    %v4484 = vand.u32 %v4483, 4294901760
    %v4485 = vsub.f32 %v4483, %v4484
    %v4486 = vand.u32 %v4485, 4294901760
    %4487 = vmatpush1.msra.mxu0 %v4486
    %v4488 = vand.u32 %v149, 4294901760
    %v4489 = vsub.f32 %v149, %v4488
    %v4490 = vand.u32 %v4489, 4294901760
    %v4491 = vsub.f32 %v4489, %v4490
    %v4492 = vand.u32 %v4491, 4294901760
    %4493 = vmatprep.subr.mxu0 %v4492
    %v4494 = vand.u32 %v148, 4294901760
    %v4495 = vsub.f32 %v148, %v4494
    %v4496 = vand.u32 %v4495, 4294901760
    %v4497 = vsub.f32 %v4495, %v4496
    %v4498 = vand.u32 %v4497, 4294901760
    %4499 = vmatpush1.msra.mxu0 %v4498
    %v4500 = vand.u32 %v147, 4294901760
    %v4501 = vsub.f32 %v147, %v4500
    %v4502 = vand.u32 %v4501, 4294901760
    %v4503 = vsub.f32 %v4501, %v4502
    %v4504 = vand.u32 %v4503, 4294901760
    %4505 = vmatprep.subr.mxu0 %v4504
    %v4506 = vand.u32 %v146, 4294901760
    %v4507 = vsub.f32 %v146, %v4506
    %v4508 = vand.u32 %v4507, 4294901760
    %v4509 = vsub.f32 %v4507, %v4508
    %v4510 = vand.u32 %v4509, 4294901760
    %4511 = vmatpush1.msra.mxu0 %v4510
    %v4512 = vand.u32 %v145, 4294901760
    %v4513 = vsub.f32 %v145, %v4512
    %v4514 = vand.u32 %v4513, 4294901760
    %v4515 = vsub.f32 %v4513, %v4514
    %v4516 = vand.u32 %v4515, 4294901760
    %4517 = vmatprep.subr.mxu0 %v4516
    %v4518 = vand.u32 %v144, 4294901760
    %v4519 = vsub.f32 %v144, %v4518
    %v4520 = vand.u32 %v4519, 4294901760
    %v4521 = vsub.f32 %v4519, %v4520
    %v4522 = vand.u32 %v4521, 4294901760
    %4523 = vmatpush1.msra.mxu0 %v4522
    %v4524 = vand.u32 %v143, 4294901760
    %v4525 = vsub.f32 %v143, %v4524
    %v4526 = vand.u32 %v4525, 4294901760
    %v4527 = vsub.f32 %v4525, %v4526
    %v4528 = vand.u32 %v4527, 4294901760
    %4529 = vmatprep.subr.mxu0 %v4528
    %v4530 = vand.u32 %v142, 4294901760
    %v4531 = vsub.f32 %v142, %v4530
    %v4532 = vand.u32 %v4531, 4294901760
    %v4533 = vsub.f32 %v4531, %v4532
    %v4534 = vand.u32 %v4533, 4294901760
    %4535 = vmatpush1.msra.mxu0 %v4534
    %v4536 = vand.u32 %v141, 4294901760
    %v4537 = vsub.f32 %v141, %v4536
    %v4538 = vand.u32 %v4537, 4294901760
    %v4539 = vsub.f32 %v4537, %v4538
    %v4540 = vand.u32 %v4539, 4294901760
    %4541 = vmatprep.subr.mxu0 %v4540
    %v4542 = vand.u32 %v140, 4294901760
    %v4543 = vsub.f32 %v140, %v4542
    %v4544 = vand.u32 %v4543, 4294901760
    %v4545 = vsub.f32 %v4543, %v4544
    %v4546 = vand.u32 %v4545, 4294901760
    %4547 = vmatpush1.msra.mxu0 %v4546
    %v4548 = vand.u32 %v139, 4294901760
    %v4549 = vsub.f32 %v139, %v4548
    %v4550 = vand.u32 %v4549, 4294901760
    %v4551 = vsub.f32 %v4549, %v4550
    %v4552 = vand.u32 %v4551, 4294901760
    %4553 = vmatprep.subr.mxu0 %v4552
    %v4554 = vand.u32 %v138, 4294901760
    %v4555 = vsub.f32 %v138, %v4554
    %v4556 = vand.u32 %v4555, 4294901760
    %v4557 = vsub.f32 %v4555, %v4556
    %v4558 = vand.u32 %v4557, 4294901760
    %4559 = vmatpush1.msra.mxu0 %v4558
    %v4560 = vand.u32 %v137, 4294901760
    %v4561 = vsub.f32 %v137, %v4560
    %v4562 = vand.u32 %v4561, 4294901760
    %v4563 = vsub.f32 %v4561, %v4562
    %v4564 = vand.u32 %v4563, 4294901760
    %4565 = vmatprep.subr.mxu0 %v4564
    %v4566 = vand.u32 %v136, 4294901760
    %v4567 = vsub.f32 %v136, %v4566
    %v4568 = vand.u32 %v4567, 4294901760
    %v4569 = vsub.f32 %v4567, %v4568
    %v4570 = vand.u32 %v4569, 4294901760
    %4571 = vmatpush1.msra.mxu0 %v4570
    %v4572 = vand.u32 %v135, 4294901760
    %v4573 = vsub.f32 %v135, %v4572
    %v4574 = vand.u32 %v4573, 4294901760
    %v4575 = vsub.f32 %v4573, %v4574
    %v4576 = vand.u32 %v4575, 4294901760
    %4577 = vmatprep.subr.mxu0 %v4576
    %v4578 = vand.u32 %v134, 4294901760
    %v4579 = vsub.f32 %v134, %v4578
    %v4580 = vand.u32 %v4579, 4294901760
    %v4581 = vsub.f32 %v4579, %v4580
    %v4582 = vand.u32 %v4581, 4294901760
    %4583 = vmatpush1.msra.mxu0 %v4582
    %v4584 = vand.u32 %v197, 4294901760
    %v4585 = vsub.f32 %v197, %v4584
    %v4586 = vand.u32 %v4585, 4294901760
    %v4587 = vsub.f32 %v4585, %v4586
    %v4588 = vand.u32 %v4587, 4294901760
    %4589 = vmatprep.subr.mxu0 %v4588
    %v4590 = vand.u32 %v196, 4294901760
    %v4591 = vsub.f32 %v196, %v4590
    %v4592 = vand.u32 %v4591, 4294901760
    %v4593 = vsub.f32 %v4591, %v4592
    %v4594 = vand.u32 %v4593, 4294901760
    %4595 = vmatpush2.msra.mxu0 %v4594
    %v4596 = vand.u32 %v195, 4294901760
    %v4597 = vsub.f32 %v195, %v4596
    %v4598 = vand.u32 %v4597, 4294901760
    %v4599 = vsub.f32 %v4597, %v4598
    %v4600 = vand.u32 %v4599, 4294901760
    %4601 = vmatprep.subr.mxu0 %v4600
    %v4602 = vand.u32 %v194, 4294901760
    %v4603 = vsub.f32 %v194, %v4602
    %v4604 = vand.u32 %v4603, 4294901760
    %v4605 = vsub.f32 %v4603, %v4604
    %v4606 = vand.u32 %v4605, 4294901760
    %4607 = vmatpush2.msra.mxu0 %v4606
    %v4608 = vand.u32 %v193, 4294901760
    %v4609 = vsub.f32 %v193, %v4608
    %v4610 = vand.u32 %v4609, 4294901760
    %v4611 = vsub.f32 %v4609, %v4610
    %v4612 = vand.u32 %v4611, 4294901760
    %4613 = vmatprep.subr.mxu0 %v4612
    %v4614 = vand.u32 %v192, 4294901760
    %v4615 = vsub.f32 %v192, %v4614
    %v4616 = vand.u32 %v4615, 4294901760
    %v4617 = vsub.f32 %v4615, %v4616
    %v4618 = vand.u32 %v4617, 4294901760
    %4619 = vmatpush2.msra.mxu0 %v4618
    %v4620 = vand.u32 %v191, 4294901760
    %v4621 = vsub.f32 %v191, %v4620
    %v4622 = vand.u32 %v4621, 4294901760
    %v4623 = vsub.f32 %v4621, %v4622
    %v4624 = vand.u32 %v4623, 4294901760
    %4625 = vmatprep.subr.mxu0 %v4624
    %v4626 = vand.u32 %v190, 4294901760
    %v4627 = vsub.f32 %v190, %v4626
    %v4628 = vand.u32 %v4627, 4294901760
    %v4629 = vsub.f32 %v4627, %v4628
    %v4630 = vand.u32 %v4629, 4294901760
    %4631 = vmatpush2.msra.mxu0 %v4630
    %v4632 = vand.u32 %v189, 4294901760
    %v4633 = vsub.f32 %v189, %v4632
    %v4634 = vand.u32 %v4633, 4294901760
    %v4635 = vsub.f32 %v4633, %v4634
    %v4636 = vand.u32 %v4635, 4294901760
    %4637 = vmatprep.subr.mxu0 %v4636
    %v4638 = vand.u32 %v188, 4294901760
    %v4639 = vsub.f32 %v188, %v4638
    %v4640 = vand.u32 %v4639, 4294901760
    %v4641 = vsub.f32 %v4639, %v4640
    %v4642 = vand.u32 %v4641, 4294901760
    %4643 = vmatpush2.msra.mxu0 %v4642
    %v4644 = vand.u32 %v187, 4294901760
    %v4645 = vsub.f32 %v187, %v4644
    %v4646 = vand.u32 %v4645, 4294901760
    %v4647 = vsub.f32 %v4645, %v4646
    %v4648 = vand.u32 %v4647, 4294901760
    %4649 = vmatprep.subr.mxu0 %v4648
    %v4650 = vand.u32 %v186, 4294901760
    %v4651 = vsub.f32 %v186, %v4650
    %v4652 = vand.u32 %v4651, 4294901760
    %v4653 = vsub.f32 %v4651, %v4652
    %v4654 = vand.u32 %v4653, 4294901760
    %4655 = vmatpush2.msra.mxu0 %v4654
    %v4656 = vand.u32 %v185, 4294901760
    %v4657 = vsub.f32 %v185, %v4656
    %v4658 = vand.u32 %v4657, 4294901760
    %v4659 = vsub.f32 %v4657, %v4658
    %v4660 = vand.u32 %v4659, 4294901760
    %4661 = vmatprep.subr.mxu0 %v4660
    %v4662 = vand.u32 %v184, 4294901760
    %v4663 = vsub.f32 %v184, %v4662
    %v4664 = vand.u32 %v4663, 4294901760
    %v4665 = vsub.f32 %v4663, %v4664
    %v4666 = vand.u32 %v4665, 4294901760
    %4667 = vmatpush2.msra.mxu0 %v4666
    %v4668 = vand.u32 %v183, 4294901760
    %v4669 = vsub.f32 %v183, %v4668
    %v4670 = vand.u32 %v4669, 4294901760
    %v4671 = vsub.f32 %v4669, %v4670
    %v4672 = vand.u32 %v4671, 4294901760
    %4673 = vmatprep.subr.mxu0 %v4672
    %v4674 = vand.u32 %v182, 4294901760
    %v4675 = vsub.f32 %v182, %v4674
    %v4676 = vand.u32 %v4675, 4294901760
    %v4677 = vsub.f32 %v4675, %v4676
    %v4678 = vand.u32 %v4677, 4294901760
    %4679 = vmatpush2.msra.mxu0 %v4678
    %v4680 = vand.u32 %v181, 4294901760
    %v4681 = vsub.f32 %v181, %v4680
    %v4682 = vand.u32 %v4681, 4294901760
    %v4683 = vsub.f32 %v4681, %v4682
    %v4684 = vand.u32 %v4683, 4294901760
    %4685 = vmatprep.subr.mxu0 %v4684
    %v4686 = vand.u32 %v180, 4294901760
    %v4687 = vsub.f32 %v180, %v4686
    %v4688 = vand.u32 %v4687, 4294901760
    %v4689 = vsub.f32 %v4687, %v4688
    %v4690 = vand.u32 %v4689, 4294901760
    %4691 = vmatpush2.msra.mxu0 %v4690
    %v4692 = vand.u32 %v179, 4294901760
    %v4693 = vsub.f32 %v179, %v4692
    %v4694 = vand.u32 %v4693, 4294901760
    %v4695 = vsub.f32 %v4693, %v4694
    %v4696 = vand.u32 %v4695, 4294901760
    %4697 = vmatprep.subr.mxu0 %v4696
    %v4698 = vand.u32 %v178, 4294901760
    %v4699 = vsub.f32 %v178, %v4698
    %v4700 = vand.u32 %v4699, 4294901760
    %v4701 = vsub.f32 %v4699, %v4700
    %v4702 = vand.u32 %v4701, 4294901760
    %4703 = vmatpush2.msra.mxu0 %v4702
    %v4704 = vand.u32 %v177, 4294901760
    %v4705 = vsub.f32 %v177, %v4704
    %v4706 = vand.u32 %v4705, 4294901760
    %v4707 = vsub.f32 %v4705, %v4706
    %v4708 = vand.u32 %v4707, 4294901760
    %4709 = vmatprep.subr.mxu0 %v4708
    %v4710 = vand.u32 %v176, 4294901760
    %v4711 = vsub.f32 %v176, %v4710
    %v4712 = vand.u32 %v4711, 4294901760
    %v4713 = vsub.f32 %v4711, %v4712
    %v4714 = vand.u32 %v4713, 4294901760
    %4715 = vmatpush2.msra.mxu0 %v4714
    %v4716 = vand.u32 %v175, 4294901760
    %v4717 = vsub.f32 %v175, %v4716
    %v4718 = vand.u32 %v4717, 4294901760
    %v4719 = vsub.f32 %v4717, %v4718
    %v4720 = vand.u32 %v4719, 4294901760
    %4721 = vmatprep.subr.mxu0 %v4720
    %v4722 = vand.u32 %v174, 4294901760
    %v4723 = vsub.f32 %v174, %v4722
    %v4724 = vand.u32 %v4723, 4294901760
    %v4725 = vsub.f32 %v4723, %v4724
    %v4726 = vand.u32 %v4725, 4294901760
    %4727 = vmatpush2.msra.mxu0 %v4726
    %v4728 = vand.u32 %v173, 4294901760
    %v4729 = vsub.f32 %v173, %v4728
    %v4730 = vand.u32 %v4729, 4294901760
    %v4731 = vsub.f32 %v4729, %v4730
    %v4732 = vand.u32 %v4731, 4294901760
    %4733 = vmatprep.subr.mxu0 %v4732
    %v4734 = vand.u32 %v172, 4294901760
    %v4735 = vsub.f32 %v172, %v4734
    %v4736 = vand.u32 %v4735, 4294901760
    %v4737 = vsub.f32 %v4735, %v4736
    %v4738 = vand.u32 %v4737, 4294901760
    %4739 = vmatpush2.msra.mxu0 %v4738
    %v4740 = vand.u32 %v171, 4294901760
    %v4741 = vsub.f32 %v171, %v4740
    %v4742 = vand.u32 %v4741, 4294901760
    %v4743 = vsub.f32 %v4741, %v4742
    %v4744 = vand.u32 %v4743, 4294901760
    %4745 = vmatprep.subr.mxu0 %v4744
    %v4746 = vand.u32 %v170, 4294901760
    %v4747 = vsub.f32 %v170, %v4746
    %v4748 = vand.u32 %v4747, 4294901760
    %v4749 = vsub.f32 %v4747, %v4748
    %v4750 = vand.u32 %v4749, 4294901760
    %4751 = vmatpush2.msra.mxu0 %v4750
    %v4752 = vand.u32 %v169, 4294901760
    %v4753 = vsub.f32 %v169, %v4752
    %v4754 = vand.u32 %v4753, 4294901760
    %v4755 = vsub.f32 %v4753, %v4754
    %v4756 = vand.u32 %v4755, 4294901760
    %4757 = vmatprep.subr.mxu0 %v4756
    %v4758 = vand.u32 %v168, 4294901760
    %v4759 = vsub.f32 %v168, %v4758
    %v4760 = vand.u32 %v4759, 4294901760
    %v4761 = vsub.f32 %v4759, %v4760
    %v4762 = vand.u32 %v4761, 4294901760
    %4763 = vmatpush2.msra.mxu0 %v4762
    %v4764 = vand.u32 %v167, 4294901760
    %v4765 = vsub.f32 %v167, %v4764
    %v4766 = vand.u32 %v4765, 4294901760
    %v4767 = vsub.f32 %v4765, %v4766
    %v4768 = vand.u32 %v4767, 4294901760
    %4769 = vmatprep.subr.mxu0 %v4768
    %v4770 = vand.u32 %v166, 4294901760
    %v4771 = vsub.f32 %v166, %v4770
    %v4772 = vand.u32 %v4771, 4294901760
    %v4773 = vsub.f32 %v4771, %v4772
    %v4774 = vand.u32 %v4773, 4294901760
    %4775 = vmatpush2.msra.mxu0 %v4774
    %v4776 = vand.u32 %v2962, 4294901760
    %4777 = vmatprep.mubr.f32.mxu0 %v4776
    %v4778 = vand.u32 %v2955, 4294901760
    %4779 = vmatmul.mubr.f32.gmra.mxu0 %v4778
    %v4780 = vpop.f32.mrf.mxu0
    %v4781 = vadd.f32 %v4388, %v4780
    %v4782 = vpop.f32.mrf.mxu0
    %v4783 = vadd.f32 %v4390, %v4782
    %4784 = vdwg.mxu0
    %v4785 = vand.u32 %v165, 4294901760
    %v4786 = vsub.f32 %v165, %v4785
    %4787 = vmatprep.subr.mxu0 %v4786
    %v4788 = vand.u32 %v164, 4294901760
    %v4789 = vsub.f32 %v164, %v4788
    %4790 = vmatpush1.msra.mxu0 %v4789
    %v4791 = vand.u32 %v163, 4294901760
    %v4792 = vsub.f32 %v163, %v4791
    %4793 = vmatprep.subr.mxu0 %v4792
    %v4794 = vand.u32 %v162, 4294901760
    %v4795 = vsub.f32 %v162, %v4794
    %4796 = vmatpush1.msra.mxu0 %v4795
    %v4797 = vand.u32 %v161, 4294901760
    %v4798 = vsub.f32 %v161, %v4797
    %4799 = vmatprep.subr.mxu0 %v4798
    %v4800 = vand.u32 %v160, 4294901760
    %v4801 = vsub.f32 %v160, %v4800
    %4802 = vmatpush1.msra.mxu0 %v4801
    %v4803 = vand.u32 %v159, 4294901760
    %v4804 = vsub.f32 %v159, %v4803
    %4805 = vmatprep.subr.mxu0 %v4804
    %v4806 = vand.u32 %v158, 4294901760
    %v4807 = vsub.f32 %v158, %v4806
    %4808 = vmatpush1.msra.mxu0 %v4807
    %v4809 = vand.u32 %v157, 4294901760
    %v4810 = vsub.f32 %v157, %v4809
    %4811 = vmatprep.subr.mxu0 %v4810
    %v4812 = vand.u32 %v156, 4294901760
    %v4813 = vsub.f32 %v156, %v4812
    %4814 = vmatpush1.msra.mxu0 %v4813
    %v4815 = vand.u32 %v155, 4294901760
    %v4816 = vsub.f32 %v155, %v4815
    %4817 = vmatprep.subr.mxu0 %v4816
    %v4818 = vand.u32 %v154, 4294901760
    %v4819 = vsub.f32 %v154, %v4818
    %4820 = vmatpush1.msra.mxu0 %v4819
    %v4821 = vand.u32 %v153, 4294901760
    %v4822 = vsub.f32 %v153, %v4821
    %4823 = vmatprep.subr.mxu0 %v4822
    %v4824 = vand.u32 %v152, 4294901760
    %v4825 = vsub.f32 %v152, %v4824
    %4826 = vmatpush1.msra.mxu0 %v4825
    %v4827 = vand.u32 %v151, 4294901760
    %v4828 = vsub.f32 %v151, %v4827
    %4829 = vmatprep.subr.mxu0 %v4828
    %v4830 = vand.u32 %v150, 4294901760
    %v4831 = vsub.f32 %v150, %v4830
    %4832 = vmatpush1.msra.mxu0 %v4831
    %v4833 = vand.u32 %v149, 4294901760
    %v4834 = vsub.f32 %v149, %v4833
    %4835 = vmatprep.subr.mxu0 %v4834
    %v4836 = vand.u32 %v148, 4294901760
    %v4837 = vsub.f32 %v148, %v4836
    %4838 = vmatpush1.msra.mxu0 %v4837
    %v4839 = vand.u32 %v147, 4294901760
    %v4840 = vsub.f32 %v147, %v4839
    %4841 = vmatprep.subr.mxu0 %v4840
    %v4842 = vand.u32 %v146, 4294901760
    %v4843 = vsub.f32 %v146, %v4842
    %4844 = vmatpush1.msra.mxu0 %v4843
    %v4845 = vand.u32 %v145, 4294901760
    %v4846 = vsub.f32 %v145, %v4845
    %4847 = vmatprep.subr.mxu0 %v4846
    %v4848 = vand.u32 %v144, 4294901760
    %v4849 = vsub.f32 %v144, %v4848
    %4850 = vmatpush1.msra.mxu0 %v4849
    %v4851 = vand.u32 %v143, 4294901760
    %v4852 = vsub.f32 %v143, %v4851
    %4853 = vmatprep.subr.mxu0 %v4852
    %v4854 = vand.u32 %v142, 4294901760
    %v4855 = vsub.f32 %v142, %v4854
    %4856 = vmatpush1.msra.mxu0 %v4855
    %v4857 = vand.u32 %v141, 4294901760
    %v4858 = vsub.f32 %v141, %v4857
    %4859 = vmatprep.subr.mxu0 %v4858
    %v4860 = vand.u32 %v140, 4294901760
    %v4861 = vsub.f32 %v140, %v4860
    %4862 = vmatpush1.msra.mxu0 %v4861
    %v4863 = vand.u32 %v139, 4294901760
    %v4864 = vsub.f32 %v139, %v4863
    %4865 = vmatprep.subr.mxu0 %v4864
    %v4866 = vand.u32 %v138, 4294901760
    %v4867 = vsub.f32 %v138, %v4866
    %4868 = vmatpush1.msra.mxu0 %v4867
    %v4869 = vand.u32 %v137, 4294901760
    %v4870 = vsub.f32 %v137, %v4869
    %4871 = vmatprep.subr.mxu0 %v4870
    %v4872 = vand.u32 %v136, 4294901760
    %v4873 = vsub.f32 %v136, %v4872
    %4874 = vmatpush1.msra.mxu0 %v4873
    %v4875 = vand.u32 %v135, 4294901760
    %v4876 = vsub.f32 %v135, %v4875
    %4877 = vmatprep.subr.mxu0 %v4876
    %v4878 = vand.u32 %v134, 4294901760
    %v4879 = vsub.f32 %v134, %v4878
    %4880 = vmatpush1.msra.mxu0 %v4879
    %v4881 = vand.u32 %v197, 4294901760
    %v4882 = vsub.f32 %v197, %v4881
    %4883 = vmatprep.subr.mxu0 %v4882
    %v4884 = vand.u32 %v196, 4294901760
    %v4885 = vsub.f32 %v196, %v4884
    %4886 = vmatpush2.msra.mxu0 %v4885
    %v4887 = vand.u32 %v195, 4294901760
    %v4888 = vsub.f32 %v195, %v4887
    %4889 = vmatprep.subr.mxu0 %v4888
    %v4890 = vand.u32 %v194, 4294901760
    %v4891 = vsub.f32 %v194, %v4890
    %4892 = vmatpush2.msra.mxu0 %v4891
    %v4893 = vand.u32 %v193, 4294901760
    %v4894 = vsub.f32 %v193, %v4893
    %4895 = vmatprep.subr.mxu0 %v4894
    %v4896 = vand.u32 %v192, 4294901760
    %v4897 = vsub.f32 %v192, %v4896
    %4898 = vmatpush2.msra.mxu0 %v4897
    %v4899 = vand.u32 %v191, 4294901760
    %v4900 = vsub.f32 %v191, %v4899
    %4901 = vmatprep.subr.mxu0 %v4900
    %v4902 = vand.u32 %v190, 4294901760
    %v4903 = vsub.f32 %v190, %v4902
    %4904 = vmatpush2.msra.mxu0 %v4903
    %v4905 = vand.u32 %v189, 4294901760
    %v4906 = vsub.f32 %v189, %v4905
    %4907 = vmatprep.subr.mxu0 %v4906
    %v4908 = vand.u32 %v188, 4294901760
    %v4909 = vsub.f32 %v188, %v4908
    %4910 = vmatpush2.msra.mxu0 %v4909
    %v4911 = vand.u32 %v187, 4294901760
    %v4912 = vsub.f32 %v187, %v4911
    %4913 = vmatprep.subr.mxu0 %v4912
    %v4914 = vand.u32 %v186, 4294901760
    %v4915 = vsub.f32 %v186, %v4914
    %4916 = vmatpush2.msra.mxu0 %v4915
    %v4917 = vand.u32 %v185, 4294901760
    %v4918 = vsub.f32 %v185, %v4917
    %4919 = vmatprep.subr.mxu0 %v4918
    %v4920 = vand.u32 %v184, 4294901760
    %v4921 = vsub.f32 %v184, %v4920
    %4922 = vmatpush2.msra.mxu0 %v4921
    %v4923 = vand.u32 %v183, 4294901760
    %v4924 = vsub.f32 %v183, %v4923
    %4925 = vmatprep.subr.mxu0 %v4924
    %v4926 = vand.u32 %v182, 4294901760
    %v4927 = vsub.f32 %v182, %v4926
    %4928 = vmatpush2.msra.mxu0 %v4927
    %v4929 = vand.u32 %v181, 4294901760
    %v4930 = vsub.f32 %v181, %v4929
    %4931 = vmatprep.subr.mxu0 %v4930
    %v4932 = vand.u32 %v180, 4294901760
    %v4933 = vsub.f32 %v180, %v4932
    %4934 = vmatpush2.msra.mxu0 %v4933
    %v4935 = vand.u32 %v179, 4294901760
    %v4936 = vsub.f32 %v179, %v4935
    %4937 = vmatprep.subr.mxu0 %v4936
    %v4938 = vand.u32 %v178, 4294901760
    %v4939 = vsub.f32 %v178, %v4938
    %4940 = vmatpush2.msra.mxu0 %v4939
    %v4941 = vand.u32 %v177, 4294901760
    %v4942 = vsub.f32 %v177, %v4941
    %4943 = vmatprep.subr.mxu0 %v4942
    %v4944 = vand.u32 %v176, 4294901760
    %v4945 = vsub.f32 %v176, %v4944
    %4946 = vmatpush2.msra.mxu0 %v4945
    %v4947 = vand.u32 %v175, 4294901760
    %v4948 = vsub.f32 %v175, %v4947
    %4949 = vmatprep.subr.mxu0 %v4948
    %v4950 = vand.u32 %v174, 4294901760
    %v4951 = vsub.f32 %v174, %v4950
    %4952 = vmatpush2.msra.mxu0 %v4951
    %v4953 = vand.u32 %v173, 4294901760
    %v4954 = vsub.f32 %v173, %v4953
    %4955 = vmatprep.subr.mxu0 %v4954
    %v4956 = vand.u32 %v172, 4294901760
    %v4957 = vsub.f32 %v172, %v4956
    %4958 = vmatpush2.msra.mxu0 %v4957
    %v4959 = vand.u32 %v171, 4294901760
    %v4960 = vsub.f32 %v171, %v4959
    %4961 = vmatprep.subr.mxu0 %v4960
    %v4962 = vand.u32 %v170, 4294901760
    %v4963 = vsub.f32 %v170, %v4962
    %4964 = vmatpush2.msra.mxu0 %v4963
    %v4965 = vand.u32 %v169, 4294901760
    %v4966 = vsub.f32 %v169, %v4965
    %4967 = vmatprep.subr.mxu0 %v4966
    %v4968 = vand.u32 %v168, 4294901760
    %v4969 = vsub.f32 %v168, %v4968
    %4970 = vmatpush2.msra.mxu0 %v4969
    %v4971 = vand.u32 %v167, 4294901760
    %v4972 = vsub.f32 %v167, %v4971
    %4973 = vmatprep.subr.mxu0 %v4972
    %v4974 = vand.u32 %v166, 4294901760
    %v4975 = vsub.f32 %v166, %v4974
    %4976 = vmatpush2.msra.mxu0 %v4975
    %v4977 = vand.u32 %v2962, 4294901760
    %v4978 = vsub.f32 %v2962, %v4977
    %4979 = vmatprep.mubr.f32.mxu0 %v4978
    %v4980 = vand.u32 %v2955, 4294901760
    %v4981 = vsub.f32 %v2955, %v4980
    %4982 = vmatmul.mubr.f32.gmra.mxu0 %v4981
    %v4983 = vpop.f32.mrf.mxu0
    %v4984 = vadd.f32 %v4781, %v4983
    %v4985 = vpop.f32.mrf.mxu0
    %v4986 = vadd.f32 %v4783, %v4985
    %4987 = vdwg.mxu0
    %v4988 = vand.u32 %v165, 4294901760
    %4989 = vmatprep.subr.mxu0 %v4988
    %v4990 = vand.u32 %v164, 4294901760
    %4991 = vmatpush1.msra.mxu0 %v4990
    %v4992 = vand.u32 %v163, 4294901760
    %4993 = vmatprep.subr.mxu0 %v4992
    %v4994 = vand.u32 %v162, 4294901760
    %4995 = vmatpush1.msra.mxu0 %v4994
    %v4996 = vand.u32 %v161, 4294901760
    %4997 = vmatprep.subr.mxu0 %v4996
    %v4998 = vand.u32 %v160, 4294901760
    %4999 = vmatpush1.msra.mxu0 %v4998
    %v5000 = vand.u32 %v159, 4294901760
    %5001 = vmatprep.subr.mxu0 %v5000
    %v5002 = vand.u32 %v158, 4294901760
    %5003 = vmatpush1.msra.mxu0 %v5002
    %v5004 = vand.u32 %v157, 4294901760
    %5005 = vmatprep.subr.mxu0 %v5004
    %v5006 = vand.u32 %v156, 4294901760
    %5007 = vmatpush1.msra.mxu0 %v5006
    %v5008 = vand.u32 %v155, 4294901760
    %5009 = vmatprep.subr.mxu0 %v5008
    %v5010 = vand.u32 %v154, 4294901760
    %5011 = vmatpush1.msra.mxu0 %v5010
    %v5012 = vand.u32 %v153, 4294901760
    %5013 = vmatprep.subr.mxu0 %v5012
    %v5014 = vand.u32 %v152, 4294901760
    %5015 = vmatpush1.msra.mxu0 %v5014
    %v5016 = vand.u32 %v151, 4294901760
    %5017 = vmatprep.subr.mxu0 %v5016
    %v5018 = vand.u32 %v150, 4294901760
    %5019 = vmatpush1.msra.mxu0 %v5018
    %v5020 = vand.u32 %v149, 4294901760
    %5021 = vmatprep.subr.mxu0 %v5020
    %v5022 = vand.u32 %v148, 4294901760
    %5023 = vmatpush1.msra.mxu0 %v5022
    %v5024 = vand.u32 %v147, 4294901760
    %5025 = vmatprep.subr.mxu0 %v5024
    %v5026 = vand.u32 %v146, 4294901760
    %5027 = vmatpush1.msra.mxu0 %v5026
    %v5028 = vand.u32 %v145, 4294901760
    %5029 = vmatprep.subr.mxu0 %v5028
    %v5030 = vand.u32 %v144, 4294901760
    %5031 = vmatpush1.msra.mxu0 %v5030
    %v5032 = vand.u32 %v143, 4294901760
    %5033 = vmatprep.subr.mxu0 %v5032
    %v5034 = vand.u32 %v142, 4294901760
    %5035 = vmatpush1.msra.mxu0 %v5034
    %v5036 = vand.u32 %v141, 4294901760
    %5037 = vmatprep.subr.mxu0 %v5036
    %v5038 = vand.u32 %v140, 4294901760
    %5039 = vmatpush1.msra.mxu0 %v5038
    %v5040 = vand.u32 %v139, 4294901760
    %5041 = vmatprep.subr.mxu0 %v5040
    %v5042 = vand.u32 %v138, 4294901760
    %5043 = vmatpush1.msra.mxu0 %v5042
    %v5044 = vand.u32 %v137, 4294901760
    %5045 = vmatprep.subr.mxu0 %v5044
    %v5046 = vand.u32 %v136, 4294901760
    %5047 = vmatpush1.msra.mxu0 %v5046
    %v5048 = vand.u32 %v135, 4294901760
    %5049 = vmatprep.subr.mxu0 %v5048
    %v5050 = vand.u32 %v134, 4294901760
    %5051 = vmatpush1.msra.mxu0 %v5050
    %v5052 = vand.u32 %v197, 4294901760
    %5053 = vmatprep.subr.mxu0 %v5052
    %v5054 = vand.u32 %v196, 4294901760
    %5055 = vmatpush2.msra.mxu0 %v5054
    %v5056 = vand.u32 %v195, 4294901760
    %5057 = vmatprep.subr.mxu0 %v5056
    %v5058 = vand.u32 %v194, 4294901760
    %5059 = vmatpush2.msra.mxu0 %v5058
    %v5060 = vand.u32 %v193, 4294901760
    %5061 = vmatprep.subr.mxu0 %v5060
    %v5062 = vand.u32 %v192, 4294901760
    %5063 = vmatpush2.msra.mxu0 %v5062
    %v5064 = vand.u32 %v191, 4294901760
    %5065 = vmatprep.subr.mxu0 %v5064
    %v5066 = vand.u32 %v190, 4294901760
    %5067 = vmatpush2.msra.mxu0 %v5066
    %v5068 = vand.u32 %v189, 4294901760
    %5069 = vmatprep.subr.mxu0 %v5068
    %v5070 = vand.u32 %v188, 4294901760
    %5071 = vmatpush2.msra.mxu0 %v5070
    %v5072 = vand.u32 %v187, 4294901760
    %5073 = vmatprep.subr.mxu0 %v5072
    %v5074 = vand.u32 %v186, 4294901760
    %5075 = vmatpush2.msra.mxu0 %v5074
    %v5076 = vand.u32 %v185, 4294901760
    %5077 = vmatprep.subr.mxu0 %v5076
    %v5078 = vand.u32 %v184, 4294901760
    %5079 = vmatpush2.msra.mxu0 %v5078
    %v5080 = vand.u32 %v183, 4294901760
    %5081 = vmatprep.subr.mxu0 %v5080
    %v5082 = vand.u32 %v182, 4294901760
    %5083 = vmatpush2.msra.mxu0 %v5082
    %v5084 = vand.u32 %v181, 4294901760
    %5085 = vmatprep.subr.mxu0 %v5084
    %v5086 = vand.u32 %v180, 4294901760
    %5087 = vmatpush2.msra.mxu0 %v5086
    %v5088 = vand.u32 %v179, 4294901760
    %5089 = vmatprep.subr.mxu0 %v5088
    %v5090 = vand.u32 %v178, 4294901760
    %5091 = vmatpush2.msra.mxu0 %v5090
    %v5092 = vand.u32 %v177, 4294901760
    %5093 = vmatprep.subr.mxu0 %v5092
    %v5094 = vand.u32 %v176, 4294901760
    %5095 = vmatpush2.msra.mxu0 %v5094
    %v5096 = vand.u32 %v175, 4294901760
    %5097 = vmatprep.subr.mxu0 %v5096
    %v5098 = vand.u32 %v174, 4294901760
    %5099 = vmatpush2.msra.mxu0 %v5098
    %v5100 = vand.u32 %v173, 4294901760
    %5101 = vmatprep.subr.mxu0 %v5100
    %v5102 = vand.u32 %v172, 4294901760
    %5103 = vmatpush2.msra.mxu0 %v5102
    %v5104 = vand.u32 %v171, 4294901760
    %5105 = vmatprep.subr.mxu0 %v5104
    %v5106 = vand.u32 %v170, 4294901760
    %5107 = vmatpush2.msra.mxu0 %v5106
    %v5108 = vand.u32 %v169, 4294901760
    %5109 = vmatprep.subr.mxu0 %v5108
    %v5110 = vand.u32 %v168, 4294901760
    %5111 = vmatpush2.msra.mxu0 %v5110
    %v5112 = vand.u32 %v167, 4294901760
    %5113 = vmatprep.subr.mxu0 %v5112
    %v5114 = vand.u32 %v166, 4294901760
    %5115 = vmatpush2.msra.mxu0 %v5114
    %v5116 = vand.u32 %v2962, 4294901760
    %v5117 = vsub.f32 %v2962, %v5116
    %v5118 = vand.u32 %v5117, 4294901760
    %5119 = vmatprep.mubr.f32.mxu0 %v5118
    %v5120 = vand.u32 %v2955, 4294901760
    %v5121 = vsub.f32 %v2955, %v5120
    %v5122 = vand.u32 %v5121, 4294901760
    %5123 = vmatmul.mubr.f32.gmra.mxu0 %v5122
    %v5124 = vpop.f32.mrf.mxu0
    %v5125 = vadd.f32 %v4984, %v5124
    %v5126 = vpop.f32.mrf.mxu0
    %v5127 = vadd.f32 %v4986, %v5126
    %5128 = vdwg.mxu0
    %v5129 = vand.u32 %v165, 4294901760
    %v5130 = vsub.f32 %v165, %v5129
    %v5131 = vand.u32 %v5130, 4294901760
    %5132 = vmatprep.subr.mxu0 %v5131
    %v5133 = vand.u32 %v164, 4294901760
    %v5134 = vsub.f32 %v164, %v5133
    %v5135 = vand.u32 %v5134, 4294901760
    %5136 = vmatpush1.msra.mxu0 %v5135
    %v5137 = vand.u32 %v163, 4294901760
    %v5138 = vsub.f32 %v163, %v5137
    %v5139 = vand.u32 %v5138, 4294901760
    %5140 = vmatprep.subr.mxu0 %v5139
    %v5141 = vand.u32 %v162, 4294901760
    %v5142 = vsub.f32 %v162, %v5141
    %v5143 = vand.u32 %v5142, 4294901760
    %5144 = vmatpush1.msra.mxu0 %v5143
    %v5145 = vand.u32 %v161, 4294901760
    %v5146 = vsub.f32 %v161, %v5145
    %v5147 = vand.u32 %v5146, 4294901760
    %5148 = vmatprep.subr.mxu0 %v5147
    %v5149 = vand.u32 %v160, 4294901760
    %v5150 = vsub.f32 %v160, %v5149
    %v5151 = vand.u32 %v5150, 4294901760
    %5152 = vmatpush1.msra.mxu0 %v5151
    %v5153 = vand.u32 %v159, 4294901760
    %v5154 = vsub.f32 %v159, %v5153
    %v5155 = vand.u32 %v5154, 4294901760
    %5156 = vmatprep.subr.mxu0 %v5155
    %v5157 = vand.u32 %v158, 4294901760
    %v5158 = vsub.f32 %v158, %v5157
    %v5159 = vand.u32 %v5158, 4294901760
    %5160 = vmatpush1.msra.mxu0 %v5159
    %v5161 = vand.u32 %v157, 4294901760
    %v5162 = vsub.f32 %v157, %v5161
    %v5163 = vand.u32 %v5162, 4294901760
    %5164 = vmatprep.subr.mxu0 %v5163
    %v5165 = vand.u32 %v156, 4294901760
    %v5166 = vsub.f32 %v156, %v5165
    %v5167 = vand.u32 %v5166, 4294901760
    %5168 = vmatpush1.msra.mxu0 %v5167
    %v5169 = vand.u32 %v155, 4294901760
    %v5170 = vsub.f32 %v155, %v5169
    %v5171 = vand.u32 %v5170, 4294901760
    %5172 = vmatprep.subr.mxu0 %v5171
    %v5173 = vand.u32 %v154, 4294901760
    %v5174 = vsub.f32 %v154, %v5173
    %v5175 = vand.u32 %v5174, 4294901760
    %5176 = vmatpush1.msra.mxu0 %v5175
    %v5177 = vand.u32 %v153, 4294901760
    %v5178 = vsub.f32 %v153, %v5177
    %v5179 = vand.u32 %v5178, 4294901760
    %5180 = vmatprep.subr.mxu0 %v5179
    %v5181 = vand.u32 %v152, 4294901760
    %v5182 = vsub.f32 %v152, %v5181
    %v5183 = vand.u32 %v5182, 4294901760
    %5184 = vmatpush1.msra.mxu0 %v5183
    %v5185 = vand.u32 %v151, 4294901760
    %v5186 = vsub.f32 %v151, %v5185
    %v5187 = vand.u32 %v5186, 4294901760
    %5188 = vmatprep.subr.mxu0 %v5187
    %v5189 = vand.u32 %v150, 4294901760
    %v5190 = vsub.f32 %v150, %v5189
    %v5191 = vand.u32 %v5190, 4294901760
    %5192 = vmatpush1.msra.mxu0 %v5191
    %v5193 = vand.u32 %v149, 4294901760
    %v5194 = vsub.f32 %v149, %v5193
    %v5195 = vand.u32 %v5194, 4294901760
    %5196 = vmatprep.subr.mxu0 %v5195
    %v5197 = vand.u32 %v148, 4294901760
    %v5198 = vsub.f32 %v148, %v5197
    %v5199 = vand.u32 %v5198, 4294901760
    %5200 = vmatpush1.msra.mxu0 %v5199
    %v5201 = vand.u32 %v147, 4294901760
    %v5202 = vsub.f32 %v147, %v5201
    %v5203 = vand.u32 %v5202, 4294901760
    %5204 = vmatprep.subr.mxu0 %v5203
    %v5205 = vand.u32 %v146, 4294901760
    %v5206 = vsub.f32 %v146, %v5205
    %v5207 = vand.u32 %v5206, 4294901760
    %5208 = vmatpush1.msra.mxu0 %v5207
    %v5209 = vand.u32 %v145, 4294901760
    %v5210 = vsub.f32 %v145, %v5209
    %v5211 = vand.u32 %v5210, 4294901760
    %5212 = vmatprep.subr.mxu0 %v5211
    %v5213 = vand.u32 %v144, 4294901760
    %v5214 = vsub.f32 %v144, %v5213
    %v5215 = vand.u32 %v5214, 4294901760
    %5216 = vmatpush1.msra.mxu0 %v5215
    %v5217 = vand.u32 %v143, 4294901760
    %v5218 = vsub.f32 %v143, %v5217
    %v5219 = vand.u32 %v5218, 4294901760
    %5220 = vmatprep.subr.mxu0 %v5219
    %v5221 = vand.u32 %v142, 4294901760
    %v5222 = vsub.f32 %v142, %v5221
    %v5223 = vand.u32 %v5222, 4294901760
    %5224 = vmatpush1.msra.mxu0 %v5223
    %v5225 = vand.u32 %v141, 4294901760
    %v5226 = vsub.f32 %v141, %v5225
    %v5227 = vand.u32 %v5226, 4294901760
    %5228 = vmatprep.subr.mxu0 %v5227
    %v5229 = vand.u32 %v140, 4294901760
    %v5230 = vsub.f32 %v140, %v5229
    %v5231 = vand.u32 %v5230, 4294901760
    %5232 = vmatpush1.msra.mxu0 %v5231
    %v5233 = vand.u32 %v139, 4294901760
    %v5234 = vsub.f32 %v139, %v5233
    %v5235 = vand.u32 %v5234, 4294901760
    %5236 = vmatprep.subr.mxu0 %v5235
    %v5237 = vand.u32 %v138, 4294901760
    %v5238 = vsub.f32 %v138, %v5237
    %v5239 = vand.u32 %v5238, 4294901760
    %5240 = vmatpush1.msra.mxu0 %v5239
    %v5241 = vand.u32 %v137, 4294901760
    %v5242 = vsub.f32 %v137, %v5241
    %v5243 = vand.u32 %v5242, 4294901760
    %5244 = vmatprep.subr.mxu0 %v5243
    %v5245 = vand.u32 %v136, 4294901760
    %v5246 = vsub.f32 %v136, %v5245
    %v5247 = vand.u32 %v5246, 4294901760
    %5248 = vmatpush1.msra.mxu0 %v5247
    %v5249 = vand.u32 %v135, 4294901760
    %v5250 = vsub.f32 %v135, %v5249
    %v5251 = vand.u32 %v5250, 4294901760
    %5252 = vmatprep.subr.mxu0 %v5251
    %v5253 = vand.u32 %v134, 4294901760
    %v5254 = vsub.f32 %v134, %v5253
    %v5255 = vand.u32 %v5254, 4294901760
    %5256 = vmatpush1.msra.mxu0 %v5255
    %v5257 = vand.u32 %v197, 4294901760
    %v5258 = vsub.f32 %v197, %v5257
    %v5259 = vand.u32 %v5258, 4294901760
    %5260 = vmatprep.subr.mxu0 %v5259
    %v5261 = vand.u32 %v196, 4294901760
    %v5262 = vsub.f32 %v196, %v5261
    %v5263 = vand.u32 %v5262, 4294901760
    %5264 = vmatpush2.msra.mxu0 %v5263
    %v5265 = vand.u32 %v195, 4294901760
    %v5266 = vsub.f32 %v195, %v5265
    %v5267 = vand.u32 %v5266, 4294901760
    %5268 = vmatprep.subr.mxu0 %v5267
    %v5269 = vand.u32 %v194, 4294901760
    %v5270 = vsub.f32 %v194, %v5269
    %v5271 = vand.u32 %v5270, 4294901760
    %5272 = vmatpush2.msra.mxu0 %v5271
    %v5273 = vand.u32 %v193, 4294901760
    %v5274 = vsub.f32 %v193, %v5273
    %v5275 = vand.u32 %v5274, 4294901760
    %5276 = vmatprep.subr.mxu0 %v5275
    %v5277 = vand.u32 %v192, 4294901760
    %v5278 = vsub.f32 %v192, %v5277
    %v5279 = vand.u32 %v5278, 4294901760
    %5280 = vmatpush2.msra.mxu0 %v5279
    %v5281 = vand.u32 %v191, 4294901760
    %v5282 = vsub.f32 %v191, %v5281
    %v5283 = vand.u32 %v5282, 4294901760
    %5284 = vmatprep.subr.mxu0 %v5283
    %v5285 = vand.u32 %v190, 4294901760
    %v5286 = vsub.f32 %v190, %v5285
    %v5287 = vand.u32 %v5286, 4294901760
    %5288 = vmatpush2.msra.mxu0 %v5287
    %v5289 = vand.u32 %v189, 4294901760
    %v5290 = vsub.f32 %v189, %v5289
    %v5291 = vand.u32 %v5290, 4294901760
    %5292 = vmatprep.subr.mxu0 %v5291
    %v5293 = vand.u32 %v188, 4294901760
    %v5294 = vsub.f32 %v188, %v5293
    %v5295 = vand.u32 %v5294, 4294901760
    %5296 = vmatpush2.msra.mxu0 %v5295
    %v5297 = vand.u32 %v187, 4294901760
    %v5298 = vsub.f32 %v187, %v5297
    %v5299 = vand.u32 %v5298, 4294901760
    %5300 = vmatprep.subr.mxu0 %v5299
    %v5301 = vand.u32 %v186, 4294901760
    %v5302 = vsub.f32 %v186, %v5301
    %v5303 = vand.u32 %v5302, 4294901760
    %5304 = vmatpush2.msra.mxu0 %v5303
    %v5305 = vand.u32 %v185, 4294901760
    %v5306 = vsub.f32 %v185, %v5305
    %v5307 = vand.u32 %v5306, 4294901760
    %5308 = vmatprep.subr.mxu0 %v5307
    %v5309 = vand.u32 %v184, 4294901760
    %v5310 = vsub.f32 %v184, %v5309
    %v5311 = vand.u32 %v5310, 4294901760
    %5312 = vmatpush2.msra.mxu0 %v5311
    %v5313 = vand.u32 %v183, 4294901760
    %v5314 = vsub.f32 %v183, %v5313
    %v5315 = vand.u32 %v5314, 4294901760
    %5316 = vmatprep.subr.mxu0 %v5315
    %v5317 = vand.u32 %v182, 4294901760
    %v5318 = vsub.f32 %v182, %v5317
    %v5319 = vand.u32 %v5318, 4294901760
    %5320 = vmatpush2.msra.mxu0 %v5319
    %v5321 = vand.u32 %v181, 4294901760
    %v5322 = vsub.f32 %v181, %v5321
    %v5323 = vand.u32 %v5322, 4294901760
    %5324 = vmatprep.subr.mxu0 %v5323
    %v5325 = vand.u32 %v180, 4294901760
    %v5326 = vsub.f32 %v180, %v5325
    %v5327 = vand.u32 %v5326, 4294901760
    %5328 = vmatpush2.msra.mxu0 %v5327
    %v5329 = vand.u32 %v179, 4294901760
    %v5330 = vsub.f32 %v179, %v5329
    %v5331 = vand.u32 %v5330, 4294901760
    %5332 = vmatprep.subr.mxu0 %v5331
    %v5333 = vand.u32 %v178, 4294901760
    %v5334 = vsub.f32 %v178, %v5333
    %v5335 = vand.u32 %v5334, 4294901760
    %5336 = vmatpush2.msra.mxu0 %v5335
    %v5337 = vand.u32 %v177, 4294901760
    %v5338 = vsub.f32 %v177, %v5337
    %v5339 = vand.u32 %v5338, 4294901760
    %5340 = vmatprep.subr.mxu0 %v5339
    %v5341 = vand.u32 %v176, 4294901760
    %v5342 = vsub.f32 %v176, %v5341
    %v5343 = vand.u32 %v5342, 4294901760
    %5344 = vmatpush2.msra.mxu0 %v5343
    %v5345 = vand.u32 %v175, 4294901760
    %v5346 = vsub.f32 %v175, %v5345
    %v5347 = vand.u32 %v5346, 4294901760
    %5348 = vmatprep.subr.mxu0 %v5347
    %v5349 = vand.u32 %v174, 4294901760
    %v5350 = vsub.f32 %v174, %v5349
    %v5351 = vand.u32 %v5350, 4294901760
    %5352 = vmatpush2.msra.mxu0 %v5351
    %v5353 = vand.u32 %v173, 4294901760
    %v5354 = vsub.f32 %v173, %v5353
    %v5355 = vand.u32 %v5354, 4294901760
    %5356 = vmatprep.subr.mxu0 %v5355
    %v5357 = vand.u32 %v172, 4294901760
    %v5358 = vsub.f32 %v172, %v5357
    %v5359 = vand.u32 %v5358, 4294901760
    %5360 = vmatpush2.msra.mxu0 %v5359
    %v5361 = vand.u32 %v171, 4294901760
    %v5362 = vsub.f32 %v171, %v5361
    %v5363 = vand.u32 %v5362, 4294901760
    %5364 = vmatprep.subr.mxu0 %v5363
    %v5365 = vand.u32 %v170, 4294901760
    %v5366 = vsub.f32 %v170, %v5365
    %v5367 = vand.u32 %v5366, 4294901760
    %5368 = vmatpush2.msra.mxu0 %v5367
    %v5369 = vand.u32 %v169, 4294901760
    %v5370 = vsub.f32 %v169, %v5369
    %v5371 = vand.u32 %v5370, 4294901760
    %5372 = vmatprep.subr.mxu0 %v5371
    %v5373 = vand.u32 %v168, 4294901760
    %v5374 = vsub.f32 %v168, %v5373
    %v5375 = vand.u32 %v5374, 4294901760
    %5376 = vmatpush2.msra.mxu0 %v5375
    %v5377 = vand.u32 %v167, 4294901760
    %v5378 = vsub.f32 %v167, %v5377
    %v5379 = vand.u32 %v5378, 4294901760
    %5380 = vmatprep.subr.mxu0 %v5379
    %v5381 = vand.u32 %v166, 4294901760
    %v5382 = vsub.f32 %v166, %v5381
    %v5383 = vand.u32 %v5382, 4294901760
    %5384 = vmatpush2.msra.mxu0 %v5383
    %v5385 = vand.u32 %v2962, 4294901760
    %5386 = vmatprep.mubr.f32.mxu0 %v5385
    %v5387 = vand.u32 %v2955, 4294901760
    %5388 = vmatmul.mubr.f32.gmra.mxu0 %v5387
    %v5389 = vpop.f32.mrf.mxu0
    %v5390 = vadd.f32 %v5125, %v5389
    %v5391 = vpop.f32.mrf.mxu0
    %v5392 = vadd.f32 %v5127, %v5391
    %5393 = vdwg.mxu0
    %v5394 = vand.u32 %v165, 4294901760
    %5395 = vmatprep.subr.mxu0 %v5394
    %v5396 = vand.u32 %v164, 4294901760
    %5397 = vmatpush1.msra.mxu0 %v5396
    %v5398 = vand.u32 %v163, 4294901760
    %5399 = vmatprep.subr.mxu0 %v5398
    %v5400 = vand.u32 %v162, 4294901760
    %5401 = vmatpush1.msra.mxu0 %v5400
    %v5402 = vand.u32 %v161, 4294901760
    %5403 = vmatprep.subr.mxu0 %v5402
    %v5404 = vand.u32 %v160, 4294901760
    %5405 = vmatpush1.msra.mxu0 %v5404
    %v5406 = vand.u32 %v159, 4294901760
    %5407 = vmatprep.subr.mxu0 %v5406
    %v5408 = vand.u32 %v158, 4294901760
    %5409 = vmatpush1.msra.mxu0 %v5408
    %v5410 = vand.u32 %v157, 4294901760
    %5411 = vmatprep.subr.mxu0 %v5410
    %v5412 = vand.u32 %v156, 4294901760
    %5413 = vmatpush1.msra.mxu0 %v5412
    %v5414 = vand.u32 %v155, 4294901760
    %5415 = vmatprep.subr.mxu0 %v5414
    %v5416 = vand.u32 %v154, 4294901760
    %5417 = vmatpush1.msra.mxu0 %v5416
    %v5418 = vand.u32 %v153, 4294901760
    %5419 = vmatprep.subr.mxu0 %v5418
    %v5420 = vand.u32 %v152, 4294901760
    %5421 = vmatpush1.msra.mxu0 %v5420
    %v5422 = vand.u32 %v151, 4294901760
    %5423 = vmatprep.subr.mxu0 %v5422
    %v5424 = vand.u32 %v150, 4294901760
    %5425 = vmatpush1.msra.mxu0 %v5424
    %v5426 = vand.u32 %v149, 4294901760
    %5427 = vmatprep.subr.mxu0 %v5426
    %v5428 = vand.u32 %v148, 4294901760
    %5429 = vmatpush1.msra.mxu0 %v5428
    %v5430 = vand.u32 %v147, 4294901760
    %5431 = vmatprep.subr.mxu0 %v5430
    %v5432 = vand.u32 %v146, 4294901760
    %5433 = vmatpush1.msra.mxu0 %v5432
    %v5434 = vand.u32 %v145, 4294901760
    %5435 = vmatprep.subr.mxu0 %v5434
    %v5436 = vand.u32 %v144, 4294901760
    %5437 = vmatpush1.msra.mxu0 %v5436
    %v5438 = vand.u32 %v143, 4294901760
    %5439 = vmatprep.subr.mxu0 %v5438
    %v5440 = vand.u32 %v142, 4294901760
    %5441 = vmatpush1.msra.mxu0 %v5440
    %v5442 = vand.u32 %v141, 4294901760
    %5443 = vmatprep.subr.mxu0 %v5442
    %v5444 = vand.u32 %v140, 4294901760
    %5445 = vmatpush1.msra.mxu0 %v5444
    %v5446 = vand.u32 %v139, 4294901760
    %5447 = vmatprep.subr.mxu0 %v5446
    %v5448 = vand.u32 %v138, 4294901760
    %5449 = vmatpush1.msra.mxu0 %v5448
    %v5450 = vand.u32 %v137, 4294901760
    %5451 = vmatprep.subr.mxu0 %v5450
    %v5452 = vand.u32 %v136, 4294901760
    %5453 = vmatpush1.msra.mxu0 %v5452
    %v5454 = vand.u32 %v135, 4294901760
    %5455 = vmatprep.subr.mxu0 %v5454
    %v5456 = vand.u32 %v134, 4294901760
    %5457 = vmatpush1.msra.mxu0 %v5456
    %v5458 = vand.u32 %v197, 4294901760
    %5459 = vmatprep.subr.mxu0 %v5458
    %v5460 = vand.u32 %v196, 4294901760
    %5461 = vmatpush2.msra.mxu0 %v5460
    %v5462 = vand.u32 %v195, 4294901760
    %5463 = vmatprep.subr.mxu0 %v5462
    %v5464 = vand.u32 %v194, 4294901760
    %5465 = vmatpush2.msra.mxu0 %v5464
    %v5466 = vand.u32 %v193, 4294901760
    %5467 = vmatprep.subr.mxu0 %v5466
    %v5468 = vand.u32 %v192, 4294901760
    %5469 = vmatpush2.msra.mxu0 %v5468
    %v5470 = vand.u32 %v191, 4294901760
    %5471 = vmatprep.subr.mxu0 %v5470
    %v5472 = vand.u32 %v190, 4294901760
    %5473 = vmatpush2.msra.mxu0 %v5472
    %v5474 = vand.u32 %v189, 4294901760
    %5475 = vmatprep.subr.mxu0 %v5474
    %v5476 = vand.u32 %v188, 4294901760
    %5477 = vmatpush2.msra.mxu0 %v5476
    %v5478 = vand.u32 %v187, 4294901760
    %5479 = vmatprep.subr.mxu0 %v5478
    %v5480 = vand.u32 %v186, 4294901760
    %5481 = vmatpush2.msra.mxu0 %v5480
    %v5482 = vand.u32 %v185, 4294901760
    %5483 = vmatprep.subr.mxu0 %v5482
    %v5484 = vand.u32 %v184, 4294901760
    %5485 = vmatpush2.msra.mxu0 %v5484
    %v5486 = vand.u32 %v183, 4294901760
    %5487 = vmatprep.subr.mxu0 %v5486
    %v5488 = vand.u32 %v182, 4294901760
    %5489 = vmatpush2.msra.mxu0 %v5488
    %v5490 = vand.u32 %v181, 4294901760
    %5491 = vmatprep.subr.mxu0 %v5490
    %v5492 = vand.u32 %v180, 4294901760
    %5493 = vmatpush2.msra.mxu0 %v5492
    %v5494 = vand.u32 %v179, 4294901760
    %5495 = vmatprep.subr.mxu0 %v5494
    %v5496 = vand.u32 %v178, 4294901760
    %5497 = vmatpush2.msra.mxu0 %v5496
    %v5498 = vand.u32 %v177, 4294901760
    %5499 = vmatprep.subr.mxu0 %v5498
    %v5500 = vand.u32 %v176, 4294901760
    %5501 = vmatpush2.msra.mxu0 %v5500
    %v5502 = vand.u32 %v175, 4294901760
    %5503 = vmatprep.subr.mxu0 %v5502
    %v5504 = vand.u32 %v174, 4294901760
    %5505 = vmatpush2.msra.mxu0 %v5504
    %v5506 = vand.u32 %v173, 4294901760
    %5507 = vmatprep.subr.mxu0 %v5506
    %v5508 = vand.u32 %v172, 4294901760
    %5509 = vmatpush2.msra.mxu0 %v5508
    %v5510 = vand.u32 %v171, 4294901760
    %5511 = vmatprep.subr.mxu0 %v5510
    %v5512 = vand.u32 %v170, 4294901760
    %5513 = vmatpush2.msra.mxu0 %v5512
    %v5514 = vand.u32 %v169, 4294901760
    %5515 = vmatprep.subr.mxu0 %v5514
    %v5516 = vand.u32 %v168, 4294901760
    %5517 = vmatpush2.msra.mxu0 %v5516
    %v5518 = vand.u32 %v167, 4294901760
    %5519 = vmatprep.subr.mxu0 %v5518
    %v5520 = vand.u32 %v166, 4294901760
    %5521 = vmatpush2.msra.mxu0 %v5520
    %v5522 = vand.u32 %v2962, 4294901760
    %5523 = vmatprep.mubr.f32.mxu0 %v5522
    %v5524 = vand.u32 %v2955, 4294901760
    %5525 = vmatmul.mubr.f32.gmra.mxu0 %v5524
    %v5526 = vpop.f32.mrf.mxu0
    %v5527 = vadd.f32 %v5390, %v5526
    %v5528 = vpop.f32.mrf.mxu0
    %v5529 = vadd.f32 %v5392, %v5528
    %5530 = vdwg.mxu0
    %v5531 = vxor.u32 %v5527, 2147483648
    %v5532 = vxor.u32 %v5529, 2147483648
    %v5533 = vmul.f32 %v5531, 1.442695
    %v5534 = vpow.pop %v5533
    %v5535 = vmul.f32 %v5532, 1.442695
    %v5536 = vpow.pop %v5535
    %v5537 = vadd.f32 %v5534, 1.0
    %v5538 = vadd.f32 %v5536, 1.0
    %v5539 = vrcp.pop %v5537
    %v5540 = vmul.f32 1.0, %v5539
    %v5541 = vrcp.pop %v5538
    %v5542 = vmul.f32 1.0, %v5541
    %v5543 = vlaneseq
    %v5544 = vshrl.u32 %v5543, 7
    %v5545 = vsub.s32 0, %v5544
    %v5546 = vrot.slane %v5540, %v5545
    %v5547 = vlaneseq
    %v5548 = vshrl.u32 %v5547, 7
    %v5549 = vsub.s32 0, %v5548
    %v5550 = vrot.slane %v5542, %v5549
    %v5553 = vcombine.low %v5546, %v5550
    %v5555 = vmul.f32 %v2929, %v5553
    %s5556 = scalar_lea.vmem [#allocation11], 8
    %5557 = vst [vmem:[%s5556] sm:$0xff] %v5555
    // Predicated region
    $region34: #{tpu_custom_call.1} parent=1 // pred_check
      _
    $region35: #{tpu_custom_call.1} parent=1 // pred_check_branch
      %5559 = sbr.rel (0) target = $region37
    $region36: #{tpu_custom_call.1} parent=1 // pred_region
      %s5561 = ssub.s32 256, 256
      %5562 = vsyncadd [#allocation6], %s5561
      %s5563 = sshll.u32 [#allocation11], 4
      %s5564 = int_to_ptr.vmem [resolvable:$true] %s5563
      %5569 = dma.vmem_to_hbm [thread:$0]  %s5564, 256, %s5, [#allocation6], 128, 128, 8
    $region37: #{tpu_custom_call.1} parent=1 // pred_fallthru
      _
    // Predicated region
    $region38: #{tpu_custom_call.1} parent=1 // pred_check
      _
    $region39: #{tpu_custom_call.1} parent=1 // pred_check_branch
      %5571 = sbr.rel (0) target = $region41
    $region40: #{tpu_custom_call.1} parent=1 // pred_region
      %5572 = dma.done [#allocation6], 256
    $region41: #{tpu_custom_call.1} parent=1 // pred_fallthru
      _
    %5573 = vsyncpa [#allocation5], 1
    %5574 = vsyncpa [#allocation9], 1
    %5575 = vsyncpa [#allocation6], 1
    %5576 = vsyncpa [#allocation7], 1

</llo_original>
